<compile_context>
chip_gen: v5e
topology: v5e:2x2
jax: 0.10.0
libtpu: 0.0.40
codegen_flags: <defaults>
</compile_context>

<pallas_src>
import jax
import jax.numpy as jnp
from jax.experimental import pallas as pl
from jax.experimental.pallas import tpu as pltpu

BN_EPS = 1e-5


def tfcm_kernel(w1t_ref, w2t_ref, dw_ref, s1_ref, sh1_ref, s2_ref, sh2_ref,
                a1_ref, a2_ref, x_ref, out_ref):
    # w1t/w2t: (NB, C, C) VMEM (already transposed: y = x @ w)
    # dw:      (NB, 3, 3, C) VMEM (channels-last depthwise weights)
    # s*/sh*:  (NB, C) VMEM folded BatchNorm scale / shift
    # a1/a2:   (NB,) SMEM PReLU scalars
    # x:       (T, F, C) VMEM tile (one batch element), out: (T, F, C)
    T, F, C = x_ref.shape
    nblocks = w1t_ref.shape[0]
    x = x_ref[...]

    def shift_t(v, k):
        # v[t - k, :, :], zero-filled for t < k (causal pad). k is static >= 0.
        if k == 0:
            return v
        if k >= T:
            return None  # tap falls entirely in the zero padding
        return jnp.concatenate(
            [jnp.zeros((k, F, C), jnp.float32), v[:T - k]], axis=0)

    def shift_f(v, j):
        # v[:, f + (j - 1), :], zero-filled at the F boundary. j in {0,1,2}.
        if j == 1:
            return v
        zcol = jnp.zeros((T, 1, C), jnp.float32)
        if j == 0:
            return jnp.concatenate([zcol, v[:, :F - 1]], axis=1)
        return jnp.concatenate([v[:, 1:], zcol], axis=1)

    for blk in range(nblocks):      # static unroll: blocks are sequential
        d = 2 ** blk                # dilation along T

        # --- pointwise_1 (1x1 conv) + folded BN1 + PReLU1 ---
        h = jnp.dot(x.reshape(T * F, C), w1t_ref[blk],
                    preferred_element_type=jnp.float32)
        h = h * s1_ref[blk] + sh1_ref[blk]
        a1 = a1_ref[blk]
        h = jnp.where(h >= 0, h, a1 * h)
        h = h.reshape(T, F, C)

        # --- causal dilated depthwise 3x3 (groups=C) ---
        #   out[t,f,c] = sum_{i,j} w[c,i,j] * h[t - (2-i)*d, f + (j-1), c]
        acc = jnp.zeros((T, F, C), jnp.float32)
        for i in range(3):
            vt = shift_t(h, (2 - i) * d)
            if vt is None:
                continue
            for j in range(3):
                acc = acc + dw_ref[blk, i, j] * shift_f(vt, j)

        # --- folded BN2 + PReLU2 ---
        g = acc * s2_ref[blk] + sh2_ref[blk]
        a2 = a2_ref[blk]
        g = jnp.where(g >= 0, g, a2 * g)

        # --- pointwise_2 (1x1 conv) + residual ---
        y = jnp.dot(g.reshape(T * F, C), w2t_ref[blk],
                    preferred_element_type=jnp.float32)
        x = x + y.reshape(T, F, C)

    out_ref[...] = x


def tfcm_forward(x, params):
    """x: (N, C, T, F) float32 (PyTorch NCHW). Returns (N, C, T, F)."""
    (w1, w2, dw, g1, b1, m1, v1, g2, b2, m2, v2, a1, a2) = params
    N, C, T, F = x.shape
    NB = w1.shape[0]

    # Fold eval-mode BatchNorm into per-channel scale/shift (wrapper side).
    # TODO(synk): training-mode BatchNorm (batch statistics) is not implemented.
    s1 = g1 / jnp.sqrt(v1 + BN_EPS)
    sh1 = b1 - m1 * s1
    s2 = g2 / jnp.sqrt(v2 + BN_EPS)
    sh2 = b2 - m2 * s2

    w1t = jnp.transpose(w1, (0, 2, 1))      # (NB, C_in, C_out): y = x @ w1t
    w2t = jnp.transpose(w2, (0, 2, 1))
    dwc = jnp.transpose(dw, (0, 2, 3, 1))   # (NB, 3, 3, C), channels-last

    xt = jnp.transpose(x, (0, 2, 3, 1))     # (N, T, F, C), C on lanes

    def full(shape):
        n = len(shape)
        return pl.BlockSpec(shape, lambda b, _n=n: (0,) * _n)

    smem = pl.BlockSpec(memory_space=pltpu.MemorySpace.SMEM)

    out = pl.pallas_call(
        tfcm_kernel,
        out_shape=jax.ShapeDtypeStruct((N, T, F, C), jnp.float32),
        grid=(N,),
        in_specs=[
            full((NB, C, C)),      # w1t
            full((NB, C, C)),      # w2t
            full((NB, 3, 3, C)),   # depthwise weights
            full((NB, C)),         # s1
            full((NB, C)),         # sh1
            full((NB, C)),         # s2
            full((NB, C)),         # sh2
            smem,                  # a1 (PReLU)
            smem,                  # a2 (PReLU)
            pl.BlockSpec((None, T, F, C), lambda b: (b, 0, 0, 0)),   # x
        ],
        out_specs=pl.BlockSpec((None, T, F, C), lambda b: (b, 0, 0, 0)),
        compiler_params=pltpu.CompilerParams(
            dimension_semantics=("parallel",)),
    )(w1t, w2t, dwc, s1, sh1, s2, sh2, a1, a2, xt)

    return jnp.transpose(out, (0, 3, 1, 2))   # back to (N, C, T, F)


def tfcm_reference(x, params):
    """Pure-JAX reference of the PyTorch TFCM forward (eval-mode BN)."""
    (w1, w2, dw, g1, b1, m1, v1, g2, b2, m2, v2, a1, a2) = params
    N, C, T, F = x.shape
    NB = w1.shape[0]
    for blk in range(NB):
        d = 2 ** blk
        h = jnp.einsum('oc,nctf->notf', w1[blk], x)
        s1 = g1[blk] / jnp.sqrt(v1[blk] + BN_EPS)
        sh1 = b1[blk] - m1[blk] * s1
        h = h * s1[None, :, None, None] + sh1[None, :, None, None]
        h = jnp.where(h >= 0, h, a1[blk] * h)
        hp = jnp.pad(h, ((0, 0), (0, 0), (2 * d, 0), (1, 1)))
        acc = jnp.zeros_like(h)
        for i in range(3):
            for j in range(3):
                acc = acc + (dw[blk, :, i, j][None, :, None, None]
                             * hp[:, :, i * d:i * d + T, j:j + F])
        s2 = g2[blk] / jnp.sqrt(v2[blk] + BN_EPS)
        sh2 = b2[blk] - m2[blk] * s2
        g = acc * s2[None, :, None, None] + sh2[None, :, None, None]
        g = jnp.where(g >= 0, g, a2[blk] * g)
        y = jnp.einsum('oc,nctf->notf', w2[blk], g)
        x = x + y
    return x


if __name__ == "__main__":
    key = jax.random.PRNGKey(0)
    ks = jax.random.split(key, 14)

    N, C, T, F = 2, 32, 16, 16   # batch, channels, time frames, freq bins
    NB = 3                        # TFCM depth -> dilations 1, 2, 4

    x = jax.random.normal(ks[0], (N, C, T, F), dtype=jnp.float32)

    w1 = 0.2 * jax.random.normal(ks[1], (NB, C, C), dtype=jnp.float32)
    w2 = 0.2 * jax.random.normal(ks[2], (NB, C, C), dtype=jnp.float32)
    dw = 0.2 * jax.random.normal(ks[3], (NB, C, 3, 3), dtype=jnp.float32)

    g1 = 1.0 + 0.1 * jax.random.normal(ks[4], (NB, C), dtype=jnp.float32)
    b1 = 0.1 * jax.random.normal(ks[5], (NB, C), dtype=jnp.float32)
    m1 = 0.1 * jax.random.normal(ks[6], (NB, C), dtype=jnp.float32)
    v1 = 0.5 + jnp.abs(jax.random.normal(ks[7], (NB, C), dtype=jnp.float32))

    g2 = 1.0 + 0.1 * jax.random.normal(ks[8], (NB, C), dtype=jnp.float32)
    b2 = 0.1 * jax.random.normal(ks[9], (NB, C), dtype=jnp.float32)
    m2 = 0.1 * jax.random.normal(ks[10], (NB, C), dtype=jnp.float32)
    v2 = 0.5 + jnp.abs(jax.random.normal(ks[11], (NB, C), dtype=jnp.float32))

    a1 = 0.25 + 0.05 * jax.random.normal(ks[12], (NB,), dtype=jnp.float32)
    a2 = 0.25 + 0.05 * jax.random.normal(ks[13], (NB,), dtype=jnp.float32)

    params = (w1, w2, dw, g1, b1, m1, v1, g2, b2, m2, v2, a1, a2)

    out = tfcm_forward(x, params)
    out = jax.block_until_ready(out)

    ref = tfcm_reference(x, params)
    assert out.shape == (N, C, T, F), out.shape
    assert jnp.allclose(out, ref, atol=2e-4, rtol=2e-4), \
        float(jnp.max(jnp.abs(out - ref)))

    print("KERNEL_OK")
</pallas_src>

<mosaic_0001>
module attributes {stable_mosaic.version = 11 : i64} {
  func.func @tfcm_kernel(%arg0: i32, %arg1: memref<3x32x32xf32, #tpu.memory_space<vmem>>, %arg2: memref<3x32x32xf32, #tpu.memory_space<vmem>>, %arg3: memref<3x3x3x32xf32, #tpu.memory_space<vmem>>, %arg4: memref<3x32xf32, #tpu.memory_space<vmem>>, %arg5: memref<3x32xf32, #tpu.memory_space<vmem>>, %arg6: memref<3x32xf32, #tpu.memory_space<vmem>>, %arg7: memref<3x32xf32, #tpu.memory_space<vmem>>, %arg8: memref<3xf32, #tpu.memory_space<smem>>, %arg9: memref<3xf32, #tpu.memory_space<smem>>, %arg10: memref<1x16x16x32xf32, #tpu.memory_space<vmem>>, %arg11: memref<1x16x16x32xf32, #tpu.memory_space<vmem>>) attributes {dimension_semantics = [#tpu.dimension_semantics<parallel>], iteration_bounds = array<i64: 2>, scalar_prefetch = 0 : i64, scratch_operands = 0 : i64, tpu.core_type = #tpu.core_type<tc>, window_params = [{pipeline_mode = #tpu.pipeline_mode<synchronous>, transform_indices = @transform_0, window_bounds = array<i64: 3, 32, 32>}, {pipeline_mode = #tpu.pipeline_mode<synchronous>, transform_indices = @transform_1, window_bounds = array<i64: 3, 32, 32>}, {pipeline_mode = #tpu.pipeline_mode<synchronous>, transform_indices = @transform_2, window_bounds = array<i64: 3, 3, 3, 32>}, {pipeline_mode = #tpu.pipeline_mode<synchronous>, transform_indices = @transform_3, window_bounds = array<i64: 3, 32>}, {pipeline_mode = #tpu.pipeline_mode<synchronous>, transform_indices = @transform_4, window_bounds = array<i64: 3, 32>}, {pipeline_mode = #tpu.pipeline_mode<synchronous>, transform_indices = @transform_5, window_bounds = array<i64: 3, 32>}, {pipeline_mode = #tpu.pipeline_mode<synchronous>, transform_indices = @transform_6, window_bounds = array<i64: 3, 32>}, {transform_indices = @transform_7, window_bounds = array<i64: 3>}, {transform_indices = @transform_8, window_bounds = array<i64: 3>}, {transform_indices = @transform_9, window_bounds = array<i64: 1, 16, 16, 32>}, {transform_indices = @transform_10, window_bounds = array<i64: 1, 16, 16, 32>}]} {
    %c0 = arith.constant 0 : index
    %c0_0 = arith.constant 0 : index
    %c0_1 = arith.constant 0 : index
    %c0_2 = arith.constant 0 : index
    %0 = vector.load %arg10[%c0, %c0_0, %c0_1, %c0_2] : memref<1x16x16x32xf32, #tpu.memory_space<vmem>>, vector<1x16x16x32xf32>
    %1 = vector.shape_cast %0 : vector<1x16x16x32xf32> to vector<16x16x32xf32>
    %2 = vector.shape_cast %1 : vector<16x16x32xf32> to vector<256x32xf32>
    %c0_3 = arith.constant 0 : index
    %c0_4 = arith.constant 0 : index
    %c0_5 = arith.constant 0 : index
    %3 = vector.load %arg1[%c0_3, %c0_4, %c0_5] : memref<3x32x32xf32, #tpu.memory_space<vmem>>, vector<1x32x32xf32>
    %4 = vector.shape_cast %3 : vector<1x32x32xf32> to vector<32x32xf32>
    %cst = arith.constant dense<0.000000e+00> : vector<256x32xf32>
    %5 = tpu.matmul %2, %4, %cst {dimension_numbers = #tpu.dot_dimension_numbers<[1], [0], [0], [1], [0, 0, 1, 1], [], []>} : vector<256x32xf32>, vector<32x32xf32>, vector<256x32xf32> -> vector<256x32xf32>
    %c0_6 = arith.constant 0 : index
    %c0_7 = arith.constant 0 : index
    %6 = vector.load %arg4[%c0_6, %c0_7] : memref<3x32xf32, #tpu.memory_space<vmem>>, vector<1x32xf32>
    %7 = vector.shape_cast %6 : vector<1x32xf32> to vector<32xf32>
    %8 = vector.shape_cast %7 : vector<32xf32> to vector<1x32xf32>
    %9 = vector.broadcast %8 : vector<1x32xf32> to vector<256x32xf32>
    %10 = arith.mulf %5, %9 : vector<256x32xf32>
    %c0_8 = arith.constant 0 : index
    %c0_9 = arith.constant 0 : index
    %11 = vector.load %arg5[%c0_8, %c0_9] : memref<3x32xf32, #tpu.memory_space<vmem>>, vector<1x32xf32>
    %12 = vector.shape_cast %11 : vector<1x32xf32> to vector<32xf32>
    %13 = vector.shape_cast %12 : vector<32xf32> to vector<1x32xf32>
    %14 = vector.broadcast %13 : vector<1x32xf32> to vector<256x32xf32>
    %15 = arith.addf %10, %14 : vector<256x32xf32>
    %c0_10 = arith.constant 0 : index
    %16 = memref.load %arg8[%c0_10] : memref<3xf32, #tpu.memory_space<smem>>
    %cst_11 = arith.constant 0.000000e+00 : f32
    %17 = vector.broadcast %cst_11 : f32 to vector<256x32xf32>
    %18 = arith.cmpf oge, %15, %17 : vector<256x32xf32>
    %19 = vector.broadcast %16 : f32 to vector<256x32xf32>
    %20 = arith.mulf %19, %15 : vector<256x32xf32>
    %21 = arith.select %18, %15, %20 : vector<256x32xi1>, vector<256x32xf32>
    %22 = vector.shape_cast %21 : vector<256x32xf32> to vector<16x16x32xf32>
    %cst_12 = arith.constant 0.000000e+00 : f32
    %23 = vector.broadcast %cst_12 : f32 to vector<16x16x32xf32>
    %cst_13 = arith.constant 0.000000e+00 : f32
    %24 = vector.broadcast %cst_13 : f32 to vector<2x16x32xf32>
    %25 = vector.extract_strided_slice %22 {offsets = [0, 0, 0], sizes = [14, 16, 32], strides = [1, 1, 1]} : vector<16x16x32xf32> to vector<14x16x32xf32>
    %26 = tpu.concatenate %24, %25 in 0 : vector<2x16x32xf32>, vector<14x16x32xf32> -> vector<16x16x32xf32>
    %c0_14 = arith.constant 0 : index
    %c0_15 = arith.constant 0 : index
    %c0_16 = arith.constant 0 : index
    %c0_17 = arith.constant 0 : index
    %27 = vector.load %arg3[%c0_14, %c0_15, %c0_16, %c0_17] : memref<3x3x3x32xf32, #tpu.memory_space<vmem>>, vector<1x1x1x32xf32>
    %28 = vector.shape_cast %27 : vector<1x1x1x32xf32> to vector<32xf32>
    %cst_18 = arith.constant 0.000000e+00 : f32
    %29 = vector.broadcast %cst_18 : f32 to vector<16x1x32xf32>
    %30 = vector.extract_strided_slice %26 {offsets = [0, 0, 0], sizes = [16, 15, 32], strides = [1, 1, 1]} : vector<16x16x32xf32> to vector<16x15x32xf32>
    %31 = tpu.concatenate %29, %30 in 1 : vector<16x1x32xf32>, vector<16x15x32xf32> -> vector<16x16x32xf32>
    %32 = vector.shape_cast %28 : vector<32xf32> to vector<1x1x32xf32>
    %33 = vector.broadcast %32 : vector<1x1x32xf32> to vector<16x16x32xf32>
    %34 = arith.mulf %33, %31 : vector<16x16x32xf32>
    %35 = arith.addf %23, %34 : vector<16x16x32xf32>
    %c0_19 = arith.constant 0 : index
    %c0_20 = arith.constant 0 : index
    %c1 = arith.constant 1 : index
    %c0_21 = arith.constant 0 : index
    %36 = vector.load %arg3[%c0_19, %c0_20, %c1, %c0_21] : memref<3x3x3x32xf32, #tpu.memory_space<vmem>>, vector<1x1x1x32xf32>
    %37 = vector.shape_cast %36 : vector<1x1x1x32xf32> to vector<32xf32>
    %38 = vector.shape_cast %37 : vector<32xf32> to vector<1x1x32xf32>
    %39 = vector.broadcast %38 : vector<1x1x32xf32> to vector<16x16x32xf32>
    %40 = arith.mulf %39, %26 : vector<16x16x32xf32>
    %41 = arith.addf %35, %40 : vector<16x16x32xf32>
    %c0_22 = arith.constant 0 : index
    %c0_23 = arith.constant 0 : index
    %c2 = arith.constant 2 : index
    %c0_24 = arith.constant 0 : index
    %42 = vector.load %arg3[%c0_22, %c0_23, %c2, %c0_24] : memref<3x3x3x32xf32, #tpu.memory_space<vmem>>, vector<1x1x1x32xf32>
    %43 = vector.shape_cast %42 : vector<1x1x1x32xf32> to vector<32xf32>
    %cst_25 = arith.constant 0.000000e+00 : f32
    %44 = vector.broadcast %cst_25 : f32 to vector<16x1x32xf32>
    %45 = vector.extract_strided_slice %26 {offsets = [0, 1, 0], sizes = [16, 15, 32], strides = [1, 1, 1]} : vector<16x16x32xf32> to vector<16x15x32xf32>
    %46 = tpu.concatenate %45, %44 in 1 : vector<16x15x32xf32>, vector<16x1x32xf32> -> vector<16x16x32xf32>
    %47 = vector.shape_cast %43 : vector<32xf32> to vector<1x1x32xf32>
    %48 = vector.broadcast %47 : vector<1x1x32xf32> to vector<16x16x32xf32>
    %49 = arith.mulf %48, %46 : vector<16x16x32xf32>
    %50 = arith.addf %41, %49 : vector<16x16x32xf32>
    %cst_26 = arith.constant 0.000000e+00 : f32
    %51 = vector.broadcast %cst_26 : f32 to vector<1x16x32xf32>
    %52 = vector.extract_strided_slice %22 {offsets = [0, 0, 0], sizes = [15, 16, 32], strides = [1, 1, 1]} : vector<16x16x32xf32> to vector<15x16x32xf32>
    %53 = tpu.concatenate %51, %52 in 0 : vector<1x16x32xf32>, vector<15x16x32xf32> -> vector<16x16x32xf32>
    %c0_27 = arith.constant 0 : index
    %c1_28 = arith.constant 1 : index
    %c0_29 = arith.constant 0 : index
    %c0_30 = arith.constant 0 : index
    %54 = vector.load %arg3[%c0_27, %c1_28, %c0_29, %c0_30] : memref<3x3x3x32xf32, #tpu.memory_space<vmem>>, vector<1x1x1x32xf32>
    %55 = vector.shape_cast %54 : vector<1x1x1x32xf32> to vector<32xf32>
    %cst_31 = arith.constant 0.000000e+00 : f32
    %56 = vector.broadcast %cst_31 : f32 to vector<16x1x32xf32>
    %57 = vector.extract_strided_slice %53 {offsets = [0, 0, 0], sizes = [16, 15, 32], strides = [1, 1, 1]} : vector<16x16x32xf32> to vector<16x15x32xf32>
    %58 = tpu.concatenate %56, %57 in 1 : vector<16x1x32xf32>, vector<16x15x32xf32> -> vector<16x16x32xf32>
    %59 = vector.shape_cast %55 : vector<32xf32> to vector<1x1x32xf32>
    %60 = vector.broadcast %59 : vector<1x1x32xf32> to vector<16x16x32xf32>
    %61 = arith.mulf %60, %58 : vector<16x16x32xf32>
    %62 = arith.addf %50, %61 : vector<16x16x32xf32>
    %c0_32 = arith.constant 0 : index
    %c1_33 = arith.constant 1 : index
    %c1_34 = arith.constant 1 : index
    %c0_35 = arith.constant 0 : index
    %63 = vector.load %arg3[%c0_32, %c1_33, %c1_34, %c0_35] : memref<3x3x3x32xf32, #tpu.memory_space<vmem>>, vector<1x1x1x32xf32>
    %64 = vector.shape_cast %63 : vector<1x1x1x32xf32> to vector<32xf32>
    %65 = vector.shape_cast %64 : vector<32xf32> to vector<1x1x32xf32>
    %66 = vector.broadcast %65 : vector<1x1x32xf32> to vector<16x16x32xf32>
    %67 = arith.mulf %66, %53 : vector<16x16x32xf32>
    %68 = arith.addf %62, %67 : vector<16x16x32xf32>
    %c0_36 = arith.constant 0 : index
    %c1_37 = arith.constant 1 : index
    %c2_38 = arith.constant 2 : index
    %c0_39 = arith.constant 0 : index
    %69 = vector.load %arg3[%c0_36, %c1_37, %c2_38, %c0_39] : memref<3x3x3x32xf32, #tpu.memory_space<vmem>>, vector<1x1x1x32xf32>
    %70 = vector.shape_cast %69 : vector<1x1x1x32xf32> to vector<32xf32>
    %cst_40 = arith.constant 0.000000e+00 : f32
    %71 = vector.broadcast %cst_40 : f32 to vector<16x1x32xf32>
    %72 = vector.extract_strided_slice %53 {offsets = [0, 1, 0], sizes = [16, 15, 32], strides = [1, 1, 1]} : vector<16x16x32xf32> to vector<16x15x32xf32>
    %73 = tpu.concatenate %72, %71 in 1 : vector<16x15x32xf32>, vector<16x1x32xf32> -> vector<16x16x32xf32>
    %74 = vector.shape_cast %70 : vector<32xf32> to vector<1x1x32xf32>
    %75 = vector.broadcast %74 : vector<1x1x32xf32> to vector<16x16x32xf32>
    %76 = arith.mulf %75, %73 : vector<16x16x32xf32>
    %77 = arith.addf %68, %76 : vector<16x16x32xf32>
    %c0_41 = arith.constant 0 : index
    %c2_42 = arith.constant 2 : index
    %c0_43 = arith.constant 0 : index
    %c0_44 = arith.constant 0 : index
    %78 = vector.load %arg3[%c0_41, %c2_42, %c0_43, %c0_44] : memref<3x3x3x32xf32, #tpu.memory_space<vmem>>, vector<1x1x1x32xf32>
    %79 = vector.shape_cast %78 : vector<1x1x1x32xf32> to vector<32xf32>
    %cst_45 = arith.constant 0.000000e+00 : f32
    %80 = vector.broadcast %cst_45 : f32 to vector<16x1x32xf32>
    %81 = vector.extract_strided_slice %22 {offsets = [0, 0, 0], sizes = [16, 15, 32], strides = [1, 1, 1]} : vector<16x16x32xf32> to vector<16x15x32xf32>
    %82 = tpu.concatenate %80, %81 in 1 : vector<16x1x32xf32>, vector<16x15x32xf32> -> vector<16x16x32xf32>
    %83 = vector.shape_cast %79 : vector<32xf32> to vector<1x1x32xf32>
    %84 = vector.broadcast %83 : vector<1x1x32xf32> to vector<16x16x32xf32>
    %85 = arith.mulf %84, %82 : vector<16x16x32xf32>
    %86 = arith.addf %77, %85 : vector<16x16x32xf32>
    %c0_46 = arith.constant 0 : index
    %c2_47 = arith.constant 2 : index
    %c1_48 = arith.constant 1 : index
    %c0_49 = arith.constant 0 : index
    %87 = vector.load %arg3[%c0_46, %c2_47, %c1_48, %c0_49] : memref<3x3x3x32xf32, #tpu.memory_space<vmem>>, vector<1x1x1x32xf32>
    %88 = vector.shape_cast %87 : vector<1x1x1x32xf32> to vector<32xf32>
    %89 = vector.shape_cast %88 : vector<32xf32> to vector<1x1x32xf32>
    %90 = vector.broadcast %89 : vector<1x1x32xf32> to vector<16x16x32xf32>
    %91 = arith.mulf %90, %22 : vector<16x16x32xf32>
    %92 = arith.addf %86, %91 : vector<16x16x32xf32>
    %c0_50 = arith.constant 0 : index
    %c2_51 = arith.constant 2 : index
    %c2_52 = arith.constant 2 : index
    %c0_53 = arith.constant 0 : index
    %93 = vector.load %arg3[%c0_50, %c2_51, %c2_52, %c0_53] : memref<3x3x3x32xf32, #tpu.memory_space<vmem>>, vector<1x1x1x32xf32>
    %94 = vector.shape_cast %93 : vector<1x1x1x32xf32> to vector<32xf32>
    %cst_54 = arith.constant 0.000000e+00 : f32
    %95 = vector.broadcast %cst_54 : f32 to vector<16x1x32xf32>
    %96 = vector.extract_strided_slice %22 {offsets = [0, 1, 0], sizes = [16, 15, 32], strides = [1, 1, 1]} : vector<16x16x32xf32> to vector<16x15x32xf32>
    %97 = tpu.concatenate %96, %95 in 1 : vector<16x15x32xf32>, vector<16x1x32xf32> -> vector<16x16x32xf32>
    %98 = vector.shape_cast %94 : vector<32xf32> to vector<1x1x32xf32>
    %99 = vector.broadcast %98 : vector<1x1x32xf32> to vector<16x16x32xf32>
    %100 = arith.mulf %99, %97 : vector<16x16x32xf32>
    %101 = arith.addf %92, %100 : vector<16x16x32xf32>
    %c0_55 = arith.constant 0 : index
    %c0_56 = arith.constant 0 : index
    %102 = vector.load %arg6[%c0_55, %c0_56] : memref<3x32xf32, #tpu.memory_space<vmem>>, vector<1x32xf32>
    %103 = vector.shape_cast %102 : vector<1x32xf32> to vector<32xf32>
    %104 = vector.shape_cast %103 : vector<32xf32> to vector<1x1x32xf32>
    %105 = vector.broadcast %104 : vector<1x1x32xf32> to vector<16x16x32xf32>
    %106 = arith.mulf %101, %105 : vector<16x16x32xf32>
    %c0_57 = arith.constant 0 : index
    %c0_58 = arith.constant 0 : index
    %107 = vector.load %arg7[%c0_57, %c0_58] : memref<3x32xf32, #tpu.memory_space<vmem>>, vector<1x32xf32>
    %108 = vector.shape_cast %107 : vector<1x32xf32> to vector<32xf32>
    %109 = vector.shape_cast %108 : vector<32xf32> to vector<1x1x32xf32>
    %110 = vector.broadcast %109 : vector<1x1x32xf32> to vector<16x16x32xf32>
    %111 = arith.addf %106, %110 : vector<16x16x32xf32>
    %c0_59 = arith.constant 0 : index
    %112 = memref.load %arg9[%c0_59] : memref<3xf32, #tpu.memory_space<smem>>
    %cst_60 = arith.constant 0.000000e+00 : f32
    %113 = vector.broadcast %cst_60 : f32 to vector<16x16x32xf32>
    %114 = arith.cmpf oge, %111, %113 : vector<16x16x32xf32>
    %115 = vector.broadcast %112 : f32 to vector<16x16x32xf32>
    %116 = arith.mulf %115, %111 : vector<16x16x32xf32>
    %117 = arith.select %114, %111, %116 : vector<16x16x32xi1>, vector<16x16x32xf32>
    %118 = vector.shape_cast %117 : vector<16x16x32xf32> to vector<256x32xf32>
    %c0_61 = arith.constant 0 : index
    %c0_62 = arith.constant 0 : index
    %c0_63 = arith.constant 0 : index
    %119 = vector.load %arg2[%c0_61, %c0_62, %c0_63] : memref<3x32x32xf32, #tpu.memory_space<vmem>>, vector<1x32x32xf32>
    %120 = vector.shape_cast %119 : vector<1x32x32xf32> to vector<32x32xf32>
    %cst_64 = arith.constant dense<0.000000e+00> : vector<256x32xf32>
    %121 = tpu.matmul %118, %120, %cst_64 {dimension_numbers = #tpu.dot_dimension_numbers<[1], [0], [0], [1], [0, 0, 1, 1], [], []>} : vector<256x32xf32>, vector<32x32xf32>, vector<256x32xf32> -> vector<256x32xf32>
    %122 = vector.shape_cast %121 : vector<256x32xf32> to vector<16x16x32xf32>
    %123 = arith.addf %1, %122 : vector<16x16x32xf32>
    %124 = vector.shape_cast %123 : vector<16x16x32xf32> to vector<256x32xf32>
    %c1_65 = arith.constant 1 : index
    %c0_66 = arith.constant 0 : index
    %c0_67 = arith.constant 0 : index
    %125 = vector.load %arg1[%c1_65, %c0_66, %c0_67] : memref<3x32x32xf32, #tpu.memory_space<vmem>>, vector<1x32x32xf32>
    %126 = vector.shape_cast %125 : vector<1x32x32xf32> to vector<32x32xf32>
    %cst_68 = arith.constant dense<0.000000e+00> : vector<256x32xf32>
    %127 = tpu.matmul %124, %126, %cst_68 {dimension_numbers = #tpu.dot_dimension_numbers<[1], [0], [0], [1], [0, 0, 1, 1], [], []>} : vector<256x32xf32>, vector<32x32xf32>, vector<256x32xf32> -> vector<256x32xf32>
    %c1_69 = arith.constant 1 : index
    %c0_70 = arith.constant 0 : index
    %128 = vector.load %arg4[%c1_69, %c0_70] : memref<3x32xf32, #tpu.memory_space<vmem>>, vector<1x32xf32>
    %129 = vector.shape_cast %128 : vector<1x32xf32> to vector<32xf32>
    %130 = vector.shape_cast %129 : vector<32xf32> to vector<1x32xf32>
    %131 = vector.broadcast %130 : vector<1x32xf32> to vector<256x32xf32>
    %132 = arith.mulf %127, %131 : vector<256x32xf32>
    %c1_71 = arith.constant 1 : index
    %c0_72 = arith.constant 0 : index
    %133 = vector.load %arg5[%c1_71, %c0_72] : memref<3x32xf32, #tpu.memory_space<vmem>>, vector<1x32xf32>
    %134 = vector.shape_cast %133 : vector<1x32xf32> to vector<32xf32>
    %135 = vector.shape_cast %134 : vector<32xf32> to vector<1x32xf32>
    %136 = vector.broadcast %135 : vector<1x32xf32> to vector<256x32xf32>
    %137 = arith.addf %132, %136 : vector<256x32xf32>
    %c1_73 = arith.constant 1 : index
    %138 = memref.load %arg8[%c1_73] : memref<3xf32, #tpu.memory_space<smem>>
    %cst_74 = arith.constant 0.000000e+00 : f32
    %139 = vector.broadcast %cst_74 : f32 to vector<256x32xf32>
    %140 = arith.cmpf oge, %137, %139 : vector<256x32xf32>
    %141 = vector.broadcast %138 : f32 to vector<256x32xf32>
    %142 = arith.mulf %141, %137 : vector<256x32xf32>
    %143 = arith.select %140, %137, %142 : vector<256x32xi1>, vector<256x32xf32>
    %144 = vector.shape_cast %143 : vector<256x32xf32> to vector<16x16x32xf32>
    %cst_75 = arith.constant 0.000000e+00 : f32
    %145 = vector.broadcast %cst_75 : f32 to vector<16x16x32xf32>
    %cst_76 = arith.constant 0.000000e+00 : f32
    %146 = vector.broadcast %cst_76 : f32 to vector<4x16x32xf32>
    %147 = vector.extract_strided_slice %144 {offsets = [0, 0, 0], sizes = [12, 16, 32], strides = [1, 1, 1]} : vector<16x16x32xf32> to vector<12x16x32xf32>
    %148 = tpu.concatenate %146, %147 in 0 : vector<4x16x32xf32>, vector<12x16x32xf32> -> vector<16x16x32xf32>
    %c1_77 = arith.constant 1 : index
    %c0_78 = arith.constant 0 : index
    %c0_79 = arith.constant 0 : index
    %c0_80 = arith.constant 0 : index
    %149 = vector.load %arg3[%c1_77, %c0_78, %c0_79, %c0_80] : memref<3x3x3x32xf32, #tpu.memory_space<vmem>>, vector<1x1x1x32xf32>
    %150 = vector.shape_cast %149 : vector<1x1x1x32xf32> to vector<32xf32>
    %cst_81 = arith.constant 0.000000e+00 : f32
    %151 = vector.broadcast %cst_81 : f32 to vector<16x1x32xf32>
    %152 = vector.extract_strided_slice %148 {offsets = [0, 0, 0], sizes = [16, 15, 32], strides = [1, 1, 1]} : vector<16x16x32xf32> to vector<16x15x32xf32>
    %153 = tpu.concatenate %151, %152 in 1 : vector<16x1x32xf32>, vector<16x15x32xf32> -> vector<16x16x32xf32>
    %154 = vector.shape_cast %150 : vector<32xf32> to vector<1x1x32xf32>
    %155 = vector.broadcast %154 : vector<1x1x32xf32> to vector<16x16x32xf32>
    %156 = arith.mulf %155, %153 : vector<16x16x32xf32>
    %157 = arith.addf %145, %156 : vector<16x16x32xf32>
    %c1_82 = arith.constant 1 : index
    %c0_83 = arith.constant 0 : index
    %c1_84 = arith.constant 1 : index
    %c0_85 = arith.constant 0 : index
    %158 = vector.load %arg3[%c1_82, %c0_83, %c1_84, %c0_85] : memref<3x3x3x32xf32, #tpu.memory_space<vmem>>, vector<1x1x1x32xf32>
    %159 = vector.shape_cast %158 : vector<1x1x1x32xf32> to vector<32xf32>
    %160 = vector.shape_cast %159 : vector<32xf32> to vector<1x1x32xf32>
    %161 = vector.broadcast %160 : vector<1x1x32xf32> to vector<16x16x32xf32>
    %162 = arith.mulf %161, %148 : vector<16x16x32xf32>
    %163 = arith.addf %157, %162 : vector<16x16x32xf32>
    %c1_86 = arith.constant 1 : index
    %c0_87 = arith.constant 0 : index
    %c2_88 = arith.constant 2 : index
    %c0_89 = arith.constant 0 : index
    %164 = vector.load %arg3[%c1_86, %c0_87, %c2_88, %c0_89] : memref<3x3x3x32xf32, #tpu.memory_space<vmem>>, vector<1x1x1x32xf32>
    %165 = vector.shape_cast %164 : vector<1x1x1x32xf32> to vector<32xf32>
    %cst_90 = arith.constant 0.000000e+00 : f32
    %166 = vector.broadcast %cst_90 : f32 to vector<16x1x32xf32>
    %167 = vector.extract_strided_slice %148 {offsets = [0, 1, 0], sizes = [16, 15, 32], strides = [1, 1, 1]} : vector<16x16x32xf32> to vector<16x15x32xf32>
    %168 = tpu.concatenate %167, %166 in 1 : vector<16x15x32xf32>, vector<16x1x32xf32> -> vector<16x16x32xf32>
    %169 = vector.shape_cast %165 : vector<32xf32> to vector<1x1x32xf32>
    %170 = vector.broadcast %169 : vector<1x1x32xf32> to vector<16x16x32xf32>
    %171 = arith.mulf %170, %168 : vector<16x16x32xf32>
    %172 = arith.addf %163, %171 : vector<16x16x32xf32>
    %cst_91 = arith.constant 0.000000e+00 : f32
    %173 = vector.broadcast %cst_91 : f32 to vector<2x16x32xf32>
    %174 = vector.extract_strided_slice %144 {offsets = [0, 0, 0], sizes = [14, 16, 32], strides = [1, 1, 1]} : vector<16x16x32xf32> to vector<14x16x32xf32>
    %175 = tpu.concatenate %173, %174 in 0 : vector<2x16x32xf32>, vector<14x16x32xf32> -> vector<16x16x32xf32>
    %c1_92 = arith.constant 1 : index
    %c1_93 = arith.constant 1 : index
    %c0_94 = arith.constant 0 : index
    %c0_95 = arith.constant 0 : index
    %176 = vector.load %arg3[%c1_92, %c1_93, %c0_94, %c0_95] : memref<3x3x3x32xf32, #tpu.memory_space<vmem>>, vector<1x1x1x32xf32>
    %177 = vector.shape_cast %176 : vector<1x1x1x32xf32> to vector<32xf32>
    %cst_96 = arith.constant 0.000000e+00 : f32
    %178 = vector.broadcast %cst_96 : f32 to vector<16x1x32xf32>
    %179 = vector.extract_strided_slice %175 {offsets = [0, 0, 0], sizes = [16, 15, 32], strides = [1, 1, 1]} : vector<16x16x32xf32> to vector<16x15x32xf32>
    %180 = tpu.concatenate %178, %179 in 1 : vector<16x1x32xf32>, vector<16x15x32xf32> -> vector<16x16x32xf32>
    %181 = vector.shape_cast %177 : vector<32xf32> to vector<1x1x32xf32>
    %182 = vector.broadcast %181 : vector<1x1x32xf32> to vector<16x16x32xf32>
    %183 = arith.mulf %182, %180 : vector<16x16x32xf32>
    %184 = arith.addf %172, %183 : vector<16x16x32xf32>
    %c1_97 = arith.constant 1 : index
    %c1_98 = arith.constant 1 : index
    %c1_99 = arith.constant 1 : index
    %c0_100 = arith.constant 0 : index
    %185 = vector.load %arg3[%c1_97, %c1_98, %c1_99, %c0_100] : memref<3x3x3x32xf32, #tpu.memory_space<vmem>>, vector<1x1x1x32xf32>
    %186 = vector.shape_cast %185 : vector<1x1x1x32xf32> to vector<32xf32>
    %187 = vector.shape_cast %186 : vector<32xf32> to vector<1x1x32xf32>
    %188 = vector.broadcast %187 : vector<1x1x32xf32> to vector<16x16x32xf32>
    %189 = arith.mulf %188, %175 : vector<16x16x32xf32>
    %190 = arith.addf %184, %189 : vector<16x16x32xf32>
    %c1_101 = arith.constant 1 : index
    %c1_102 = arith.constant 1 : index
    %c2_103 = arith.constant 2 : index
    %c0_104 = arith.constant 0 : index
    %191 = vector.load %arg3[%c1_101, %c1_102, %c2_103, %c0_104] : memref<3x3x3x32xf32, #tpu.memory_space<vmem>>, vector<1x1x1x32xf32>
    %192 = vector.shape_cast %191 : vector<1x1x1x32xf32> to vector<32xf32>
    %cst_105 = arith.constant 0.000000e+00 : f32
    %193 = vector.broadcast %cst_105 : f32 to vector<16x1x32xf32>
    %194 = vector.extract_strided_slice %175 {offsets = [0, 1, 0], sizes = [16, 15, 32], strides = [1, 1, 1]} : vector<16x16x32xf32> to vector<16x15x32xf32>
    %195 = tpu.concatenate %194, %193 in 1 : vector<16x15x32xf32>, vector<16x1x32xf32> -> vector<16x16x32xf32>
    %196 = vector.shape_cast %192 : vector<32xf32> to vector<1x1x32xf32>
    %197 = vector.broadcast %196 : vector<1x1x32xf32> to vector<16x16x32xf32>
    %198 = arith.mulf %197, %195 : vector<16x16x32xf32>
    %199 = arith.addf %190, %198 : vector<16x16x32xf32>
    %c1_106 = arith.constant 1 : index
    %c2_107 = arith.constant 2 : index
    %c0_108 = arith.constant 0 : index
    %c0_109 = arith.constant 0 : index
    %200 = vector.load %arg3[%c1_106, %c2_107, %c0_108, %c0_109] : memref<3x3x3x32xf32, #tpu.memory_space<vmem>>, vector<1x1x1x32xf32>
    %201 = vector.shape_cast %200 : vector<1x1x1x32xf32> to vector<32xf32>
    %cst_110 = arith.constant 0.000000e+00 : f32
    %202 = vector.broadcast %cst_110 : f32 to vector<16x1x32xf32>
    %203 = vector.extract_strided_slice %144 {offsets = [0, 0, 0], sizes = [16, 15, 32], strides = [1, 1, 1]} : vector<16x16x32xf32> to vector<16x15x32xf32>
    %204 = tpu.concatenate %202, %203 in 1 : vector<16x1x32xf32>, vector<16x15x32xf32> -> vector<16x16x32xf32>
    %205 = vector.shape_cast %201 : vector<32xf32> to vector<1x1x32xf32>
    %206 = vector.broadcast %205 : vector<1x1x32xf32> to vector<16x16x32xf32>
    %207 = arith.mulf %206, %204 : vector<16x16x32xf32>
    %208 = arith.addf %199, %207 : vector<16x16x32xf32>
    %c1_111 = arith.constant 1 : index
    %c2_112 = arith.constant 2 : index
    %c1_113 = arith.constant 1 : index
    %c0_114 = arith.constant 0 : index
    %209 = vector.load %arg3[%c1_111, %c2_112, %c1_113, %c0_114] : memref<3x3x3x32xf32, #tpu.memory_space<vmem>>, vector<1x1x1x32xf32>
    %210 = vector.shape_cast %209 : vector<1x1x1x32xf32> to vector<32xf32>
    %211 = vector.shape_cast %210 : vector<32xf32> to vector<1x1x32xf32>
    %212 = vector.broadcast %211 : vector<1x1x32xf32> to vector<16x16x32xf32>
    %213 = arith.mulf %212, %144 : vector<16x16x32xf32>
    %214 = arith.addf %208, %213 : vector<16x16x32xf32>
    %c1_115 = arith.constant 1 : index
    %c2_116 = arith.constant 2 : index
    %c2_117 = arith.constant 2 : index
    %c0_118 = arith.constant 0 : index
    %215 = vector.load %arg3[%c1_115, %c2_116, %c2_117, %c0_118] : memref<3x3x3x32xf32, #tpu.memory_space<vmem>>, vector<1x1x1x32xf32>
    %216 = vector.shape_cast %215 : vector<1x1x1x32xf32> to vector<32xf32>
    %cst_119 = arith.constant 0.000000e+00 : f32
    %217 = vector.broadcast %cst_119 : f32 to vector<16x1x32xf32>
    %218 = vector.extract_strided_slice %144 {offsets = [0, 1, 0], sizes = [16, 15, 32], strides = [1, 1, 1]} : vector<16x16x32xf32> to vector<16x15x32xf32>
    %219 = tpu.concatenate %218, %217 in 1 : vector<16x15x32xf32>, vector<16x1x32xf32> -> vector<16x16x32xf32>
    %220 = vector.shape_cast %216 : vector<32xf32> to vector<1x1x32xf32>
    %221 = vector.broadcast %220 : vector<1x1x32xf32> to vector<16x16x32xf32>
    %222 = arith.mulf %221, %219 : vector<16x16x32xf32>
    %223 = arith.addf %214, %222 : vector<16x16x32xf32>
    %c1_120 = arith.constant 1 : index
    %c0_121 = arith.constant 0 : index
    %224 = vector.load %arg6[%c1_120, %c0_121] : memref<3x32xf32, #tpu.memory_space<vmem>>, vector<1x32xf32>
    %225 = vector.shape_cast %224 : vector<1x32xf32> to vector<32xf32>
    %226 = vector.shape_cast %225 : vector<32xf32> to vector<1x1x32xf32>
    %227 = vector.broadcast %226 : vector<1x1x32xf32> to vector<16x16x32xf32>
    %228 = arith.mulf %223, %227 : vector<16x16x32xf32>
    %c1_122 = arith.constant 1 : index
    %c0_123 = arith.constant 0 : index
    %229 = vector.load %arg7[%c1_122, %c0_123] : memref<3x32xf32, #tpu.memory_space<vmem>>, vector<1x32xf32>
    %230 = vector.shape_cast %229 : vector<1x32xf32> to vector<32xf32>
    %231 = vector.shape_cast %230 : vector<32xf32> to vector<1x1x32xf32>
    %232 = vector.broadcast %231 : vector<1x1x32xf32> to vector<16x16x32xf32>
    %233 = arith.addf %228, %232 : vector<16x16x32xf32>
    %c1_124 = arith.constant 1 : index
    %234 = memref.load %arg9[%c1_124] : memref<3xf32, #tpu.memory_space<smem>>
    %cst_125 = arith.constant 0.000000e+00 : f32
    %235 = vector.broadcast %cst_125 : f32 to vector<16x16x32xf32>
    %236 = arith.cmpf oge, %233, %235 : vector<16x16x32xf32>
    %237 = vector.broadcast %234 : f32 to vector<16x16x32xf32>
    %238 = arith.mulf %237, %233 : vector<16x16x32xf32>
    %239 = arith.select %236, %233, %238 : vector<16x16x32xi1>, vector<16x16x32xf32>
    %240 = vector.shape_cast %239 : vector<16x16x32xf32> to vector<256x32xf32>
    %c1_126 = arith.constant 1 : index
    %c0_127 = arith.constant 0 : index
    %c0_128 = arith.constant 0 : index
    %241 = vector.load %arg2[%c1_126, %c0_127, %c0_128] : memref<3x32x32xf32, #tpu.memory_space<vmem>>, vector<1x32x32xf32>
    %242 = vector.shape_cast %241 : vector<1x32x32xf32> to vector<32x32xf32>
    %cst_129 = arith.constant dense<0.000000e+00> : vector<256x32xf32>
    %243 = tpu.matmul %240, %242, %cst_129 {dimension_numbers = #tpu.dot_dimension_numbers<[1], [0], [0], [1], [0, 0, 1, 1], [], []>} : vector<256x32xf32>, vector<32x32xf32>, vector<256x32xf32> -> vector<256x32xf32>
    %244 = vector.shape_cast %243 : vector<256x32xf32> to vector<16x16x32xf32>
    %245 = arith.addf %123, %244 : vector<16x16x32xf32>
    %246 = vector.shape_cast %245 : vector<16x16x32xf32> to vector<256x32xf32>
    %c2_130 = arith.constant 2 : index
    %c0_131 = arith.constant 0 : index
    %c0_132 = arith.constant 0 : index
    %247 = vector.load %arg1[%c2_130, %c0_131, %c0_132] : memref<3x32x32xf32, #tpu.memory_space<vmem>>, vector<1x32x32xf32>
    %248 = vector.shape_cast %247 : vector<1x32x32xf32> to vector<32x32xf32>
    %cst_133 = arith.constant dense<0.000000e+00> : vector<256x32xf32>
    %249 = tpu.matmul %246, %248, %cst_133 {dimension_numbers = #tpu.dot_dimension_numbers<[1], [0], [0], [1], [0, 0, 1, 1], [], []>} : vector<256x32xf32>, vector<32x32xf32>, vector<256x32xf32> -> vector<256x32xf32>
    %c2_134 = arith.constant 2 : index
    %c0_135 = arith.constant 0 : index
    %250 = vector.load %arg4[%c2_134, %c0_135] : memref<3x32xf32, #tpu.memory_space<vmem>>, vector<1x32xf32>
    %251 = vector.shape_cast %250 : vector<1x32xf32> to vector<32xf32>
    %252 = vector.shape_cast %251 : vector<32xf32> to vector<1x32xf32>
    %253 = vector.broadcast %252 : vector<1x32xf32> to vector<256x32xf32>
    %254 = arith.mulf %249, %253 : vector<256x32xf32>
    %c2_136 = arith.constant 2 : index
    %c0_137 = arith.constant 0 : index
    %255 = vector.load %arg5[%c2_136, %c0_137] : memref<3x32xf32, #tpu.memory_space<vmem>>, vector<1x32xf32>
    %256 = vector.shape_cast %255 : vector<1x32xf32> to vector<32xf32>
    %257 = vector.shape_cast %256 : vector<32xf32> to vector<1x32xf32>
    %258 = vector.broadcast %257 : vector<1x32xf32> to vector<256x32xf32>
    %259 = arith.addf %254, %258 : vector<256x32xf32>
    %c2_138 = arith.constant 2 : index
    %260 = memref.load %arg8[%c2_138] : memref<3xf32, #tpu.memory_space<smem>>
    %cst_139 = arith.constant 0.000000e+00 : f32
    %261 = vector.broadcast %cst_139 : f32 to vector<256x32xf32>
    %262 = arith.cmpf oge, %259, %261 : vector<256x32xf32>
    %263 = vector.broadcast %260 : f32 to vector<256x32xf32>
    %264 = arith.mulf %263, %259 : vector<256x32xf32>
    %265 = arith.select %262, %259, %264 : vector<256x32xi1>, vector<256x32xf32>
    %266 = vector.shape_cast %265 : vector<256x32xf32> to vector<16x16x32xf32>
    %cst_140 = arith.constant 0.000000e+00 : f32
    %267 = vector.broadcast %cst_140 : f32 to vector<16x16x32xf32>
    %cst_141 = arith.constant 0.000000e+00 : f32
    %268 = vector.broadcast %cst_141 : f32 to vector<8x16x32xf32>
    %269 = vector.extract_strided_slice %266 {offsets = [0, 0, 0], sizes = [8, 16, 32], strides = [1, 1, 1]} : vector<16x16x32xf32> to vector<8x16x32xf32>
    %270 = tpu.concatenate %268, %269 in 0 : vector<8x16x32xf32>, vector<8x16x32xf32> -> vector<16x16x32xf32>
    %c2_142 = arith.constant 2 : index
    %c0_143 = arith.constant 0 : index
    %c0_144 = arith.constant 0 : index
    %c0_145 = arith.constant 0 : index
    %271 = vector.load %arg3[%c2_142, %c0_143, %c0_144, %c0_145] : memref<3x3x3x32xf32, #tpu.memory_space<vmem>>, vector<1x1x1x32xf32>
    %272 = vector.shape_cast %271 : vector<1x1x1x32xf32> to vector<32xf32>
    %cst_146 = arith.constant 0.000000e+00 : f32
    %273 = vector.broadcast %cst_146 : f32 to vector<16x1x32xf32>
    %274 = vector.extract_strided_slice %270 {offsets = [0, 0, 0], sizes = [16, 15, 32], strides = [1, 1, 1]} : vector<16x16x32xf32> to vector<16x15x32xf32>
    %275 = tpu.concatenate %273, %274 in 1 : vector<16x1x32xf32>, vector<16x15x32xf32> -> vector<16x16x32xf32>
    %276 = vector.shape_cast %272 : vector<32xf32> to vector<1x1x32xf32>
    %277 = vector.broadcast %276 : vector<1x1x32xf32> to vector<16x16x32xf32>
    %278 = arith.mulf %277, %275 : vector<16x16x32xf32>
    %279 = arith.addf %267, %278 : vector<16x16x32xf32>
    %c2_147 = arith.constant 2 : index
    %c0_148 = arith.constant 0 : index
    %c1_149 = arith.constant 1 : index
    %c0_150 = arith.constant 0 : index
    %280 = vector.load %arg3[%c2_147, %c0_148, %c1_149, %c0_150] : memref<3x3x3x32xf32, #tpu.memory_space<vmem>>, vector<1x1x1x32xf32>
    %281 = vector.shape_cast %280 : vector<1x1x1x32xf32> to vector<32xf32>
    %282 = vector.shape_cast %281 : vector<32xf32> to vector<1x1x32xf32>
    %283 = vector.broadcast %282 : vector<1x1x32xf32> to vector<16x16x32xf32>
    %284 = arith.mulf %283, %270 : vector<16x16x32xf32>
    %285 = arith.addf %279, %284 : vector<16x16x32xf32>
    %c2_151 = arith.constant 2 : index
    %c0_152 = arith.constant 0 : index
    %c2_153 = arith.constant 2 : index
    %c0_154 = arith.constant 0 : index
    %286 = vector.load %arg3[%c2_151, %c0_152, %c2_153, %c0_154] : memref<3x3x3x32xf32, #tpu.memory_space<vmem>>, vector<1x1x1x32xf32>
    %287 = vector.shape_cast %286 : vector<1x1x1x32xf32> to vector<32xf32>
    %cst_155 = arith.constant 0.000000e+00 : f32
    %288 = vector.broadcast %cst_155 : f32 to vector<16x1x32xf32>
    %289 = vector.extract_strided_slice %270 {offsets = [0, 1, 0], sizes = [16, 15, 32], strides = [1, 1, 1]} : vector<16x16x32xf32> to vector<16x15x32xf32>
    %290 = tpu.concatenate %289, %288 in 1 : vector<16x15x32xf32>, vector<16x1x32xf32> -> vector<16x16x32xf32>
    %291 = vector.shape_cast %287 : vector<32xf32> to vector<1x1x32xf32>
    %292 = vector.broadcast %291 : vector<1x1x32xf32> to vector<16x16x32xf32>
    %293 = arith.mulf %292, %290 : vector<16x16x32xf32>
    %294 = arith.addf %285, %293 : vector<16x16x32xf32>
    %cst_156 = arith.constant 0.000000e+00 : f32
    %295 = vector.broadcast %cst_156 : f32 to vector<4x16x32xf32>
    %296 = vector.extract_strided_slice %266 {offsets = [0, 0, 0], sizes = [12, 16, 32], strides = [1, 1, 1]} : vector<16x16x32xf32> to vector<12x16x32xf32>
    %297 = tpu.concatenate %295, %296 in 0 : vector<4x16x32xf32>, vector<12x16x32xf32> -> vector<16x16x32xf32>
    %c2_157 = arith.constant 2 : index
    %c1_158 = arith.constant 1 : index
    %c0_159 = arith.constant 0 : index
    %c0_160 = arith.constant 0 : index
    %298 = vector.load %arg3[%c2_157, %c1_158, %c0_159, %c0_160] : memref<3x3x3x32xf32, #tpu.memory_space<vmem>>, vector<1x1x1x32xf32>
    %299 = vector.shape_cast %298 : vector<1x1x1x32xf32> to vector<32xf32>
    %cst_161 = arith.constant 0.000000e+00 : f32
    %300 = vector.broadcast %cst_161 : f32 to vector<16x1x32xf32>
    %301 = vector.extract_strided_slice %297 {offsets = [0, 0, 0], sizes = [16, 15, 32], strides = [1, 1, 1]} : vector<16x16x32xf32> to vector<16x15x32xf32>
    %302 = tpu.concatenate %300, %301 in 1 : vector<16x1x32xf32>, vector<16x15x32xf32> -> vector<16x16x32xf32>
    %303 = vector.shape_cast %299 : vector<32xf32> to vector<1x1x32xf32>
    %304 = vector.broadcast %303 : vector<1x1x32xf32> to vector<16x16x32xf32>
    %305 = arith.mulf %304, %302 : vector<16x16x32xf32>
    %306 = arith.addf %294, %305 : vector<16x16x32xf32>
    %c2_162 = arith.constant 2 : index
    %c1_163 = arith.constant 1 : index
    %c1_164 = arith.constant 1 : index
    %c0_165 = arith.constant 0 : index
    %307 = vector.load %arg3[%c2_162, %c1_163, %c1_164, %c0_165] : memref<3x3x3x32xf32, #tpu.memory_space<vmem>>, vector<1x1x1x32xf32>
    %308 = vector.shape_cast %307 : vector<1x1x1x32xf32> to vector<32xf32>
    %309 = vector.shape_cast %308 : vector<32xf32> to vector<1x1x32xf32>
    %310 = vector.broadcast %309 : vector<1x1x32xf32> to vector<16x16x32xf32>
    %311 = arith.mulf %310, %297 : vector<16x16x32xf32>
    %312 = arith.addf %306, %311 : vector<16x16x32xf32>
    %c2_166 = arith.constant 2 : index
    %c1_167 = arith.constant 1 : index
    %c2_168 = arith.constant 2 : index
    %c0_169 = arith.constant 0 : index
    %313 = vector.load %arg3[%c2_166, %c1_167, %c2_168, %c0_169] : memref<3x3x3x32xf32, #tpu.memory_space<vmem>>, vector<1x1x1x32xf32>
    %314 = vector.shape_cast %313 : vector<1x1x1x32xf32> to vector<32xf32>
    %cst_170 = arith.constant 0.000000e+00 : f32
    %315 = vector.broadcast %cst_170 : f32 to vector<16x1x32xf32>
    %316 = vector.extract_strided_slice %297 {offsets = [0, 1, 0], sizes = [16, 15, 32], strides = [1, 1, 1]} : vector<16x16x32xf32> to vector<16x15x32xf32>
    %317 = tpu.concatenate %316, %315 in 1 : vector<16x15x32xf32>, vector<16x1x32xf32> -> vector<16x16x32xf32>
    %318 = vector.shape_cast %314 : vector<32xf32> to vector<1x1x32xf32>
    %319 = vector.broadcast %318 : vector<1x1x32xf32> to vector<16x16x32xf32>
    %320 = arith.mulf %319, %317 : vector<16x16x32xf32>
    %321 = arith.addf %312, %320 : vector<16x16x32xf32>
    %c2_171 = arith.constant 2 : index
    %c2_172 = arith.constant 2 : index
    %c0_173 = arith.constant 0 : index
    %c0_174 = arith.constant 0 : index
    %322 = vector.load %arg3[%c2_171, %c2_172, %c0_173, %c0_174] : memref<3x3x3x32xf32, #tpu.memory_space<vmem>>, vector<1x1x1x32xf32>
    %323 = vector.shape_cast %322 : vector<1x1x1x32xf32> to vector<32xf32>
    %cst_175 = arith.constant 0.000000e+00 : f32
    %324 = vector.broadcast %cst_175 : f32 to vector<16x1x32xf32>
    %325 = vector.extract_strided_slice %266 {offsets = [0, 0, 0], sizes = [16, 15, 32], strides = [1, 1, 1]} : vector<16x16x32xf32> to vector<16x15x32xf32>
    %326 = tpu.concatenate %324, %325 in 1 : vector<16x1x32xf32>, vector<16x15x32xf32> -> vector<16x16x32xf32>
    %327 = vector.shape_cast %323 : vector<32xf32> to vector<1x1x32xf32>
    %328 = vector.broadcast %327 : vector<1x1x32xf32> to vector<16x16x32xf32>
    %329 = arith.mulf %328, %326 : vector<16x16x32xf32>
    %330 = arith.addf %321, %329 : vector<16x16x32xf32>
    %c2_176 = arith.constant 2 : index
    %c2_177 = arith.constant 2 : index
    %c1_178 = arith.constant 1 : index
    %c0_179 = arith.constant 0 : index
    %331 = vector.load %arg3[%c2_176, %c2_177, %c1_178, %c0_179] : memref<3x3x3x32xf32, #tpu.memory_space<vmem>>, vector<1x1x1x32xf32>
    %332 = vector.shape_cast %331 : vector<1x1x1x32xf32> to vector<32xf32>
    %333 = vector.shape_cast %332 : vector<32xf32> to vector<1x1x32xf32>
    %334 = vector.broadcast %333 : vector<1x1x32xf32> to vector<16x16x32xf32>
    %335 = arith.mulf %334, %266 : vector<16x16x32xf32>
    %336 = arith.addf %330, %335 : vector<16x16x32xf32>
    %c2_180 = arith.constant 2 : index
    %c2_181 = arith.constant 2 : index
    %c2_182 = arith.constant 2 : index
    %c0_183 = arith.constant 0 : index
    %337 = vector.load %arg3[%c2_180, %c2_181, %c2_182, %c0_183] : memref<3x3x3x32xf32, #tpu.memory_space<vmem>>, vector<1x1x1x32xf32>
    %338 = vector.shape_cast %337 : vector<1x1x1x32xf32> to vector<32xf32>
    %cst_184 = arith.constant 0.000000e+00 : f32
    %339 = vector.broadcast %cst_184 : f32 to vector<16x1x32xf32>
    %340 = vector.extract_strided_slice %266 {offsets = [0, 1, 0], sizes = [16, 15, 32], strides = [1, 1, 1]} : vector<16x16x32xf32> to vector<16x15x32xf32>
    %341 = tpu.concatenate %340, %339 in 1 : vector<16x15x32xf32>, vector<16x1x32xf32> -> vector<16x16x32xf32>
    %342 = vector.shape_cast %338 : vector<32xf32> to vector<1x1x32xf32>
    %343 = vector.broadcast %342 : vector<1x1x32xf32> to vector<16x16x32xf32>
    %344 = arith.mulf %343, %341 : vector<16x16x32xf32>
    %345 = arith.addf %336, %344 : vector<16x16x32xf32>
    %c2_185 = arith.constant 2 : index
    %c0_186 = arith.constant 0 : index
    %346 = vector.load %arg6[%c2_185, %c0_186] : memref<3x32xf32, #tpu.memory_space<vmem>>, vector<1x32xf32>
    %347 = vector.shape_cast %346 : vector<1x32xf32> to vector<32xf32>
    %348 = vector.shape_cast %347 : vector<32xf32> to vector<1x1x32xf32>
    %349 = vector.broadcast %348 : vector<1x1x32xf32> to vector<16x16x32xf32>
    %350 = arith.mulf %345, %349 : vector<16x16x32xf32>
    %c2_187 = arith.constant 2 : index
    %c0_188 = arith.constant 0 : index
    %351 = vector.load %arg7[%c2_187, %c0_188] : memref<3x32xf32, #tpu.memory_space<vmem>>, vector<1x32xf32>
    %352 = vector.shape_cast %351 : vector<1x32xf32> to vector<32xf32>
    %353 = vector.shape_cast %352 : vector<32xf32> to vector<1x1x32xf32>
    %354 = vector.broadcast %353 : vector<1x1x32xf32> to vector<16x16x32xf32>
    %355 = arith.addf %350, %354 : vector<16x16x32xf32>
    %c2_189 = arith.constant 2 : index
    %356 = memref.load %arg9[%c2_189] : memref<3xf32, #tpu.memory_space<smem>>
    %cst_190 = arith.constant 0.000000e+00 : f32
    %357 = vector.broadcast %cst_190 : f32 to vector<16x16x32xf32>
    %358 = arith.cmpf oge, %355, %357 : vector<16x16x32xf32>
    %359 = vector.broadcast %356 : f32 to vector<16x16x32xf32>
    %360 = arith.mulf %359, %355 : vector<16x16x32xf32>
    %361 = arith.select %358, %355, %360 : vector<16x16x32xi1>, vector<16x16x32xf32>
    %362 = vector.shape_cast %361 : vector<16x16x32xf32> to vector<256x32xf32>
    %c2_191 = arith.constant 2 : index
    %c0_192 = arith.constant 0 : index
    %c0_193 = arith.constant 0 : index
    %363 = vector.load %arg2[%c2_191, %c0_192, %c0_193] : memref<3x32x32xf32, #tpu.memory_space<vmem>>, vector<1x32x32xf32>
    %364 = vector.shape_cast %363 : vector<1x32x32xf32> to vector<32x32xf32>
    %cst_194 = arith.constant dense<0.000000e+00> : vector<256x32xf32>
    %365 = tpu.matmul %362, %364, %cst_194 {dimension_numbers = #tpu.dot_dimension_numbers<[1], [0], [0], [1], [0, 0, 1, 1], [], []>} : vector<256x32xf32>, vector<32x32xf32>, vector<256x32xf32> -> vector<256x32xf32>
    %366 = vector.shape_cast %365 : vector<256x32xf32> to vector<16x16x32xf32>
    %367 = arith.addf %245, %366 : vector<16x16x32xf32>
    %c0_195 = arith.constant 0 : index
    %c0_196 = arith.constant 0 : index
    %c0_197 = arith.constant 0 : index
    %c0_198 = arith.constant 0 : index
    %368 = vector.load %arg11[%c0_195, %c0_196, %c0_197, %c0_198] : memref<1x16x16x32xf32, #tpu.memory_space<vmem>>, vector<1x16x16x32xf32>
    %369 = vector.shape_cast %368 : vector<1x16x16x32xf32> to vector<16x16x32xf32>
    %370 = vector.shape_cast %367 : vector<16x16x32xf32> to vector<1x16x16x32xf32>
    tpu.vector_store %arg11[%c0_195, %c0_196, %c0_197, %c0_198], %370 {strides = array<i32>} : memref<1x16x16x32xf32, #tpu.memory_space<vmem>>, vector<1x16x16x32xf32>,
    return
  }
  func.func @transform_0(%arg0: i32) -> (i32, i32, i32) {
    %c0_i32 = arith.constant 0 : i32
    %c0_i32_0 = arith.constant 0 : i32
    %c0_i32_1 = arith.constant 0 : i32
    %c0_i32_2 = arith.constant 0 : i32
    return %c0_i32, %c0_i32_0, %c0_i32_1 : i32, i32, i32
  }
  func.func @transform_1(%arg0: i32) -> (i32, i32, i32) {
    %c0_i32 = arith.constant 0 : i32
    %c0_i32_0 = arith.constant 0 : i32
    %c0_i32_1 = arith.constant 0 : i32
    %c0_i32_2 = arith.constant 0 : i32
    return %c0_i32, %c0_i32_0, %c0_i32_1 : i32, i32, i32
  }
  func.func @transform_2(%arg0: i32) -> (i32, i32, i32, i32) {
    %c0_i32 = arith.constant 0 : i32
    %c0_i32_0 = arith.constant 0 : i32
    %c0_i32_1 = arith.constant 0 : i32
    %c0_i32_2 = arith.constant 0 : i32
    %c0_i32_3 = arith.constant 0 : i32
    return %c0_i32, %c0_i32_0, %c0_i32_1, %c0_i32_2 : i32, i32, i32, i32
  }
  func.func @transform_3(%arg0: i32) -> (i32, i32) {
    %c0_i32 = arith.constant 0 : i32
    %c0_i32_0 = arith.constant 0 : i32
    %c0_i32_1 = arith.constant 0 : i32
    return %c0_i32, %c0_i32_0 : i32, i32
  }
  func.func @transform_4(%arg0: i32) -> (i32, i32) {
    %c0_i32 = arith.constant 0 : i32
    %c0_i32_0 = arith.constant 0 : i32
    %c0_i32_1 = arith.constant 0 : i32
    return %c0_i32, %c0_i32_0 : i32, i32
  }
  func.func @transform_5(%arg0: i32) -> (i32, i32) {
    %c0_i32 = arith.constant 0 : i32
    %c0_i32_0 = arith.constant 0 : i32
    %c0_i32_1 = arith.constant 0 : i32
    return %c0_i32, %c0_i32_0 : i32, i32
  }
  func.func @transform_6(%arg0: i32) -> (i32, i32) {
    %c0_i32 = arith.constant 0 : i32
    %c0_i32_0 = arith.constant 0 : i32
    %c0_i32_1 = arith.constant 0 : i32
    return %c0_i32, %c0_i32_0 : i32, i32
  }
  func.func @transform_7(%arg0: i32) -> i32 {
    %c0_i32 = arith.constant 0 : i32
    %c0_i32_0 = arith.constant 0 : i32
    return %c0_i32 : i32
  }
  func.func @transform_8(%arg0: i32) -> i32 {
    %c0_i32 = arith.constant 0 : i32
    %c0_i32_0 = arith.constant 0 : i32
    return %c0_i32 : i32
  }
  func.func @transform_9(%arg0: i32) -> (i32, i32, i32, i32) {
    %c0_i32 = arith.constant 0 : i32
    %c0_i32_0 = arith.constant 0 : i32
    %c0_i32_1 = arith.constant 0 : i32
    %c0_i32_2 = arith.constant 0 : i32
    return %arg0, %c0_i32, %c0_i32_0, %c0_i32_1 : i32, i32, i32, i32
  }
  func.func @transform_10(%arg0: i32) -> (i32, i32, i32, i32) {
    %c0_i32 = arith.constant 0 : i32
    %c0_i32_0 = arith.constant 0 : i32
    %c0_i32_1 = arith.constant 0 : i32
    %c0_i32_2 = arith.constant 0 : i32
    return %arg0, %c0_i32, %c0_i32_0, %c0_i32_1 : i32, i32, i32, i32
  }
}

</mosaic_0001>

<llo_original>
// kernel: tpu_custom_call.1
$region0: #{tpu_custom_call.1}
  #allocation0 [shape = 'u32[]', space=smem, size = 0x4, offset = 0x4, fixed_abs, tag = 'smem constant byte address 0x4 - core index']
  #allocation1 [shape = 'u32[72,128]{1,0:T(1,128)}', space=vmem, size = 0x9000, scoped, tag = 'internal scratch']
  %s0 = inlined_call_operand.hbm [shape: f32[3,32,32], index: 0, kind: input, shape index: {}]
  %s1 = inlined_call_operand.hbm [shape: f32[3,32,32], index: 1, kind: input, shape index: {}]
  %s2 = inlined_call_operand.hbm [shape: f32[3,3,3,32], index: 2, kind: input, shape index: {}]
  %s3 = inlined_call_operand.hbm [shape: f32[3,32], index: 3, kind: input, shape index: {}]
  %s4 = inlined_call_operand.hbm [shape: f32[3,32], index: 4, kind: input, shape index: {}]
  %s5 = inlined_call_operand.vmem [shape: f32[3,32], index: 5, kind: input, shape index: {}]
  %s6 = inlined_call_operand.hbm [shape: f32[3,32], index: 6, kind: input, shape index: {}]
  %s7 = inlined_call_operand.vmem [shape: f32[3], index: 7, kind: input, shape index: {}]
  %s8 = inlined_call_operand.vmem [shape: f32[3], index: 8, kind: input, shape index: {}]
  %s9 = inlined_call_operand.hbm [shape: f32[2,16,16,32], index: 9, kind: input, shape index: {}]
  %s10 = inlined_call_operand.hbm [shape: f32[2,16,16,32], index: 10, kind: output, shape index: {}]
  %s11 = sld [smem:[#allocation0]]
  $region109: #{tpu_custom_call.1} parent=0
    _
  %s13 = ssub.s32 1, %s11
  %s14 = scalar_select 0, %s13, %s11
  $region1: #{tpu_custom_call.1} parent=0
    #allocation2 [shape = 'u8[49152]{0}', space=vmem, size = 0xc000, scoped, tag = 'input window, operand 0, single buffered']
    #allocation3 [shape = 's32[2]{0}', space=sflag, size = 0x8, scoped, tag = 'scoped memory for tpu_custom_call.1']
    #allocation4 [shape = 's32[2]{0}', space=sflag, size = 0x8, scoped, tag = 'scoped memory for tpu_custom_call.1']
    #allocation5 [shape = 's32[2]{0}', space=sflag, size = 0x8, scoped, tag = 'scoped memory for tpu_custom_call.1']
    #allocation6 [shape = 'u8[49152]{0}', space=vmem, size = 0xc000, scoped, tag = 'input window, operand 1, single buffered']
    #allocation7 [shape = 's32[1]{0}', space=sflag, size = 0x4, scoped, tag = 'scoped memory for tpu_custom_call.1']
    #allocation8 [shape = 'u8[18432]{0}', space=vmem, size = 0x4800, scoped, tag = 'input window, operand 2, single buffered']
    #allocation9 [shape = 'u8[2048]{0}', space=vmem, size = 0x800, scoped, tag = 'input window, operand 3, single buffered']
    #allocation10 [shape = 's32[1]{0}', space=sflag, size = 0x4, scoped, tag = 'scoped memory for tpu_custom_call.1']
    #allocation11 [shape = 'u8[2048]{0}', space=vmem, size = 0x800, scoped, tag = 'input window, operand 4, single buffered']
    #allocation12 [shape = 'u8[2048]{0}', space=vmem, size = 0x800, scoped, tag = 'input window, operand 6, single buffered']
    #allocation13 [shape = 's32[1]{0}', space=sflag, size = 0x4, scoped, tag = 'scoped memory for tpu_custom_call.1']
    #allocation14 [shape = 'u8[512]{0}', space=smem, size = 0x200, scoped, tag = 'input window, operand 7, single buffered']
    #allocation15 [shape = 'u8[512]{0}', space=smem, size = 0x200, scoped, tag = 'input window, operand 8, single buffered']
    #allocation16 [shape = 's32[1]{0}', space=sflag, size = 0x4, scoped, tag = 'scoped memory for tpu_custom_call.1']
    #allocation17 [shape = 'u8[262144]{0}', space=vmem, size = 0x40000, scoped, tag = 'input window, operand 9']
    #allocation18 [shape = 'u8[262144]{0}', space=vmem, size = 0x40000, scoped, tag = 'output window, operand 0']
    %15 = vsyncpa [#allocation3], 0
    %16 = vsyncpa [#allocation7], 0
    %17 = vsyncpa [#allocation10], 0
    %18 = vsyncpa [#allocation13], 0
    %19 = vsyncpa [#allocation5], 0
    %20 = vsyncpa [#allocation16], 0
    %21 = vsyncpa [#allocation4], 0
    %s22 = scalar_lea.sflag [#allocation4], 1
    %23 = vsyncpa %s22, 0
    loop: start=0, step=1, limit=4
    $region2: #{tpu_custom_call.1} parent=1 // loop_pre_header
      _
    $region3: #{tpu_custom_call.1} parent=1 // loop_header
      %s25 = sphi 0, %s29
      %p26 = scmp.ge.s32.totalorder %s25, 4
      %s33 = sphi 0, %s33
      %s35 = sphi 0, %s33
      %s36 = sphi 0, %s35
      %s50 = sphi 0, %s36
      %s54 = sphi 0, %s54
      %s56 = sphi 0, %s54
      %s57 = sphi 0, %s56
      %s71 = sphi 0, %s57
      %s75 = sphi 0, %s75
      %s77 = sphi 0, %s75
      %s78 = sphi 0, %s77
      %s92 = sphi 0, %s78
      %s96 = sphi 0, %s96
      %s98 = sphi 0, %s96
      %s99 = sphi 0, %s98
      %s113 = sphi 0, %s99
      %s117 = sphi 0, %s117
      %s119 = sphi 0, %s117
      %s120 = sphi 0, %s119
      %s134 = sphi 0, %s120
      %s138 = sphi 0, %s138
      %s140 = sphi 0, %s138
      %s141 = sphi 0, %s140
      %s155 = sphi 0, %s141
      %s159 = sphi 0, %s159
      %s161 = sphi 0, %s159
      %s162 = sphi 0, %s161
      %s176 = sphi 0, %s162
      %s180 = sphi 0, %s180
      %s182 = sphi 0, %s180
      %s183 = sphi 0, %s182
      %s197 = sphi 0, %s183
      %s201 = sphi 0, %s201
      %s203 = sphi 0, %s201
      %s204 = sphi 0, %s203
      %s218 = sphi 0, %s204
      %s224 = sphi 0, %s226
      %s227 = sphi 0, %s224
      %s228 = sphi 0, %s227
      %s244 = sphi 0, %s228
      %s250 = sphi 0, %s252
      %s253 = sphi 0, %s250
      %s254 = sphi 0, %s253
      %s270 = sphi 0, %s254
    $region4: #{tpu_custom_call.1} parent=1 // loop_header_branch
      %28 = sbr.rel (%p26) target = $region8
    $region5: #{tpu_custom_call.1} parent=1 // loop_body
      %s30 = ssub.s32 %s25, 1
      %s31 = ssub.s32 %s25, 2
      %s32 = sadd.s32 %s25, 1
      %s34 = sadd.s32 %s33, 1
      %p37 = scmp.eq.s32.totalorder %s25, 1
      %p38 = scmp.ne.s32.totalorder %s33, %s35
      %p39 = scmp.eq.s32.totalorder %s25, 0
      %p40 = por %p38, %p39
      %p41 = scmp.ne.s32.totalorder %s33, %s35
      %p42 = scmp.eq.s32.totalorder %s30, 1
      %p43 = por %p41, %p42
      %p44 = scmp.ne.s32.totalorder %s35, %s36
      %p45 = scmp.eq.s32.totalorder %s30, 0
      %p46 = por %p44, %p45
      %p47 = scmp.ne.s32.totalorder %s35, %s36
      %p48 = scmp.eq.s32.totalorder %s31, 1
      %p49 = por %p47, %p48
      %p51 = scmp.ne.s32.totalorder %s36, %s50
      %p52 = scmp.eq.s32.totalorder %s31, 0
      %p53 = por %p51, %p52
      %s55 = sadd.s32 %s54, 1
      %p58 = scmp.eq.s32.totalorder %s25, 1
      %p59 = scmp.ne.s32.totalorder %s54, %s56
      %p60 = scmp.eq.s32.totalorder %s25, 0
      %p61 = por %p59, %p60
      %p62 = scmp.ne.s32.totalorder %s54, %s56
      %p63 = scmp.eq.s32.totalorder %s30, 1
      %p64 = por %p62, %p63
      %p65 = scmp.ne.s32.totalorder %s56, %s57
      %p66 = scmp.eq.s32.totalorder %s30, 0
      %p67 = por %p65, %p66
      %p68 = scmp.ne.s32.totalorder %s56, %s57
      %p69 = scmp.eq.s32.totalorder %s31, 1
      %p70 = por %p68, %p69
      %p72 = scmp.ne.s32.totalorder %s57, %s71
      %p73 = scmp.eq.s32.totalorder %s31, 0
      %p74 = por %p72, %p73
      %s76 = sadd.s32 %s75, 1
      %p79 = scmp.eq.s32.totalorder %s25, 1
      %p80 = scmp.ne.s32.totalorder %s75, %s77
      %p81 = scmp.eq.s32.totalorder %s25, 0
      %p82 = por %p80, %p81
      %p83 = scmp.ne.s32.totalorder %s75, %s77
      %p84 = scmp.eq.s32.totalorder %s30, 1
      %p85 = por %p83, %p84
      %p86 = scmp.ne.s32.totalorder %s77, %s78
      %p87 = scmp.eq.s32.totalorder %s30, 0
      %p88 = por %p86, %p87
      %p89 = scmp.ne.s32.totalorder %s77, %s78
      %p90 = scmp.eq.s32.totalorder %s31, 1
      %p91 = por %p89, %p90
      %p93 = scmp.ne.s32.totalorder %s78, %s92
      %p94 = scmp.eq.s32.totalorder %s31, 0
      %p95 = por %p93, %p94
      %s97 = sadd.s32 %s96, 1
      %p100 = scmp.eq.s32.totalorder %s25, 1
      %p101 = scmp.ne.s32.totalorder %s96, %s98
      %p102 = scmp.eq.s32.totalorder %s25, 0
      %p103 = por %p101, %p102
      %p104 = scmp.ne.s32.totalorder %s96, %s98
      %p105 = scmp.eq.s32.totalorder %s30, 1
      %p106 = por %p104, %p105
      %p107 = scmp.ne.s32.totalorder %s98, %s99
      %p108 = scmp.eq.s32.totalorder %s30, 0
      %p109 = por %p107, %p108
      %p110 = scmp.ne.s32.totalorder %s98, %s99
      %p111 = scmp.eq.s32.totalorder %s31, 1
      %p112 = por %p110, %p111
      %p114 = scmp.ne.s32.totalorder %s99, %s113
      %p115 = scmp.eq.s32.totalorder %s31, 0
      %p116 = por %p114, %p115
      %s118 = sadd.s32 %s117, 1
      %p121 = scmp.eq.s32.totalorder %s25, 1
      %p122 = scmp.ne.s32.totalorder %s117, %s119
      %p123 = scmp.eq.s32.totalorder %s25, 0
      %p124 = por %p122, %p123
      %p125 = scmp.ne.s32.totalorder %s117, %s119
      %p126 = scmp.eq.s32.totalorder %s30, 1
      %p127 = por %p125, %p126
      %p128 = scmp.ne.s32.totalorder %s119, %s120
      %p129 = scmp.eq.s32.totalorder %s30, 0
      %p130 = por %p128, %p129
      %p131 = scmp.ne.s32.totalorder %s119, %s120
      %p132 = scmp.eq.s32.totalorder %s31, 1
      %p133 = por %p131, %p132
      %p135 = scmp.ne.s32.totalorder %s120, %s134
      %p136 = scmp.eq.s32.totalorder %s31, 0
      %p137 = por %p135, %p136
      %s139 = sadd.s32 %s138, 1
      %p142 = scmp.eq.s32.totalorder %s25, 1
      %p143 = scmp.ne.s32.totalorder %s138, %s140
      %p144 = scmp.eq.s32.totalorder %s25, 0
      %p145 = por %p143, %p144
      %p146 = scmp.ne.s32.totalorder %s138, %s140
      %p147 = scmp.eq.s32.totalorder %s30, 1
      %p148 = por %p146, %p147
      %p149 = scmp.ne.s32.totalorder %s140, %s141
      %p150 = scmp.eq.s32.totalorder %s30, 0
      %p151 = por %p149, %p150
      %p152 = scmp.ne.s32.totalorder %s140, %s141
      %p153 = scmp.eq.s32.totalorder %s31, 1
      %p154 = por %p152, %p153
      %p156 = scmp.ne.s32.totalorder %s141, %s155
      %p157 = scmp.eq.s32.totalorder %s31, 0
      %p158 = por %p156, %p157
      %s160 = sadd.s32 %s159, 1
      %p163 = scmp.eq.s32.totalorder %s25, 1
      %p164 = scmp.ne.s32.totalorder %s159, %s161
      %p165 = scmp.eq.s32.totalorder %s25, 0
      %p166 = por %p164, %p165
      %p167 = scmp.ne.s32.totalorder %s159, %s161
      %p168 = scmp.eq.s32.totalorder %s30, 1
      %p169 = por %p167, %p168
      %p170 = scmp.ne.s32.totalorder %s161, %s162
      %p171 = scmp.eq.s32.totalorder %s30, 0
      %p172 = por %p170, %p171
      %p173 = scmp.ne.s32.totalorder %s161, %s162
      %p174 = scmp.eq.s32.totalorder %s31, 1
      %p175 = por %p173, %p174
      %p177 = scmp.ne.s32.totalorder %s162, %s176
      %p178 = scmp.eq.s32.totalorder %s31, 0
      %p179 = por %p177, %p178
      %s181 = sadd.s32 %s180, 1
      %p184 = scmp.eq.s32.totalorder %s25, 1
      %p185 = scmp.ne.s32.totalorder %s180, %s182
      %p186 = scmp.eq.s32.totalorder %s25, 0
      %p187 = por %p185, %p186
      %p188 = scmp.ne.s32.totalorder %s180, %s182
      %p189 = scmp.eq.s32.totalorder %s30, 1
      %p190 = por %p188, %p189
      %p191 = scmp.ne.s32.totalorder %s182, %s183
      %p192 = scmp.eq.s32.totalorder %s30, 0
      %p193 = por %p191, %p192
      %p194 = scmp.ne.s32.totalorder %s182, %s183
      %p195 = scmp.eq.s32.totalorder %s31, 1
      %p196 = por %p194, %p195
      %p198 = scmp.ne.s32.totalorder %s183, %s197
      %p199 = scmp.eq.s32.totalorder %s31, 0
      %p200 = por %p198, %p199
      %s202 = sadd.s32 %s201, 1
      %p205 = scmp.eq.s32.totalorder %s25, 1
      %p206 = scmp.ne.s32.totalorder %s201, %s203
      %p207 = scmp.eq.s32.totalorder %s25, 0
      %p208 = por %p206, %p207
      %p209 = scmp.ne.s32.totalorder %s201, %s203
      %p210 = scmp.eq.s32.totalorder %s30, 1
      %p211 = por %p209, %p210
      %p212 = scmp.ne.s32.totalorder %s203, %s204
      %p213 = scmp.eq.s32.totalorder %s30, 0
      %p214 = por %p212, %p213
      %p215 = scmp.ne.s32.totalorder %s203, %s204
      %p216 = scmp.eq.s32.totalorder %s31, 1
      %p217 = por %p215, %p216
      %p219 = scmp.ne.s32.totalorder %s204, %s218
      %p220 = scmp.eq.s32.totalorder %s31, 0
      %p221 = por %p219, %p220
      %s222 = ssub.s32 %s25, %s32
      %p223 = scmp.eq.s32.totalorder %s222, 0
      %s225 = sadd.s32 %s224, 1
      %s226 = scalar_select %p223, %s224, %s225
      %p229 = pneg %p223
      %p230 = scmp.eq.s32.totalorder %s25, 1
      %p231 = por %p229, %p230
      %p232 = scmp.ne.s32.totalorder %s224, %s227
      %p233 = scmp.eq.s32.totalorder %s25, 0
      %p234 = por %p232, %p233
      %p235 = scmp.ne.s32.totalorder %s224, %s227
      %p236 = scmp.eq.s32.totalorder %s30, 1
      %p237 = por %p235, %p236
      %p238 = scmp.ne.s32.totalorder %s227, %s228
      %p239 = scmp.eq.s32.totalorder %s30, 0
      %p240 = por %p238, %p239
      %p241 = scmp.ne.s32.totalorder %s227, %s228
      %p242 = scmp.eq.s32.totalorder %s31, 1
      %p243 = por %p241, %p242
      %p245 = scmp.ne.s32.totalorder %s228, %s244
      %p246 = scmp.eq.s32.totalorder %s31, 0
      %p247 = por %p245, %p246
      %s248 = ssub.s32 %s25, %s32
      %p249 = scmp.eq.s32.totalorder %s248, 0
      %s251 = sadd.s32 %s250, 1
      %s252 = scalar_select %p249, %s250, %s251
      %p255 = pneg %p249
      %p256 = scmp.eq.s32.totalorder %s25, 1
      %p257 = por %p255, %p256
      %p258 = scmp.ne.s32.totalorder %s250, %s253
      %p259 = scmp.eq.s32.totalorder %s25, 0
      %p260 = por %p258, %p259
      %p261 = scmp.ne.s32.totalorder %s250, %s253
      %p262 = scmp.eq.s32.totalorder %s30, 1
      %p263 = por %p261, %p262
      %p264 = scmp.ne.s32.totalorder %s253, %s254
      %p265 = scmp.eq.s32.totalorder %s30, 0
      %p266 = por %p264, %p265
      %p267 = scmp.ne.s32.totalorder %s253, %s254
      %p268 = scmp.eq.s32.totalorder %s31, 1
      %p269 = por %p267, %p268
      %p271 = scmp.ne.s32.totalorder %s254, %s270
      %p272 = scmp.eq.s32.totalorder %s31, 0
      %p273 = por %p271, %p272
      %p274 = scmp.le.s32.totalorder 1, %s25
      %p275 = scmp.lt.s32.totalorder %s25, 3
      %p276 = pnand %p274, %p275
      %p277 = pneg %p276
      // Predicated region
      $region9: #{tpu_custom_call.1} parent=5 // pred_check
        _
      $region10: #{tpu_custom_call.1} parent=5 // pred_check_branch
        %279 = sbr.rel (%p276) target = $region12
      $region11: #{tpu_custom_call.1} parent=5 // pred_region
        %s280 = ssub.s32 %s25, 1
        // Predicated region
        $region13: #{tpu_custom_call.1} parent=11 // pred_check
          %p281 = pneg %p46
        $region14: #{tpu_custom_call.1} parent=11 // pred_check_branch
          %283 = sbr.rel (%p281) target = $region16
        $region15: #{tpu_custom_call.1} parent=11 // pred_region
          %285 = vsyncadd [#allocation3], 0
          %s286 = sshll.u32 %s0, 4
          %s287 = int_to_ptr.hbm [resolvable:$true] %s286
          %s288 = sshll.u32 [#allocation2], 4
          %s289 = int_to_ptr.vmem [resolvable:$true] %s288
          %294 = dma.hbm_to_vmem [thread:$0]  %s287, 1536, %s289, [#allocation3], 128, 128, 8
        $region16: #{tpu_custom_call.1} parent=11 // pred_fallthru
          _
        // Predicated region
        $region17: #{tpu_custom_call.1} parent=11 // pred_check
          %p295 = pneg %p67
        $region18: #{tpu_custom_call.1} parent=11 // pred_check_branch
          %297 = sbr.rel (%p295) target = $region20
        $region19: #{tpu_custom_call.1} parent=11 // pred_region
          %299 = vsyncadd [#allocation7], 0
          %s300 = sshll.u32 %s1, 4
          %s301 = int_to_ptr.hbm [resolvable:$true] %s300
          %s302 = sshll.u32 [#allocation6], 4
          %s303 = int_to_ptr.vmem [resolvable:$true] %s302
          %308 = dma.hbm_to_vmem [thread:$0]  %s301, 1536, %s303, [#allocation7], 128, 128, 8
        $region20: #{tpu_custom_call.1} parent=11 // pred_fallthru
          _
        // Predicated region
        $region21: #{tpu_custom_call.1} parent=11 // pred_check
          %p309 = pneg %p88
        $region22: #{tpu_custom_call.1} parent=11 // pred_check_branch
          %311 = sbr.rel (%p309) target = $region24
        $region23: #{tpu_custom_call.1} parent=11 // pred_region
          %313 = vsyncadd [#allocation7], 0
          %s314 = sshll.u32 %s2, 4
          %s315 = int_to_ptr.hbm [resolvable:$true] %s314
          %s316 = sshll.u32 [#allocation8], 4
          %s317 = int_to_ptr.vmem [resolvable:$true] %s316
          %322 = dma.hbm_to_vmem [thread:$0]  %s315, 576, %s317, [#allocation7], 64, 64, 4
        $region24: #{tpu_custom_call.1} parent=11 // pred_fallthru
          _
        // Predicated region
        $region25: #{tpu_custom_call.1} parent=11 // pred_check
          %p323 = pneg %p109
        $region26: #{tpu_custom_call.1} parent=11 // pred_check_branch
          %325 = sbr.rel (%p323) target = $region28
        $region27: #{tpu_custom_call.1} parent=11 // pred_region
          %327 = vsyncadd [#allocation10], 0
          %s329 = sshll.u32 %s3, 4
          %s330 = int_to_ptr.hbm [resolvable:$true] %s329
          %s331 = sshll.u32 [#allocation9], 4
          %s332 = int_to_ptr.vmem [resolvable:$true] %s331
          %334 = dma.hbm_to_vmem [thread:$0]  %s330, 64, %s332, [#allocation10]
        $region28: #{tpu_custom_call.1} parent=11 // pred_fallthru
          _
        // Predicated region
        $region29: #{tpu_custom_call.1} parent=11 // pred_check
          %p335 = pneg %p130
        $region30: #{tpu_custom_call.1} parent=11 // pred_check_branch
          %337 = sbr.rel (%p335) target = $region32
        $region31: #{tpu_custom_call.1} parent=11 // pred_region
          %339 = vsyncadd [#allocation10], 0
          %s341 = sshll.u32 %s4, 4
          %s342 = int_to_ptr.hbm [resolvable:$true] %s341
          %s343 = sshll.u32 [#allocation11], 4
          %s344 = int_to_ptr.vmem [resolvable:$true] %s343
          %346 = dma.hbm_to_vmem [thread:$0]  %s342, 64, %s344, [#allocation10]
        $region32: #{tpu_custom_call.1} parent=11 // pred_fallthru
          _
        // Predicated region
        $region33: #{tpu_custom_call.1} parent=11 // pred_check
          %p347 = pneg %p151
        $region34: #{tpu_custom_call.1} parent=11 // pred_check_branch
          %349 = sbr.rel (%p347) target = $region36
        $region35: #{tpu_custom_call.1} parent=11 // pred_region
          _
        $region36: #{tpu_custom_call.1} parent=11 // pred_fallthru
          _
        // Predicated region
        $region37: #{tpu_custom_call.1} parent=11 // pred_check
          %p350 = pneg %p172
        $region38: #{tpu_custom_call.1} parent=11 // pred_check_branch
          %352 = sbr.rel (%p350) target = $region40
        $region39: #{tpu_custom_call.1} parent=11 // pred_region
          %354 = vsyncadd [#allocation13], 0
          %s356 = sshll.u32 %s6, 4
          %s357 = int_to_ptr.hbm [resolvable:$true] %s356
          %s358 = sshll.u32 [#allocation12], 4
          %s359 = int_to_ptr.vmem [resolvable:$true] %s358
          %361 = dma.hbm_to_vmem [thread:$0]  %s357, 64, %s359, [#allocation13]
        $region40: #{tpu_custom_call.1} parent=11 // pred_fallthru
          _
        // Predicated region
        $region41: #{tpu_custom_call.1} parent=11 // pred_check
          %p362 = pneg %p193
        $region42: #{tpu_custom_call.1} parent=11 // pred_check_branch
          %364 = sbr.rel (%p362) target = $region44
        $region43: #{tpu_custom_call.1} parent=11 // pred_region
          %366 = vsyncadd [#allocation5], 0
          %s368 = sshll.u32 %s7, 4
          %s369 = int_to_ptr.vmem [resolvable:$true] %s368
          %371 = dma.vmem_to_smem %s369, 16, [#allocation14], [#allocation5]
        $region44: #{tpu_custom_call.1} parent=11 // pred_fallthru
          _
        // Predicated region
        $region45: #{tpu_custom_call.1} parent=11 // pred_check
          %p372 = pneg %p214
        $region46: #{tpu_custom_call.1} parent=11 // pred_check_branch
          %374 = sbr.rel (%p372) target = $region48
        $region47: #{tpu_custom_call.1} parent=11 // pred_region
          %376 = vsyncadd [#allocation16], 0
          %s378 = sshll.u32 %s8, 4
          %s379 = int_to_ptr.vmem [resolvable:$true] %s378
          %381 = dma.vmem_to_smem %s379, 16, [#allocation15], [#allocation16]
        $region48: #{tpu_custom_call.1} parent=11 // pred_fallthru
          _
      $region12: #{tpu_custom_call.1} parent=5 // pred_fallthru
        _
      %p382 = scmp.lt.s32.totalorder %s25, 2
      // Predicated region
      $region49: #{tpu_custom_call.1} parent=5 // pred_check
        %p383 = pneg %p382
      $region50: #{tpu_custom_call.1} parent=5 // pred_check_branch
        %385 = sbr.rel (%p383) target = $region52
      $region51: #{tpu_custom_call.1} parent=5 // pred_region
        // Predicated region
        $region53: #{tpu_custom_call.1} parent=51 // pred_check
          %p386 = pneg %p234
        $region54: #{tpu_custom_call.1} parent=51 // pred_check_branch
          %388 = sbr.rel (%p386) target = $region56
        $region55: #{tpu_custom_call.1} parent=51 // pred_region
          %s389 = sand.u32 %s25, 1
          %s390 = scalar_lea.sflag [#allocation3], %s389
          %s391 = sand.u32 %s224, 1
          %s392 = smul.addr %s391, 256
          %s393 = scalar_lea.vmem [#allocation17], %s392
          %395 = vsyncadd %s390, 0
          %s396 = smul.addr %s25, 32
          %s397 = smul.addr %s396, 8
          %s398 = scalar_lea.hbm %s9, %s397
          %s399 = sshll.u32 %s398, 4
          %s400 = int_to_ptr.hbm [resolvable:$true] %s399
          %s401 = sshll.u32 %s393, 4
          %s402 = int_to_ptr.vmem [resolvable:$true] %s401
          %407 = dma.hbm_to_vmem [thread:$0]  %s400, 4096, %s402, %s390, 128, 128, 8
        $region56: #{tpu_custom_call.1} parent=51 // pred_fallthru
          _
      $region52: #{tpu_custom_call.1} parent=5 // pred_fallthru
        _
      %p408 = scmp.le.s32.totalorder 1, %s25
      %p409 = scmp.lt.s32.totalorder %s25, 3
      %p410 = pnand %p408, %p409
      %p411 = pneg %p410
      // Predicated region
      $region57: #{tpu_custom_call.1} parent=5 // pred_check
        _
      $region58: #{tpu_custom_call.1} parent=5 // pred_check_branch
        %413 = sbr.rel (%p410) target = $region60
      $region59: #{tpu_custom_call.1} parent=5 // pred_region
        %s414 = ssub.s32 %s25, 1
        // Predicated region
        $region61: #{tpu_custom_call.1} parent=59 // pred_check
          %p415 = pneg %p46
        $region62: #{tpu_custom_call.1} parent=59 // pred_check_branch
          %417 = sbr.rel (%p415) target = $region64
        $region63: #{tpu_custom_call.1} parent=59 // pred_region
          %419 = dma.done [#allocation3], 1536
        $region64: #{tpu_custom_call.1} parent=59 // pred_fallthru
          _
        // Predicated region
        $region65: #{tpu_custom_call.1} parent=59 // pred_check
          %p420 = pneg %p67
        $region66: #{tpu_custom_call.1} parent=59 // pred_check_branch
          %422 = sbr.rel (%p420) target = $region68
        $region67: #{tpu_custom_call.1} parent=59 // pred_region
          %424 = dma.done [#allocation7], 1536
        $region68: #{tpu_custom_call.1} parent=59 // pred_fallthru
          _
        // Predicated region
        $region69: #{tpu_custom_call.1} parent=59 // pred_check
          %p425 = pneg %p88
        $region70: #{tpu_custom_call.1} parent=59 // pred_check_branch
          %427 = sbr.rel (%p425) target = $region72
        $region71: #{tpu_custom_call.1} parent=59 // pred_region
          %429 = dma.done [#allocation7], 576
        $region72: #{tpu_custom_call.1} parent=59 // pred_fallthru
          _
        // Predicated region
        $region73: #{tpu_custom_call.1} parent=59 // pred_check
          %p430 = pneg %p109
        $region74: #{tpu_custom_call.1} parent=59 // pred_check_branch
          %432 = sbr.rel (%p430) target = $region76
        $region75: #{tpu_custom_call.1} parent=59 // pred_region
          %434 = dma.done [#allocation10], 64
        $region76: #{tpu_custom_call.1} parent=59 // pred_fallthru
          _
        // Predicated region
        $region77: #{tpu_custom_call.1} parent=59 // pred_check
          %p435 = pneg %p130
        $region78: #{tpu_custom_call.1} parent=59 // pred_check_branch
          %437 = sbr.rel (%p435) target = $region80
        $region79: #{tpu_custom_call.1} parent=59 // pred_region
          %439 = dma.done [#allocation10], 64
        $region80: #{tpu_custom_call.1} parent=59 // pred_fallthru
          _
        // Predicated region
        $region81: #{tpu_custom_call.1} parent=59 // pred_check
          %p440 = pneg %p172
        $region82: #{tpu_custom_call.1} parent=59 // pred_check_branch
          %442 = sbr.rel (%p440) target = $region84
        $region83: #{tpu_custom_call.1} parent=59 // pred_region
          %444 = dma.done [#allocation13], 64
        $region84: #{tpu_custom_call.1} parent=59 // pred_fallthru
          _
        // Predicated region
        $region85: #{tpu_custom_call.1} parent=59 // pred_check
          %p445 = pneg %p193
        $region86: #{tpu_custom_call.1} parent=59 // pred_check_branch
          %447 = sbr.rel (%p445) target = $region88
        $region87: #{tpu_custom_call.1} parent=59 // pred_region
          %449 = dma.done [#allocation5], 16
        $region88: #{tpu_custom_call.1} parent=59 // pred_fallthru
          _
        // Predicated region
        $region89: #{tpu_custom_call.1} parent=59 // pred_check
          %p450 = pneg %p214
        $region90: #{tpu_custom_call.1} parent=59 // pred_check_branch
          %452 = sbr.rel (%p450) target = $region92
        $region91: #{tpu_custom_call.1} parent=59 // pred_region
          %454 = dma.done [#allocation16], 16
        $region92: #{tpu_custom_call.1} parent=59 // pred_fallthru
          _
        %s455 = sand.u32 %s30, 1
        %s456 = scalar_lea.sflag [#allocation3], %s455
        %s457 = sand.u32 %s227, 1
        %s458 = smul.addr %s457, 256
        %s459 = scalar_lea.vmem [#allocation17], %s458
        // Predicated region
        $region93: #{tpu_custom_call.1} parent=59 // pred_check
          %p460 = pneg %p240
        $region94: #{tpu_custom_call.1} parent=59 // pred_check_branch
          %462 = sbr.rel (%p460) target = $region96
        $region95: #{tpu_custom_call.1} parent=59 // pred_region
          %464 = dma.done %s456, 4096
        $region96: #{tpu_custom_call.1} parent=59 // pred_fallthru
          _
        %465 = sfence
        %p466 = pneg %p46
        %p467 = pneg %p43
        %p468 = pneg %p67
        %p469 = pneg %p64
        %p470 = pneg %p88
        %p471 = pneg %p85
        %p472 = pneg %p109
        %p473 = pneg %p106
        %p474 = pneg %p130
        %p475 = pneg %p127
        %p476 = pneg %p151
        %p477 = pneg %p148
        %p478 = pneg %p172
        %p479 = pneg %p169
        %p480 = pneg %p193
        %p481 = pneg %p190
        %p482 = pneg %p214
        %p483 = pneg %p211
        %s484 = sand.u32 %s30, 1
        %s485 = scalar_lea.sflag [#allocation3], %s484
        %s486 = sand.u32 %s227, 1
        %s487 = smul.addr %s486, 256
        %s488 = scalar_lea.vmem [#allocation17], %s487
        %p489 = pneg %p240
        %p490 = pneg %p237
        %p491 = pneg %p266
        %p492 = pneg %p263
        %s493 = sand.u32 %s253, 1
        %s494 = scalar_lea.sflag [#allocation4], %s493
        %s495 = sand.u32 %s253, 1
        %s496 = smul.addr %s495, 256
        %s497 = scalar_lea.vmem [#allocation18], %s496
        %v498 = vld [vmem:[%s459] sm:$0xff]
        %v499 = vld [vmem:[%s459 + $0x8] sm:$0xff]
        %v500 = vld [vmem:[%s459 + $0x10] sm:$0xff]
        %v501 = vld [vmem:[%s459 + $0x18] sm:$0xff]
        %v502 = vld [vmem:[%s459 + $0x20] sm:$0xff]
        %v503 = vld [vmem:[%s459 + $0x28] sm:$0xff]
        %v504 = vld [vmem:[%s459 + $0x30] sm:$0xff]
        %v505 = vld [vmem:[%s459 + $0x38] sm:$0xff]
        %v506 = vld [vmem:[%s459 + $0x40] sm:$0xff]
        %v507 = vld [vmem:[%s459 + $0x48] sm:$0xff]
        %v508 = vld [vmem:[%s459 + $0x50] sm:$0xff]
        %v509 = vld [vmem:[%s459 + $0x58] sm:$0xff]
        %v510 = vld [vmem:[%s459 + $0x60] sm:$0xff]
        %v511 = vld [vmem:[%s459 + $0x68] sm:$0xff]
        %v512 = vld [vmem:[%s459 + $0x70] sm:$0xff]
        %v513 = vld [vmem:[%s459 + $0x78] sm:$0xff]
        %v514 = vld [vmem:[%s459 + $0x80] sm:$0xff]
        %v515 = vld [vmem:[%s459 + $0x88] sm:$0xff]
        %v516 = vld [vmem:[%s459 + $0x90] sm:$0xff]
        %v517 = vld [vmem:[%s459 + $0x98] sm:$0xff]
        %v518 = vld [vmem:[%s459 + $0xa0] sm:$0xff]
        %v519 = vld [vmem:[%s459 + $0xa8] sm:$0xff]
        %v520 = vld [vmem:[%s459 + $0xb0] sm:$0xff]
        %v521 = vld [vmem:[%s459 + $0xb8] sm:$0xff]
        %v522 = vld [vmem:[%s459 + $0xc0] sm:$0xff]
        %v523 = vld [vmem:[%s459 + $0xc8] sm:$0xff]
        %v524 = vld [vmem:[%s459 + $0xd0] sm:$0xff]
        %v525 = vld [vmem:[%s459 + $0xd8] sm:$0xff]
        %v526 = vld [vmem:[%s459 + $0xe0] sm:$0xff]
        %v527 = vld [vmem:[%s459 + $0xe8] sm:$0xff]
        %v528 = vld [vmem:[%s459 + $0xf0] sm:$0xff]
        %v529 = vld [vmem:[%s459 + $0xf8] sm:$0xff]
        %v530 = vld [vmem:[#allocation2] sm:$0xff]
        %v531 = vld [vmem:[#allocation2 + $0x8] sm:$0xff]
        %v532 = vld [vmem:[#allocation2 + $0x10] sm:$0xff]
        %v533 = vld [vmem:[#allocation2 + $0x18] sm:$0xff]
        %vm534 = vcmask 261120
        %v536 = vsel %vm534, %v498, 0
        %v539 = vsel %vm534, %v499, 0
        %v542 = vsel %vm534, %v500, 0
        %v545 = vsel %vm534, %v501, 0
        %v548 = vsel %vm534, %v502, 0
        %v551 = vsel %vm534, %v503, 0
        %v554 = vsel %vm534, %v504, 0
        %v557 = vsel %vm534, %v505, 0
        %v560 = vsel %vm534, %v506, 0
        %v563 = vsel %vm534, %v507, 0
        %v566 = vsel %vm534, %v508, 0
        %v569 = vsel %vm534, %v509, 0
        %v572 = vsel %vm534, %v510, 0
        %v575 = vsel %vm534, %v511, 0
        %v578 = vsel %vm534, %v512, 0
        %v581 = vsel %vm534, %v513, 0
        %v584 = vsel %vm534, %v514, 0
        %v587 = vsel %vm534, %v515, 0
        %v590 = vsel %vm534, %v516, 0
        %v593 = vsel %vm534, %v517, 0
        %v596 = vsel %vm534, %v518, 0
        %v599 = vsel %vm534, %v519, 0
        %v602 = vsel %vm534, %v520, 0
        %v605 = vsel %vm534, %v521, 0
        %v608 = vsel %vm534, %v522, 0
        %v611 = vsel %vm534, %v523, 0
        %v614 = vsel %vm534, %v524, 0
        %v617 = vsel %vm534, %v525, 0
        %v620 = vsel %vm534, %v526, 0
        %v623 = vsel %vm534, %v527, 0
        %v626 = vsel %vm534, %v528, 0
        %v629 = vsel %vm534, %v529, 0
        %631 = vmatpush.msra.mxu0 0.0
        %632 = vmatpush.msra.mxu0 0.0
        %633 = vmatpush.msra.mxu0 0.0
        %634 = vmatpush.msra.mxu0 0.0
        %635 = vmatpush.msra.mxu0 0.0
        %636 = vmatpush.msra.mxu0 0.0
        %637 = vmatpush.msra.mxu0 0.0
        %638 = vmatpush.msra.mxu0 0.0
        %639 = vmatpush.msra.mxu0 0.0
        %640 = vmatpush.msra.mxu0 0.0
        %641 = vmatpush.msra.mxu0 0.0
        %642 = vmatpush.msra.mxu0 0.0
        %643 = vmatpush.msra.mxu0 %v533
        %644 = vmatpush.msra.mxu0 %v532
        %645 = vmatpush.msra.mxu0 %v531
        %646 = vmatpush.msra.mxu0 %v530
        %647 = vmatmul.f32.gmra.mxu0 %v536
        %v648 = vpop.f32.mrf.mxu0
        %v649 = vadd.f32 0.0, %v648
        %650 = vmatmul.f32.gmra.mxu0 %v539
        %v651 = vpop.f32.mrf.mxu0
        %v652 = vadd.f32 0.0, %v651
        %653 = vmatmul.f32.gmra.mxu0 %v542
        %v654 = vpop.f32.mrf.mxu0
        %v655 = vadd.f32 0.0, %v654
        %656 = vmatmul.f32.gmra.mxu0 %v545
        %v657 = vpop.f32.mrf.mxu0
        %v658 = vadd.f32 0.0, %v657
        %659 = vmatmul.f32.gmra.mxu0 %v548
        %v660 = vpop.f32.mrf.mxu0
        %v661 = vadd.f32 0.0, %v660
        %662 = vmatmul.f32.gmra.mxu0 %v551
        %v663 = vpop.f32.mrf.mxu0
        %v664 = vadd.f32 0.0, %v663
        %665 = vmatmul.f32.gmra.mxu0 %v554
        %v666 = vpop.f32.mrf.mxu0
        %v667 = vadd.f32 0.0, %v666
        %668 = vmatmul.f32.gmra.mxu0 %v557
        %v669 = vpop.f32.mrf.mxu0
        %v670 = vadd.f32 0.0, %v669
        %671 = vmatmul.f32.gmra.mxu0 %v560
        %v672 = vpop.f32.mrf.mxu0
        %v673 = vadd.f32 0.0, %v672
        %674 = vmatmul.f32.gmra.mxu0 %v563
        %v675 = vpop.f32.mrf.mxu0
        %v676 = vadd.f32 0.0, %v675
        %677 = vmatmul.f32.gmra.mxu0 %v566
        %v678 = vpop.f32.mrf.mxu0
        %v679 = vadd.f32 0.0, %v678
        %680 = vmatmul.f32.gmra.mxu0 %v569
        %v681 = vpop.f32.mrf.mxu0
        %v682 = vadd.f32 0.0, %v681
        %683 = vmatmul.f32.gmra.mxu0 %v572
        %v684 = vpop.f32.mrf.mxu0
        %v685 = vadd.f32 0.0, %v684
        %686 = vmatmul.f32.gmra.mxu0 %v575
        %v687 = vpop.f32.mrf.mxu0
        %v688 = vadd.f32 0.0, %v687
        %689 = vmatmul.f32.gmra.mxu0 %v578
        %v690 = vpop.f32.mrf.mxu0
        %v691 = vadd.f32 0.0, %v690
        %692 = vmatmul.f32.gmra.mxu0 %v581
        %v693 = vpop.f32.mrf.mxu0
        %v694 = vadd.f32 0.0, %v693
        %695 = vmatmul.f32.gmra.mxu0 %v584
        %v696 = vpop.f32.mrf.mxu0
        %v697 = vadd.f32 0.0, %v696
        %698 = vmatmul.f32.gmra.mxu0 %v587
        %v699 = vpop.f32.mrf.mxu0
        %v700 = vadd.f32 0.0, %v699
        %701 = vmatmul.f32.gmra.mxu0 %v590
        %v702 = vpop.f32.mrf.mxu0
        %v703 = vadd.f32 0.0, %v702
        %704 = vmatmul.f32.gmra.mxu0 %v593
        %v705 = vpop.f32.mrf.mxu0
        %v706 = vadd.f32 0.0, %v705
        %707 = vmatmul.f32.gmra.mxu0 %v596
        %v708 = vpop.f32.mrf.mxu0
        %v709 = vadd.f32 0.0, %v708
        %710 = vmatmul.f32.gmra.mxu0 %v599
        %v711 = vpop.f32.mrf.mxu0
        %v712 = vadd.f32 0.0, %v711
        %713 = vmatmul.f32.gmra.mxu0 %v602
        %v714 = vpop.f32.mrf.mxu0
        %v715 = vadd.f32 0.0, %v714
        %716 = vmatmul.f32.gmra.mxu0 %v605
        %v717 = vpop.f32.mrf.mxu0
        %v718 = vadd.f32 0.0, %v717
        %719 = vmatmul.f32.gmra.mxu0 %v608
        %v720 = vpop.f32.mrf.mxu0
        %v721 = vadd.f32 0.0, %v720
        %722 = vmatmul.f32.gmra.mxu0 %v611
        %v723 = vpop.f32.mrf.mxu0
        %v724 = vadd.f32 0.0, %v723
        %725 = vmatmul.f32.gmra.mxu0 %v614
        %v726 = vpop.f32.mrf.mxu0
        %v727 = vadd.f32 0.0, %v726
        %728 = vmatmul.f32.gmra.mxu0 %v617
        %v729 = vpop.f32.mrf.mxu0
        %v730 = vadd.f32 0.0, %v729
        %731 = vmatmul.f32.gmra.mxu0 %v620
        %v732 = vpop.f32.mrf.mxu0
        %v733 = vadd.f32 0.0, %v732
        %734 = vmatmul.f32.gmra.mxu0 %v623
        %v735 = vpop.f32.mrf.mxu0
        %v736 = vadd.f32 0.0, %v735
        %737 = vmatmul.f32.gmra.mxu0 %v626
        %v738 = vpop.f32.mrf.mxu0
        %v739 = vadd.f32 0.0, %v738
        %740 = vmatmul.f32.gmra.mxu0 %v629
        %v741 = vpop.f32.mrf.mxu0
        %v742 = vadd.f32 0.0, %v741
        %743 = vdwg.mxu0
        %v744 = vld [vmem:[#allocation9] sm:$0x1]
        %v745 = vperm.slane %v744, 0
        %v746 = vmul.f32 %v649, %v745
        %v747 = vmul.f32 %v652, %v745
        %v748 = vmul.f32 %v655, %v745
        %v749 = vmul.f32 %v658, %v745
        %v750 = vmul.f32 %v661, %v745
        %v751 = vmul.f32 %v664, %v745
        %v752 = vmul.f32 %v667, %v745
        %v753 = vmul.f32 %v670, %v745
        %v754 = vmul.f32 %v673, %v745
        %v755 = vmul.f32 %v676, %v745
        %v756 = vmul.f32 %v679, %v745
        %v757 = vmul.f32 %v682, %v745
        %v758 = vmul.f32 %v685, %v745
        %v759 = vmul.f32 %v688, %v745
        %v760 = vmul.f32 %v691, %v745
        %v761 = vmul.f32 %v694, %v745
        %v762 = vmul.f32 %v697, %v745
        %v763 = vmul.f32 %v700, %v745
        %v764 = vmul.f32 %v703, %v745
        %v765 = vmul.f32 %v706, %v745
        %v766 = vmul.f32 %v709, %v745
        %v767 = vmul.f32 %v712, %v745
        %v768 = vmul.f32 %v715, %v745
        %v769 = vmul.f32 %v718, %v745
        %v770 = vmul.f32 %v721, %v745
        %v771 = vmul.f32 %v724, %v745
        %v772 = vmul.f32 %v727, %v745
        %v773 = vmul.f32 %v730, %v745
        %v774 = vmul.f32 %v733, %v745
        %v775 = vmul.f32 %v736, %v745
        %v776 = vmul.f32 %v739, %v745
        %v777 = vmul.f32 %v742, %v745
        %v778 = vld [vmem:[#allocation11] sm:$0x1]
        %v779 = vperm.slane %v778, 0
        %v780 = vadd.f32 %v746, %v779
        %v781 = vadd.f32 %v747, %v779
        %v782 = vadd.f32 %v748, %v779
        %v783 = vadd.f32 %v749, %v779
        %v784 = vadd.f32 %v750, %v779
        %v785 = vadd.f32 %v751, %v779
        %v786 = vadd.f32 %v752, %v779
        %v787 = vadd.f32 %v753, %v779
        %v788 = vadd.f32 %v754, %v779
        %v789 = vadd.f32 %v755, %v779
        %v790 = vadd.f32 %v756, %v779
        %v791 = vadd.f32 %v757, %v779
        %v792 = vadd.f32 %v758, %v779
        %v793 = vadd.f32 %v759, %v779
        %v794 = vadd.f32 %v760, %v779
        %v795 = vadd.f32 %v761, %v779
        %v796 = vadd.f32 %v762, %v779
        %v797 = vadd.f32 %v763, %v779
        %v798 = vadd.f32 %v764, %v779
        %v799 = vadd.f32 %v765, %v779
        %v800 = vadd.f32 %v766, %v779
        %v801 = vadd.f32 %v767, %v779
        %v802 = vadd.f32 %v768, %v779
        %v803 = vadd.f32 %v769, %v779
        %v804 = vadd.f32 %v770, %v779
        %v805 = vadd.f32 %v771, %v779
        %v806 = vadd.f32 %v772, %v779
        %v807 = vadd.f32 %v773, %v779
        %v808 = vadd.f32 %v774, %v779
        %v809 = vadd.f32 %v775, %v779
        %v810 = vadd.f32 %v776, %v779
        %v811 = vadd.f32 %v777, %v779
        %s812 = sld [smem:[#allocation14]]
        %vm813 = vcmp.ge.f32.partialorder %v780, 0.0
        %vm814 = vcmp.ge.f32.partialorder %v781, 0.0
        %vm815 = vcmp.ge.f32.partialorder %v782, 0.0
        %vm816 = vcmp.ge.f32.partialorder %v783, 0.0
        %vm817 = vcmp.ge.f32.partialorder %v784, 0.0
        %vm818 = vcmp.ge.f32.partialorder %v785, 0.0
        %vm819 = vcmp.ge.f32.partialorder %v786, 0.0
        %vm820 = vcmp.ge.f32.partialorder %v787, 0.0
        %vm821 = vcmp.ge.f32.partialorder %v788, 0.0
        %vm822 = vcmp.ge.f32.partialorder %v789, 0.0
        %vm823 = vcmp.ge.f32.partialorder %v790, 0.0
        %vm824 = vcmp.ge.f32.partialorder %v791, 0.0
        %vm825 = vcmp.ge.f32.partialorder %v792, 0.0
        %vm826 = vcmp.ge.f32.partialorder %v793, 0.0
        %vm827 = vcmp.ge.f32.partialorder %v794, 0.0
        %vm828 = vcmp.ge.f32.partialorder %v795, 0.0
        %vm829 = vcmp.ge.f32.partialorder %v796, 0.0
        %vm830 = vcmp.ge.f32.partialorder %v797, 0.0
        %vm831 = vcmp.ge.f32.partialorder %v798, 0.0
        %vm832 = vcmp.ge.f32.partialorder %v799, 0.0
        %vm833 = vcmp.ge.f32.partialorder %v800, 0.0
        %vm834 = vcmp.ge.f32.partialorder %v801, 0.0
        %vm835 = vcmp.ge.f32.partialorder %v802, 0.0
        %vm836 = vcmp.ge.f32.partialorder %v803, 0.0
        %vm837 = vcmp.ge.f32.partialorder %v804, 0.0
        %vm838 = vcmp.ge.f32.partialorder %v805, 0.0
        %vm839 = vcmp.ge.f32.partialorder %v806, 0.0
        %vm840 = vcmp.ge.f32.partialorder %v807, 0.0
        %vm841 = vcmp.ge.f32.partialorder %v808, 0.0
        %vm842 = vcmp.ge.f32.partialorder %v809, 0.0
        %vm843 = vcmp.ge.f32.partialorder %v810, 0.0
        %vm844 = vcmp.ge.f32.partialorder %v811, 0.0
        %v845 = vstv %s812
        %v846 = vmul.f32 %v845, %v780
        %v847 = vmul.f32 %v845, %v781
        %v848 = vmul.f32 %v845, %v782
        %v849 = vmul.f32 %v845, %v783
        %v850 = vmul.f32 %v845, %v784
        %v851 = vmul.f32 %v845, %v785
        %v852 = vmul.f32 %v845, %v786
        %v853 = vmul.f32 %v845, %v787
        %v854 = vmul.f32 %v845, %v788
        %v855 = vmul.f32 %v845, %v789
        %v856 = vmul.f32 %v845, %v790
        %v857 = vmul.f32 %v845, %v791
        %v858 = vmul.f32 %v845, %v792
        %v859 = vmul.f32 %v845, %v793
        %v860 = vmul.f32 %v845, %v794
        %v861 = vmul.f32 %v845, %v795
        %v862 = vmul.f32 %v845, %v796
        %v863 = vmul.f32 %v845, %v797
        %v864 = vmul.f32 %v845, %v798
        %v865 = vmul.f32 %v845, %v799
        %v866 = vmul.f32 %v845, %v800
        %v867 = vmul.f32 %v845, %v801
        %v868 = vmul.f32 %v845, %v802
        %v869 = vmul.f32 %v845, %v803
        %v870 = vmul.f32 %v845, %v804
        %v871 = vmul.f32 %v845, %v805
        %v872 = vmul.f32 %v845, %v806
        %v873 = vmul.f32 %v845, %v807
        %v874 = vmul.f32 %v845, %v808
        %v875 = vmul.f32 %v845, %v809
        %v876 = vmul.f32 %v845, %v810
        %v877 = vmul.f32 %v845, %v811
        %v878 = vsel %vm813, %v780, %v846
        %v879 = vsel %vm814, %v781, %v847
        %v880 = vsel %vm815, %v782, %v848
        %v881 = vsel %vm816, %v783, %v849
        %v882 = vsel %vm817, %v784, %v850
        %v883 = vsel %vm818, %v785, %v851
        %v884 = vsel %vm819, %v786, %v852
        %v885 = vsel %vm820, %v787, %v853
        %v886 = vsel %vm821, %v788, %v854
        %v887 = vsel %vm822, %v789, %v855
        %v888 = vsel %vm823, %v790, %v856
        %v889 = vsel %vm824, %v791, %v857
        %v890 = vsel %vm825, %v792, %v858
        %v891 = vsel %vm826, %v793, %v859
        %v892 = vsel %vm827, %v794, %v860
        %v893 = vsel %vm828, %v795, %v861
        %v894 = vsel %vm829, %v796, %v862
        %v895 = vsel %vm830, %v797, %v863
        %v896 = vsel %vm831, %v798, %v864
        %v897 = vsel %vm832, %v799, %v865
        %v898 = vsel %vm833, %v800, %v866
        %v899 = vsel %vm834, %v801, %v867
        %v900 = vsel %vm835, %v802, %v868
        %v901 = vsel %vm836, %v803, %v869
        %v902 = vsel %vm837, %v804, %v870
        %v903 = vsel %vm838, %v805, %v871
        %v904 = vsel %vm839, %v806, %v872
        %v905 = vsel %vm840, %v807, %v873
        %v906 = vsel %vm841, %v808, %v874
        %v907 = vsel %vm842, %v809, %v875
        %v908 = vsel %vm843, %v810, %v876
        %v909 = vsel %vm844, %v811, %v877
        %v910 = vld [vmem:[#allocation8] sm:$0x1]
        %vm940 = vcmask 1040384
        %v941 = vrot.slane 0.0, 7
        %v942 = vsel %vm940, %v941, %v941
        %v943 = vrot.slane %v878, 7
        %v944 = vrot.slane %v879, 7
        %v945 = vsel %vm940, %v943, %v944
        %v946 = vrot.slane %v880, 7
        %v947 = vrot.slane %v881, 7
        %v948 = vsel %vm940, %v946, %v947
        %v949 = vrot.slane %v882, 7
        %v950 = vrot.slane %v883, 7
        %v951 = vsel %vm940, %v949, %v950
        %v952 = vrot.slane %v884, 7
        %v953 = vrot.slane %v885, 7
        %v954 = vsel %vm940, %v952, %v953
        %v955 = vrot.slane %v886, 7
        %v956 = vrot.slane %v887, 7
        %v957 = vsel %vm940, %v955, %v956
        %v958 = vrot.slane %v888, 7
        %v959 = vrot.slane %v889, 7
        %v960 = vsel %vm940, %v958, %v959
        %v961 = vrot.slane %v890, 7
        %v962 = vrot.slane %v891, 7
        %v963 = vsel %vm940, %v961, %v962
        %v964 = vrot.slane %v892, 7
        %v965 = vrot.slane %v893, 7
        %v966 = vsel %vm940, %v964, %v965
        %v967 = vrot.slane %v894, 7
        %v968 = vrot.slane %v895, 7
        %v969 = vsel %vm940, %v967, %v968
        %v970 = vrot.slane %v896, 7
        %v971 = vrot.slane %v897, 7
        %v972 = vsel %vm940, %v970, %v971
        %v973 = vrot.slane %v898, 7
        %v974 = vrot.slane %v899, 7
        %v975 = vsel %vm940, %v973, %v974
        %v976 = vrot.slane %v900, 7
        %v977 = vrot.slane %v901, 7
        %v978 = vsel %vm940, %v976, %v977
        %v979 = vrot.slane %v902, 7
        %v980 = vrot.slane %v903, 7
        %v981 = vsel %vm940, %v979, %v980
        %v982 = vrot.slane %v904, 7
        %v983 = vrot.slane %v905, 7
        %v984 = vsel %vm940, %v982, %v983
        %v1015 = vsel %vm940, 0.0, %v941
        %v1016 = vsel %vm940, 0.0, %v943
        %v1017 = vsel %vm940, 0.0, %v946
        %v1018 = vsel %vm940, 0.0, %v949
        %v1019 = vsel %vm940, 0.0, %v952
        %v1020 = vsel %vm940, 0.0, %v955
        %v1021 = vsel %vm940, 0.0, %v958
        %v1022 = vsel %vm940, 0.0, %v961
        %v1023 = vsel %vm940, 0.0, %v964
        %v1024 = vsel %vm940, 0.0, %v967
        %v1025 = vsel %vm940, 0.0, %v970
        %v1026 = vsel %vm940, 0.0, %v973
        %v1027 = vsel %vm940, 0.0, %v976
        %v1028 = vsel %vm940, 0.0, %v979
        %v1029 = vsel %vm940, 0.0, %v982
        %v1030 = vperm.slane %v910, 0
        %v1031 = vmul.f32 %v1030, %v1015
        %v1032 = vmul.f32 %v1030, %v942
        %v1033 = vmul.f32 %v1030, %v1016
        %v1034 = vmul.f32 %v1030, %v945
        %v1035 = vmul.f32 %v1030, %v1017
        %v1036 = vmul.f32 %v1030, %v948
        %v1037 = vmul.f32 %v1030, %v1018
        %v1038 = vmul.f32 %v1030, %v951
        %v1039 = vmul.f32 %v1030, %v1019
        %v1040 = vmul.f32 %v1030, %v954
        %v1041 = vmul.f32 %v1030, %v1020
        %v1042 = vmul.f32 %v1030, %v957
        %v1043 = vmul.f32 %v1030, %v1021
        %v1044 = vmul.f32 %v1030, %v960
        %v1045 = vmul.f32 %v1030, %v1022
        %v1046 = vmul.f32 %v1030, %v963
        %v1047 = vmul.f32 %v1030, %v1023
        %v1048 = vmul.f32 %v1030, %v966
        %v1049 = vmul.f32 %v1030, %v1024
        %v1050 = vmul.f32 %v1030, %v969
        %v1051 = vmul.f32 %v1030, %v1025
        %v1052 = vmul.f32 %v1030, %v972
        %v1053 = vmul.f32 %v1030, %v1026
        %v1054 = vmul.f32 %v1030, %v975
        %v1055 = vmul.f32 %v1030, %v1027
        %v1056 = vmul.f32 %v1030, %v978
        %v1057 = vmul.f32 %v1030, %v1028
        %v1058 = vmul.f32 %v1030, %v981
        %v1059 = vmul.f32 %v1030, %v1029
        %v1060 = vmul.f32 %v1030, %v984
        %v1061 = vadd.f32 %v1031, 0.0
        %v1062 = vadd.f32 %v1032, 0.0
        %v1063 = vadd.f32 %v1033, 0.0
        %v1064 = vadd.f32 %v1034, 0.0
        %v1065 = vadd.f32 %v1035, 0.0
        %v1066 = vadd.f32 %v1036, 0.0
        %v1067 = vadd.f32 %v1037, 0.0
        %v1068 = vadd.f32 %v1038, 0.0
        %v1069 = vadd.f32 %v1039, 0.0
        %v1070 = vadd.f32 %v1040, 0.0
        %v1071 = vadd.f32 %v1041, 0.0
        %v1072 = vadd.f32 %v1042, 0.0
        %v1073 = vadd.f32 %v1043, 0.0
        %v1074 = vadd.f32 %v1044, 0.0
        %v1075 = vadd.f32 %v1045, 0.0
        %v1076 = vadd.f32 %v1046, 0.0
        %v1077 = vadd.f32 %v1047, 0.0
        %v1078 = vadd.f32 %v1048, 0.0
        %v1079 = vadd.f32 %v1049, 0.0
        %v1080 = vadd.f32 %v1050, 0.0
        %v1081 = vadd.f32 %v1051, 0.0
        %v1082 = vadd.f32 %v1052, 0.0
        %v1083 = vadd.f32 %v1053, 0.0
        %v1084 = vadd.f32 %v1054, 0.0
        %v1085 = vadd.f32 %v1055, 0.0
        %v1086 = vadd.f32 %v1056, 0.0
        %v1087 = vadd.f32 %v1057, 0.0
        %v1088 = vadd.f32 %v1058, 0.0
        %v1089 = vadd.f32 %v1059, 0.0
        %v1090 = vadd.f32 %v1060, 0.0
        %v1091 = vld [vmem:[#allocation8 + $0x1] sm:$0x1]
        %v1092 = vperm.slane %v1091, 0
        %v1093 = vmul.f32 %v1092, 0.0
        %v1094 = vmul.f32 %v1092, %v878
        %v1095 = vmul.f32 %v1092, %v879
        %v1096 = vmul.f32 %v1092, %v880
        %v1097 = vmul.f32 %v1092, %v881
        %v1098 = vmul.f32 %v1092, %v882
        %v1099 = vmul.f32 %v1092, %v883
        %v1100 = vmul.f32 %v1092, %v884
        %v1101 = vmul.f32 %v1092, %v885
        %v1102 = vmul.f32 %v1092, %v886
        %v1103 = vmul.f32 %v1092, %v887
        %v1104 = vmul.f32 %v1092, %v888
        %v1105 = vmul.f32 %v1092, %v889
        %v1106 = vmul.f32 %v1092, %v890
        %v1107 = vmul.f32 %v1092, %v891
        %v1108 = vmul.f32 %v1092, %v892
        %v1109 = vmul.f32 %v1092, %v893
        %v1110 = vmul.f32 %v1092, %v894
        %v1111 = vmul.f32 %v1092, %v895
        %v1112 = vmul.f32 %v1092, %v896
        %v1113 = vmul.f32 %v1092, %v897
        %v1114 = vmul.f32 %v1092, %v898
        %v1115 = vmul.f32 %v1092, %v899
        %v1116 = vmul.f32 %v1092, %v900
        %v1117 = vmul.f32 %v1092, %v901
        %v1118 = vmul.f32 %v1092, %v902
        %v1119 = vmul.f32 %v1092, %v903
        %v1120 = vmul.f32 %v1092, %v904
        %v1121 = vmul.f32 %v1092, %v905
        %v1122 = vadd.f32 %v1061, %v1093
        %v1123 = vadd.f32 %v1062, %v1093
        %v1124 = vadd.f32 %v1063, %v1094
        %v1125 = vadd.f32 %v1064, %v1095
        %v1126 = vadd.f32 %v1065, %v1096
        %v1127 = vadd.f32 %v1066, %v1097
        %v1128 = vadd.f32 %v1067, %v1098
        %v1129 = vadd.f32 %v1068, %v1099
        %v1130 = vadd.f32 %v1069, %v1100
        %v1131 = vadd.f32 %v1070, %v1101
        %v1132 = vadd.f32 %v1071, %v1102
        %v1133 = vadd.f32 %v1072, %v1103
        %v1134 = vadd.f32 %v1073, %v1104
        %v1135 = vadd.f32 %v1074, %v1105
        %v1136 = vadd.f32 %v1075, %v1106
        %v1137 = vadd.f32 %v1076, %v1107
        %v1138 = vadd.f32 %v1077, %v1108
        %v1139 = vadd.f32 %v1078, %v1109
        %v1140 = vadd.f32 %v1079, %v1110
        %v1141 = vadd.f32 %v1080, %v1111
        %v1142 = vadd.f32 %v1081, %v1112
        %v1143 = vadd.f32 %v1082, %v1113
        %v1144 = vadd.f32 %v1083, %v1114
        %v1145 = vadd.f32 %v1084, %v1115
        %v1146 = vadd.f32 %v1085, %v1116
        %v1147 = vadd.f32 %v1086, %v1117
        %v1148 = vadd.f32 %v1087, %v1118
        %v1149 = vadd.f32 %v1088, %v1119
        %v1150 = vadd.f32 %v1089, %v1120
        %v1151 = vadd.f32 %v1090, %v1121
        %v1152 = vld [vmem:[#allocation8 + $0x2] sm:$0x1]
        %vm1153 = vcmask 1046528
        %v1154 = vrot.slane 0.0, 1
        %v1155 = vsel %vm1153, %v1154, %v1154
        %v1156 = vrot.slane %v878, 1
        %v1157 = vrot.slane %v879, 1
        %v1158 = vsel %vm1153, %v1156, %v1157
        %v1159 = vrot.slane %v880, 1
        %v1160 = vrot.slane %v881, 1
        %v1161 = vsel %vm1153, %v1159, %v1160
        %v1162 = vrot.slane %v882, 1
        %v1163 = vrot.slane %v883, 1
        %v1164 = vsel %vm1153, %v1162, %v1163
        %v1165 = vrot.slane %v884, 1
        %v1166 = vrot.slane %v885, 1
        %v1167 = vsel %vm1153, %v1165, %v1166
        %v1168 = vrot.slane %v886, 1
        %v1169 = vrot.slane %v887, 1
        %v1170 = vsel %vm1153, %v1168, %v1169
        %v1171 = vrot.slane %v888, 1
        %v1172 = vrot.slane %v889, 1
        %v1173 = vsel %vm1153, %v1171, %v1172
        %v1174 = vrot.slane %v890, 1
        %v1175 = vrot.slane %v891, 1
        %v1176 = vsel %vm1153, %v1174, %v1175
        %v1177 = vrot.slane %v892, 1
        %v1178 = vrot.slane %v893, 1
        %v1179 = vsel %vm1153, %v1177, %v1178
        %v1180 = vrot.slane %v894, 1
        %v1181 = vrot.slane %v895, 1
        %v1182 = vsel %vm1153, %v1180, %v1181
        %v1183 = vrot.slane %v896, 1
        %v1184 = vrot.slane %v897, 1
        %v1185 = vsel %vm1153, %v1183, %v1184
        %v1186 = vrot.slane %v898, 1
        %v1187 = vrot.slane %v899, 1
        %v1188 = vsel %vm1153, %v1186, %v1187
        %v1189 = vrot.slane %v900, 1
        %v1190 = vrot.slane %v901, 1
        %v1191 = vsel %vm1153, %v1189, %v1190
        %v1192 = vrot.slane %v902, 1
        %v1193 = vrot.slane %v903, 1
        %v1194 = vsel %vm1153, %v1192, %v1193
        %v1195 = vrot.slane %v904, 1
        %v1196 = vrot.slane %v905, 1
        %v1197 = vsel %vm1153, %v1195, %v1196
        %v1228 = vsel %vm1153, %v1154, 0.0
        %v1229 = vsel %vm1153, %v1157, 0.0
        %v1230 = vsel %vm1153, %v1160, 0.0
        %v1231 = vsel %vm1153, %v1163, 0.0
        %v1232 = vsel %vm1153, %v1166, 0.0
        %v1233 = vsel %vm1153, %v1169, 0.0
        %v1234 = vsel %vm1153, %v1172, 0.0
        %v1235 = vsel %vm1153, %v1175, 0.0
        %v1236 = vsel %vm1153, %v1178, 0.0
        %v1237 = vsel %vm1153, %v1181, 0.0
        %v1238 = vsel %vm1153, %v1184, 0.0
        %v1239 = vsel %vm1153, %v1187, 0.0
        %v1240 = vsel %vm1153, %v1190, 0.0
        %v1241 = vsel %vm1153, %v1193, 0.0
        %v1242 = vsel %vm1153, %v1196, 0.0
        %v1243 = vperm.slane %v1152, 0
        %v1244 = vmul.f32 %v1243, %v1155
        %v1245 = vmul.f32 %v1243, %v1228
        %v1246 = vmul.f32 %v1243, %v1158
        %v1247 = vmul.f32 %v1243, %v1229
        %v1248 = vmul.f32 %v1243, %v1161
        %v1249 = vmul.f32 %v1243, %v1230
        %v1250 = vmul.f32 %v1243, %v1164
        %v1251 = vmul.f32 %v1243, %v1231
        %v1252 = vmul.f32 %v1243, %v1167
        %v1253 = vmul.f32 %v1243, %v1232
        %v1254 = vmul.f32 %v1243, %v1170
        %v1255 = vmul.f32 %v1243, %v1233
        %v1256 = vmul.f32 %v1243, %v1173
        %v1257 = vmul.f32 %v1243, %v1234
        %v1258 = vmul.f32 %v1243, %v1176
        %v1259 = vmul.f32 %v1243, %v1235
        %v1260 = vmul.f32 %v1243, %v1179
        %v1261 = vmul.f32 %v1243, %v1236
        %v1262 = vmul.f32 %v1243, %v1182
        %v1263 = vmul.f32 %v1243, %v1237
        %v1264 = vmul.f32 %v1243, %v1185
        %v1265 = vmul.f32 %v1243, %v1238
        %v1266 = vmul.f32 %v1243, %v1188
        %v1267 = vmul.f32 %v1243, %v1239
        %v1268 = vmul.f32 %v1243, %v1191
        %v1269 = vmul.f32 %v1243, %v1240
        %v1270 = vmul.f32 %v1243, %v1194
        %v1271 = vmul.f32 %v1243, %v1241
        %v1272 = vmul.f32 %v1243, %v1197
        %v1273 = vmul.f32 %v1243, %v1242
        %v1274 = vadd.f32 %v1122, %v1244
        %v1275 = vadd.f32 %v1123, %v1245
        %v1276 = vadd.f32 %v1124, %v1246
        %v1277 = vadd.f32 %v1125, %v1247
        %v1278 = vadd.f32 %v1126, %v1248
        %v1279 = vadd.f32 %v1127, %v1249
        %v1280 = vadd.f32 %v1128, %v1250
        %v1281 = vadd.f32 %v1129, %v1251
        %v1282 = vadd.f32 %v1130, %v1252
        %v1283 = vadd.f32 %v1131, %v1253
        %v1284 = vadd.f32 %v1132, %v1254
        %v1285 = vadd.f32 %v1133, %v1255
        %v1286 = vadd.f32 %v1134, %v1256
        %v1287 = vadd.f32 %v1135, %v1257
        %v1288 = vadd.f32 %v1136, %v1258
        %v1289 = vadd.f32 %v1137, %v1259
        %v1290 = vadd.f32 %v1138, %v1260
        %v1291 = vadd.f32 %v1139, %v1261
        %v1292 = vadd.f32 %v1140, %v1262
        %v1293 = vadd.f32 %v1141, %v1263
        %v1294 = vadd.f32 %v1142, %v1264
        %v1295 = vadd.f32 %v1143, %v1265
        %v1296 = vadd.f32 %v1144, %v1266
        %v1297 = vadd.f32 %v1145, %v1267
        %v1298 = vadd.f32 %v1146, %v1268
        %v1299 = vadd.f32 %v1147, %v1269
        %v1300 = vadd.f32 %v1148, %v1270
        %v1301 = vadd.f32 %v1149, %v1271
        %v1302 = vadd.f32 %v1150, %v1272
        %v1303 = vadd.f32 %v1151, %v1273
        %s1304 = scalar_lea.vmem [#allocation8], 4
        %v1305 = vld [vmem:[%s1304] sm:$0x1]
        %v1308 = vrot.slane %v906, 7
        %v1309 = vrot.slane %v907, 7
        %v1310 = vsel %vm940, %v1308, %v1309
        %v1313 = vsel %vm940, 0.0, %v1308
        %v1314 = vperm.slane %v1305, 0
        %v1315 = vmul.f32 %v1314, %v1015
        %v1316 = vmul.f32 %v1314, %v942
        %v1317 = vmul.f32 %v1314, %v1016
        %v1318 = vmul.f32 %v1314, %v945
        %v1319 = vmul.f32 %v1314, %v1017
        %v1320 = vmul.f32 %v1314, %v948
        %v1321 = vmul.f32 %v1314, %v1018
        %v1322 = vmul.f32 %v1314, %v951
        %v1323 = vmul.f32 %v1314, %v1019
        %v1324 = vmul.f32 %v1314, %v954
        %v1325 = vmul.f32 %v1314, %v1020
        %v1326 = vmul.f32 %v1314, %v957
        %v1327 = vmul.f32 %v1314, %v1021
        %v1328 = vmul.f32 %v1314, %v960
        %v1329 = vmul.f32 %v1314, %v1022
        %v1330 = vmul.f32 %v1314, %v963
        %v1331 = vmul.f32 %v1314, %v1023
        %v1332 = vmul.f32 %v1314, %v966
        %v1333 = vmul.f32 %v1314, %v1024
        %v1334 = vmul.f32 %v1314, %v969
        %v1335 = vmul.f32 %v1314, %v1025
        %v1336 = vmul.f32 %v1314, %v972
        %v1337 = vmul.f32 %v1314, %v1026
        %v1338 = vmul.f32 %v1314, %v975
        %v1339 = vmul.f32 %v1314, %v1027
        %v1340 = vmul.f32 %v1314, %v978
        %v1341 = vmul.f32 %v1314, %v1028
        %v1342 = vmul.f32 %v1314, %v981
        %v1343 = vmul.f32 %v1314, %v1029
        %v1344 = vmul.f32 %v1314, %v984
        %v1345 = vmul.f32 %v1314, %v1313
        %v1346 = vmul.f32 %v1314, %v1310
        %v1347 = vadd.f32 %v1274, %v1315
        %v1348 = vadd.f32 %v1275, %v1316
        %v1349 = vadd.f32 %v1274, %v1317
        %v1350 = vadd.f32 %v1275, %v1318
        %v1351 = vadd.f32 %v1276, %v1319
        %v1352 = vadd.f32 %v1277, %v1320
        %v1353 = vadd.f32 %v1278, %v1321
        %v1354 = vadd.f32 %v1279, %v1322
        %v1355 = vadd.f32 %v1280, %v1323
        %v1356 = vadd.f32 %v1281, %v1324
        %v1357 = vadd.f32 %v1282, %v1325
        %v1358 = vadd.f32 %v1283, %v1326
        %v1359 = vadd.f32 %v1284, %v1327
        %v1360 = vadd.f32 %v1285, %v1328
        %v1361 = vadd.f32 %v1286, %v1329
        %v1362 = vadd.f32 %v1287, %v1330
        %v1363 = vadd.f32 %v1288, %v1331
        %v1364 = vadd.f32 %v1289, %v1332
        %v1365 = vadd.f32 %v1290, %v1333
        %v1366 = vadd.f32 %v1291, %v1334
        %v1367 = vadd.f32 %v1292, %v1335
        %v1368 = vadd.f32 %v1293, %v1336
        %v1369 = vadd.f32 %v1294, %v1337
        %v1370 = vadd.f32 %v1295, %v1338
        %v1371 = vadd.f32 %v1296, %v1339
        %v1372 = vadd.f32 %v1297, %v1340
        %v1373 = vadd.f32 %v1298, %v1341
        %v1374 = vadd.f32 %v1299, %v1342
        %v1375 = vadd.f32 %v1300, %v1343
        %v1376 = vadd.f32 %v1301, %v1344
        %v1377 = vadd.f32 %v1302, %v1345
        %v1378 = vadd.f32 %v1303, %v1346
        %v1379 = vld [vmem:[%s1304 + $0x1] sm:$0x1]
        %v1380 = vperm.slane %v1379, 0
        %v1381 = vmul.f32 %v1380, 0.0
        %v1382 = vmul.f32 %v1380, %v878
        %v1383 = vmul.f32 %v1380, %v879
        %v1384 = vmul.f32 %v1380, %v880
        %v1385 = vmul.f32 %v1380, %v881
        %v1386 = vmul.f32 %v1380, %v882
        %v1387 = vmul.f32 %v1380, %v883
        %v1388 = vmul.f32 %v1380, %v884
        %v1389 = vmul.f32 %v1380, %v885
        %v1390 = vmul.f32 %v1380, %v886
        %v1391 = vmul.f32 %v1380, %v887
        %v1392 = vmul.f32 %v1380, %v888
        %v1393 = vmul.f32 %v1380, %v889
        %v1394 = vmul.f32 %v1380, %v890
        %v1395 = vmul.f32 %v1380, %v891
        %v1396 = vmul.f32 %v1380, %v892
        %v1397 = vmul.f32 %v1380, %v893
        %v1398 = vmul.f32 %v1380, %v894
        %v1399 = vmul.f32 %v1380, %v895
        %v1400 = vmul.f32 %v1380, %v896
        %v1401 = vmul.f32 %v1380, %v897
        %v1402 = vmul.f32 %v1380, %v898
        %v1403 = vmul.f32 %v1380, %v899
        %v1404 = vmul.f32 %v1380, %v900
        %v1405 = vmul.f32 %v1380, %v901
        %v1406 = vmul.f32 %v1380, %v902
        %v1407 = vmul.f32 %v1380, %v903
        %v1408 = vmul.f32 %v1380, %v904
        %v1409 = vmul.f32 %v1380, %v905
        %v1410 = vmul.f32 %v1380, %v906
        %v1411 = vmul.f32 %v1380, %v907
        %v1412 = vadd.f32 %v1347, %v1381
        %v1413 = vadd.f32 %v1348, %v1381
        %v1414 = vadd.f32 %v1349, %v1382
        %v1415 = vadd.f32 %v1350, %v1383
        %v1416 = vadd.f32 %v1351, %v1384
        %v1417 = vadd.f32 %v1352, %v1385
        %v1418 = vadd.f32 %v1353, %v1386
        %v1419 = vadd.f32 %v1354, %v1387
        %v1420 = vadd.f32 %v1355, %v1388
        %v1421 = vadd.f32 %v1356, %v1389
        %v1422 = vadd.f32 %v1357, %v1390
        %v1423 = vadd.f32 %v1358, %v1391
        %v1424 = vadd.f32 %v1359, %v1392
        %v1425 = vadd.f32 %v1360, %v1393
        %v1426 = vadd.f32 %v1361, %v1394
        %v1427 = vadd.f32 %v1362, %v1395
        %v1428 = vadd.f32 %v1363, %v1396
        %v1429 = vadd.f32 %v1364, %v1397
        %v1430 = vadd.f32 %v1365, %v1398
        %v1431 = vadd.f32 %v1366, %v1399
        %v1432 = vadd.f32 %v1367, %v1400
        %v1433 = vadd.f32 %v1368, %v1401
        %v1434 = vadd.f32 %v1369, %v1402
        %v1435 = vadd.f32 %v1370, %v1403
        %v1436 = vadd.f32 %v1371, %v1404
        %v1437 = vadd.f32 %v1372, %v1405
        %v1438 = vadd.f32 %v1373, %v1406
        %v1439 = vadd.f32 %v1374, %v1407
        %v1440 = vadd.f32 %v1375, %v1408
        %v1441 = vadd.f32 %v1376, %v1409
        %v1442 = vadd.f32 %v1377, %v1410
        %v1443 = vadd.f32 %v1378, %v1411
        %v1444 = vld [vmem:[%s1304 + $0x2] sm:$0x1]
        %v1445 = vrot.slane %v906, 1
        %v1446 = vrot.slane %v907, 1
        %v1447 = vsel %vm1153, %v1445, %v1446
        %v1450 = vsel %vm1153, %v1446, 0.0
        %v1451 = vperm.slane %v1444, 0
        %v1452 = vmul.f32 %v1451, %v1155
        %v1453 = vmul.f32 %v1451, %v1228
        %v1454 = vmul.f32 %v1451, %v1158
        %v1455 = vmul.f32 %v1451, %v1229
        %v1456 = vmul.f32 %v1451, %v1161
        %v1457 = vmul.f32 %v1451, %v1230
        %v1458 = vmul.f32 %v1451, %v1164
        %v1459 = vmul.f32 %v1451, %v1231
        %v1460 = vmul.f32 %v1451, %v1167
        %v1461 = vmul.f32 %v1451, %v1232
        %v1462 = vmul.f32 %v1451, %v1170
        %v1463 = vmul.f32 %v1451, %v1233
        %v1464 = vmul.f32 %v1451, %v1173
        %v1465 = vmul.f32 %v1451, %v1234
        %v1466 = vmul.f32 %v1451, %v1176
        %v1467 = vmul.f32 %v1451, %v1235
        %v1468 = vmul.f32 %v1451, %v1179
        %v1469 = vmul.f32 %v1451, %v1236
        %v1470 = vmul.f32 %v1451, %v1182
        %v1471 = vmul.f32 %v1451, %v1237
        %v1472 = vmul.f32 %v1451, %v1185
        %v1473 = vmul.f32 %v1451, %v1238
        %v1474 = vmul.f32 %v1451, %v1188
        %v1475 = vmul.f32 %v1451, %v1239
        %v1476 = vmul.f32 %v1451, %v1191
        %v1477 = vmul.f32 %v1451, %v1240
        %v1478 = vmul.f32 %v1451, %v1194
        %v1479 = vmul.f32 %v1451, %v1241
        %v1480 = vmul.f32 %v1451, %v1197
        %v1481 = vmul.f32 %v1451, %v1242
        %v1482 = vmul.f32 %v1451, %v1447
        %v1483 = vmul.f32 %v1451, %v1450
        %v1484 = vadd.f32 %v1412, %v1452
        %v1485 = vadd.f32 %v1413, %v1453
        %v1486 = vadd.f32 %v1414, %v1454
        %v1487 = vadd.f32 %v1415, %v1455
        %v1488 = vadd.f32 %v1416, %v1456
        %v1489 = vadd.f32 %v1417, %v1457
        %v1490 = vadd.f32 %v1418, %v1458
        %v1491 = vadd.f32 %v1419, %v1459
        %v1492 = vadd.f32 %v1420, %v1460
        %v1493 = vadd.f32 %v1421, %v1461
        %v1494 = vadd.f32 %v1422, %v1462
        %v1495 = vadd.f32 %v1423, %v1463
        %v1496 = vadd.f32 %v1424, %v1464
        %v1497 = vadd.f32 %v1425, %v1465
        %v1498 = vadd.f32 %v1426, %v1466
        %v1499 = vadd.f32 %v1427, %v1467
        %v1500 = vadd.f32 %v1428, %v1468
        %v1501 = vadd.f32 %v1429, %v1469
        %v1502 = vadd.f32 %v1430, %v1470
        %v1503 = vadd.f32 %v1431, %v1471
        %v1504 = vadd.f32 %v1432, %v1472
        %v1505 = vadd.f32 %v1433, %v1473
        %v1506 = vadd.f32 %v1434, %v1474
        %v1507 = vadd.f32 %v1435, %v1475
        %v1508 = vadd.f32 %v1436, %v1476
        %v1509 = vadd.f32 %v1437, %v1477
        %v1510 = vadd.f32 %v1438, %v1478
        %v1511 = vadd.f32 %v1439, %v1479
        %v1512 = vadd.f32 %v1440, %v1480
        %v1513 = vadd.f32 %v1441, %v1481
        %v1514 = vadd.f32 %v1442, %v1482
        %v1515 = vadd.f32 %v1443, %v1483
        %s1516 = scalar_lea.vmem [#allocation8], 8
        %v1517 = vld [vmem:[%s1516] sm:$0x1]
        %v1520 = vrot.slane %v908, 7
        %v1521 = vrot.slane %v909, 7
        %v1522 = vsel %vm940, %v1520, %v1521
        %v1525 = vsel %vm940, 0.0, %v1520
        %v1526 = vperm.slane %v1517, 0
        %v1527 = vmul.f32 %v1526, %v1016
        %v1528 = vmul.f32 %v1526, %v945
        %v1529 = vmul.f32 %v1526, %v1017
        %v1530 = vmul.f32 %v1526, %v948
        %v1531 = vmul.f32 %v1526, %v1018
        %v1532 = vmul.f32 %v1526, %v951
        %v1533 = vmul.f32 %v1526, %v1019
        %v1534 = vmul.f32 %v1526, %v954
        %v1535 = vmul.f32 %v1526, %v1020
        %v1536 = vmul.f32 %v1526, %v957
        %v1537 = vmul.f32 %v1526, %v1021
        %v1538 = vmul.f32 %v1526, %v960
        %v1539 = vmul.f32 %v1526, %v1022
        %v1540 = vmul.f32 %v1526, %v963
        %v1541 = vmul.f32 %v1526, %v1023
        %v1542 = vmul.f32 %v1526, %v966
        %v1543 = vmul.f32 %v1526, %v1024
        %v1544 = vmul.f32 %v1526, %v969
        %v1545 = vmul.f32 %v1526, %v1025
        %v1546 = vmul.f32 %v1526, %v972
        %v1547 = vmul.f32 %v1526, %v1026
        %v1548 = vmul.f32 %v1526, %v975
        %v1549 = vmul.f32 %v1526, %v1027
        %v1550 = vmul.f32 %v1526, %v978
        %v1551 = vmul.f32 %v1526, %v1028
        %v1552 = vmul.f32 %v1526, %v981
        %v1553 = vmul.f32 %v1526, %v1029
        %v1554 = vmul.f32 %v1526, %v984
        %v1555 = vmul.f32 %v1526, %v1313
        %v1556 = vmul.f32 %v1526, %v1310
        %v1557 = vmul.f32 %v1526, %v1525
        %v1558 = vmul.f32 %v1526, %v1522
        %v1559 = vadd.f32 %v1484, %v1527
        %v1560 = vadd.f32 %v1485, %v1528
        %v1561 = vadd.f32 %v1486, %v1529
        %v1562 = vadd.f32 %v1487, %v1530
        %v1563 = vadd.f32 %v1488, %v1531
        %v1564 = vadd.f32 %v1489, %v1532
        %v1565 = vadd.f32 %v1490, %v1533
        %v1566 = vadd.f32 %v1491, %v1534
        %v1567 = vadd.f32 %v1492, %v1535
        %v1568 = vadd.f32 %v1493, %v1536
        %v1569 = vadd.f32 %v1494, %v1537
        %v1570 = vadd.f32 %v1495, %v1538
        %v1571 = vadd.f32 %v1496, %v1539
        %v1572 = vadd.f32 %v1497, %v1540
        %v1573 = vadd.f32 %v1498, %v1541
        %v1574 = vadd.f32 %v1499, %v1542
        %v1575 = vadd.f32 %v1500, %v1543
        %v1576 = vadd.f32 %v1501, %v1544
        %v1577 = vadd.f32 %v1502, %v1545
        %v1578 = vadd.f32 %v1503, %v1546
        %v1579 = vadd.f32 %v1504, %v1547
        %v1580 = vadd.f32 %v1505, %v1548
        %v1581 = vadd.f32 %v1506, %v1549
        %v1582 = vadd.f32 %v1507, %v1550
        %v1583 = vadd.f32 %v1508, %v1551
        %v1584 = vadd.f32 %v1509, %v1552
        %v1585 = vadd.f32 %v1510, %v1553
        %v1586 = vadd.f32 %v1511, %v1554
        %v1587 = vadd.f32 %v1512, %v1555
        %v1588 = vadd.f32 %v1513, %v1556
        %v1589 = vadd.f32 %v1514, %v1557
        %v1590 = vadd.f32 %v1515, %v1558
        %v1591 = vld [vmem:[%s1516 + $0x1] sm:$0x1]
        %v1592 = vperm.slane %v1591, 0
        %v1593 = vmul.f32 %v1592, %v878
        %v1594 = vmul.f32 %v1592, %v879
        %v1595 = vmul.f32 %v1592, %v880
        %v1596 = vmul.f32 %v1592, %v881
        %v1597 = vmul.f32 %v1592, %v882
        %v1598 = vmul.f32 %v1592, %v883
        %v1599 = vmul.f32 %v1592, %v884
        %v1600 = vmul.f32 %v1592, %v885
        %v1601 = vmul.f32 %v1592, %v886
        %v1602 = vmul.f32 %v1592, %v887
        %v1603 = vmul.f32 %v1592, %v888
        %v1604 = vmul.f32 %v1592, %v889
        %v1605 = vmul.f32 %v1592, %v890
        %v1606 = vmul.f32 %v1592, %v891
        %v1607 = vmul.f32 %v1592, %v892
        %v1608 = vmul.f32 %v1592, %v893
        %v1609 = vmul.f32 %v1592, %v894
        %v1610 = vmul.f32 %v1592, %v895
        %v1611 = vmul.f32 %v1592, %v896
        %v1612 = vmul.f32 %v1592, %v897
        %v1613 = vmul.f32 %v1592, %v898
        %v1614 = vmul.f32 %v1592, %v899
        %v1615 = vmul.f32 %v1592, %v900
        %v1616 = vmul.f32 %v1592, %v901
        %v1617 = vmul.f32 %v1592, %v902
        %v1618 = vmul.f32 %v1592, %v903
        %v1619 = vmul.f32 %v1592, %v904
        %v1620 = vmul.f32 %v1592, %v905
        %v1621 = vmul.f32 %v1592, %v906
        %v1622 = vmul.f32 %v1592, %v907
        %v1623 = vmul.f32 %v1592, %v908
        %v1624 = vmul.f32 %v1592, %v909
        %v1625 = vadd.f32 %v1559, %v1593
        %v1626 = vadd.f32 %v1560, %v1594
        %v1627 = vadd.f32 %v1561, %v1595
        %v1628 = vadd.f32 %v1562, %v1596
        %v1629 = vadd.f32 %v1563, %v1597
        %v1630 = vadd.f32 %v1564, %v1598
        %v1631 = vadd.f32 %v1565, %v1599
        %v1632 = vadd.f32 %v1566, %v1600
        %v1633 = vadd.f32 %v1567, %v1601
        %v1634 = vadd.f32 %v1568, %v1602
        %v1635 = vadd.f32 %v1569, %v1603
        %v1636 = vadd.f32 %v1570, %v1604
        %v1637 = vadd.f32 %v1571, %v1605
        %v1638 = vadd.f32 %v1572, %v1606
        %v1639 = vadd.f32 %v1573, %v1607
        %v1640 = vadd.f32 %v1574, %v1608
        %v1641 = vadd.f32 %v1575, %v1609
        %v1642 = vadd.f32 %v1576, %v1610
        %v1643 = vadd.f32 %v1577, %v1611
        %v1644 = vadd.f32 %v1578, %v1612
        %v1645 = vadd.f32 %v1579, %v1613
        %v1646 = vadd.f32 %v1580, %v1614
        %v1647 = vadd.f32 %v1581, %v1615
        %v1648 = vadd.f32 %v1582, %v1616
        %v1649 = vadd.f32 %v1583, %v1617
        %v1650 = vadd.f32 %v1584, %v1618
        %v1651 = vadd.f32 %v1585, %v1619
        %v1652 = vadd.f32 %v1586, %v1620
        %v1653 = vadd.f32 %v1587, %v1621
        %v1654 = vadd.f32 %v1588, %v1622
        %v1655 = vadd.f32 %v1589, %v1623
        %v1656 = vadd.f32 %v1590, %v1624
        %v1657 = vld [vmem:[%s1516 + $0x2] sm:$0x1]
        %v1658 = vrot.slane %v908, 1
        %v1659 = vrot.slane %v909, 1
        %v1660 = vsel %vm1153, %v1658, %v1659
        %v1663 = vsel %vm1153, %v1659, 0.0
        %v1664 = vperm.slane %v1657, 0
        %v1665 = vmul.f32 %v1664, %v1158
        %v1666 = vmul.f32 %v1664, %v1229
        %v1667 = vmul.f32 %v1664, %v1161
        %v1668 = vmul.f32 %v1664, %v1230
        %v1669 = vmul.f32 %v1664, %v1164
        %v1670 = vmul.f32 %v1664, %v1231
        %v1671 = vmul.f32 %v1664, %v1167
        %v1672 = vmul.f32 %v1664, %v1232
        %v1673 = vmul.f32 %v1664, %v1170
        %v1674 = vmul.f32 %v1664, %v1233
        %v1675 = vmul.f32 %v1664, %v1173
        %v1676 = vmul.f32 %v1664, %v1234
        %v1677 = vmul.f32 %v1664, %v1176
        %v1678 = vmul.f32 %v1664, %v1235
        %v1679 = vmul.f32 %v1664, %v1179
        %v1680 = vmul.f32 %v1664, %v1236
        %v1681 = vmul.f32 %v1664, %v1182
        %v1682 = vmul.f32 %v1664, %v1237
        %v1683 = vmul.f32 %v1664, %v1185
        %v1684 = vmul.f32 %v1664, %v1238
        %v1685 = vmul.f32 %v1664, %v1188
        %v1686 = vmul.f32 %v1664, %v1239
        %v1687 = vmul.f32 %v1664, %v1191
        %v1688 = vmul.f32 %v1664, %v1240
        %v1689 = vmul.f32 %v1664, %v1194
        %v1690 = vmul.f32 %v1664, %v1241
        %v1691 = vmul.f32 %v1664, %v1197
        %v1692 = vmul.f32 %v1664, %v1242
        %v1693 = vmul.f32 %v1664, %v1447
        %v1694 = vmul.f32 %v1664, %v1450
        %v1695 = vmul.f32 %v1664, %v1660
        %v1696 = vmul.f32 %v1664, %v1663
        %v1697 = vadd.f32 %v1625, %v1665
        %v1698 = vadd.f32 %v1626, %v1666
        %v1699 = vadd.f32 %v1627, %v1667
        %v1700 = vadd.f32 %v1628, %v1668
        %v1701 = vadd.f32 %v1629, %v1669
        %v1702 = vadd.f32 %v1630, %v1670
        %v1703 = vadd.f32 %v1631, %v1671
        %v1704 = vadd.f32 %v1632, %v1672
        %v1705 = vadd.f32 %v1633, %v1673
        %v1706 = vadd.f32 %v1634, %v1674
        %v1707 = vadd.f32 %v1635, %v1675
        %v1708 = vadd.f32 %v1636, %v1676
        %v1709 = vadd.f32 %v1637, %v1677
        %v1710 = vadd.f32 %v1638, %v1678
        %v1711 = vadd.f32 %v1639, %v1679
        %v1712 = vadd.f32 %v1640, %v1680
        %v1713 = vadd.f32 %v1641, %v1681
        %v1714 = vadd.f32 %v1642, %v1682
        %v1715 = vadd.f32 %v1643, %v1683
        %v1716 = vadd.f32 %v1644, %v1684
        %v1717 = vadd.f32 %v1645, %v1685
        %v1718 = vadd.f32 %v1646, %v1686
        %v1719 = vadd.f32 %v1647, %v1687
        %v1720 = vadd.f32 %v1648, %v1688
        %v1721 = vadd.f32 %v1649, %v1689
        %v1722 = vadd.f32 %v1650, %v1690
        %v1723 = vadd.f32 %v1651, %v1691
        %v1724 = vadd.f32 %v1652, %v1692
        %v1725 = vadd.f32 %v1653, %v1693
        %v1726 = vadd.f32 %v1654, %v1694
        %v1727 = vadd.f32 %v1655, %v1695
        %v1728 = vadd.f32 %v1656, %v1696
        %v1729 = vld [vmem:[%s5] sm:$0x1]
        %v1730 = vperm.slane %v1729, 0
        %v1731 = vmul.f32 %v1697, %v1730
        %v1732 = vmul.f32 %v1698, %v1730
        %v1733 = vmul.f32 %v1699, %v1730
        %v1734 = vmul.f32 %v1700, %v1730
        %v1735 = vmul.f32 %v1701, %v1730
        %v1736 = vmul.f32 %v1702, %v1730
        %v1737 = vmul.f32 %v1703, %v1730
        %v1738 = vmul.f32 %v1704, %v1730
        %v1739 = vmul.f32 %v1705, %v1730
        %v1740 = vmul.f32 %v1706, %v1730
        %v1741 = vmul.f32 %v1707, %v1730
        %v1742 = vmul.f32 %v1708, %v1730
        %v1743 = vmul.f32 %v1709, %v1730
        %v1744 = vmul.f32 %v1710, %v1730
        %v1745 = vmul.f32 %v1711, %v1730
        %v1746 = vmul.f32 %v1712, %v1730
        %v1747 = vmul.f32 %v1713, %v1730
        %v1748 = vmul.f32 %v1714, %v1730
        %v1749 = vmul.f32 %v1715, %v1730
        %v1750 = vmul.f32 %v1716, %v1730
        %v1751 = vmul.f32 %v1717, %v1730
        %v1752 = vmul.f32 %v1718, %v1730
        %v1753 = vmul.f32 %v1719, %v1730
        %v1754 = vmul.f32 %v1720, %v1730
        %v1755 = vmul.f32 %v1721, %v1730
        %v1756 = vmul.f32 %v1722, %v1730
        %v1757 = vmul.f32 %v1723, %v1730
        %v1758 = vmul.f32 %v1724, %v1730
        %v1759 = vmul.f32 %v1725, %v1730
        %v1760 = vmul.f32 %v1726, %v1730
        %v1761 = vmul.f32 %v1727, %v1730
        %v1762 = vmul.f32 %v1728, %v1730
        %v1763 = vld [vmem:[#allocation12] sm:$0x1]
        %v1764 = vperm.slane %v1763, 0
        %v1765 = vadd.f32 %v1731, %v1764
        %v1766 = vadd.f32 %v1732, %v1764
        %v1767 = vadd.f32 %v1733, %v1764
        %v1768 = vadd.f32 %v1734, %v1764
        %v1769 = vadd.f32 %v1735, %v1764
        %v1770 = vadd.f32 %v1736, %v1764
        %v1771 = vadd.f32 %v1737, %v1764
        %v1772 = vadd.f32 %v1738, %v1764
        %v1773 = vadd.f32 %v1739, %v1764
        %v1774 = vadd.f32 %v1740, %v1764
        %v1775 = vadd.f32 %v1741, %v1764
        %v1776 = vadd.f32 %v1742, %v1764
        %v1777 = vadd.f32 %v1743, %v1764
        %v1778 = vadd.f32 %v1744, %v1764
        %v1779 = vadd.f32 %v1745, %v1764
        %v1780 = vadd.f32 %v1746, %v1764
        %v1781 = vadd.f32 %v1747, %v1764
        %v1782 = vadd.f32 %v1748, %v1764
        %v1783 = vadd.f32 %v1749, %v1764
        %v1784 = vadd.f32 %v1750, %v1764
        %v1785 = vadd.f32 %v1751, %v1764
        %v1786 = vadd.f32 %v1752, %v1764
        %v1787 = vadd.f32 %v1753, %v1764
        %v1788 = vadd.f32 %v1754, %v1764
        %v1789 = vadd.f32 %v1755, %v1764
        %v1790 = vadd.f32 %v1756, %v1764
        %v1791 = vadd.f32 %v1757, %v1764
        %v1792 = vadd.f32 %v1758, %v1764
        %v1793 = vadd.f32 %v1759, %v1764
        %v1794 = vadd.f32 %v1760, %v1764
        %v1795 = vadd.f32 %v1761, %v1764
        %v1796 = vadd.f32 %v1762, %v1764
        %s1797 = sld [smem:[#allocation15]]
        %vm1798 = vcmp.ge.f32.partialorder %v1765, 0.0
        %vm1799 = vcmp.ge.f32.partialorder %v1766, 0.0
        %vm1800 = vcmp.ge.f32.partialorder %v1767, 0.0
        %vm1801 = vcmp.ge.f32.partialorder %v1768, 0.0
        %vm1802 = vcmp.ge.f32.partialorder %v1769, 0.0
        %vm1803 = vcmp.ge.f32.partialorder %v1770, 0.0
        %vm1804 = vcmp.ge.f32.partialorder %v1771, 0.0
        %vm1805 = vcmp.ge.f32.partialorder %v1772, 0.0
        %vm1806 = vcmp.ge.f32.partialorder %v1773, 0.0
        %vm1807 = vcmp.ge.f32.partialorder %v1774, 0.0
        %vm1808 = vcmp.ge.f32.partialorder %v1775, 0.0
        %vm1809 = vcmp.ge.f32.partialorder %v1776, 0.0
        %vm1810 = vcmp.ge.f32.partialorder %v1777, 0.0
        %vm1811 = vcmp.ge.f32.partialorder %v1778, 0.0
        %vm1812 = vcmp.ge.f32.partialorder %v1779, 0.0
        %vm1813 = vcmp.ge.f32.partialorder %v1780, 0.0
        %vm1814 = vcmp.ge.f32.partialorder %v1781, 0.0
        %vm1815 = vcmp.ge.f32.partialorder %v1782, 0.0
        %vm1816 = vcmp.ge.f32.partialorder %v1783, 0.0
        %vm1817 = vcmp.ge.f32.partialorder %v1784, 0.0
        %vm1818 = vcmp.ge.f32.partialorder %v1785, 0.0
        %vm1819 = vcmp.ge.f32.partialorder %v1786, 0.0
        %vm1820 = vcmp.ge.f32.partialorder %v1787, 0.0
        %vm1821 = vcmp.ge.f32.partialorder %v1788, 0.0
        %vm1822 = vcmp.ge.f32.partialorder %v1789, 0.0
        %vm1823 = vcmp.ge.f32.partialorder %v1790, 0.0
        %vm1824 = vcmp.ge.f32.partialorder %v1791, 0.0
        %vm1825 = vcmp.ge.f32.partialorder %v1792, 0.0
        %vm1826 = vcmp.ge.f32.partialorder %v1793, 0.0
        %vm1827 = vcmp.ge.f32.partialorder %v1794, 0.0
        %vm1828 = vcmp.ge.f32.partialorder %v1795, 0.0
        %vm1829 = vcmp.ge.f32.partialorder %v1796, 0.0
        %v1830 = vstv %s1797
        %v1831 = vmul.f32 %v1830, %v1765
        %v1832 = vmul.f32 %v1830, %v1766
        %v1833 = vmul.f32 %v1830, %v1767
        %v1834 = vmul.f32 %v1830, %v1768
        %v1835 = vmul.f32 %v1830, %v1769
        %v1836 = vmul.f32 %v1830, %v1770
        %v1837 = vmul.f32 %v1830, %v1771
        %v1838 = vmul.f32 %v1830, %v1772
        %v1839 = vmul.f32 %v1830, %v1773
        %v1840 = vmul.f32 %v1830, %v1774
        %v1841 = vmul.f32 %v1830, %v1775
        %v1842 = vmul.f32 %v1830, %v1776
        %v1843 = vmul.f32 %v1830, %v1777
        %v1844 = vmul.f32 %v1830, %v1778
        %v1845 = vmul.f32 %v1830, %v1779
        %v1846 = vmul.f32 %v1830, %v1780
        %v1847 = vmul.f32 %v1830, %v1781
        %v1848 = vmul.f32 %v1830, %v1782
        %v1849 = vmul.f32 %v1830, %v1783
        %v1850 = vmul.f32 %v1830, %v1784
        %v1851 = vmul.f32 %v1830, %v1785
        %v1852 = vmul.f32 %v1830, %v1786
        %v1853 = vmul.f32 %v1830, %v1787
        %v1854 = vmul.f32 %v1830, %v1788
        %v1855 = vmul.f32 %v1830, %v1789
        %v1856 = vmul.f32 %v1830, %v1790
        %v1857 = vmul.f32 %v1830, %v1791
        %v1858 = vmul.f32 %v1830, %v1792
        %v1859 = vmul.f32 %v1830, %v1793
        %v1860 = vmul.f32 %v1830, %v1794
        %v1861 = vmul.f32 %v1830, %v1795
        %v1862 = vmul.f32 %v1830, %v1796
        %v1863 = vsel %vm1798, %v1765, %v1831
        %v1864 = vsel %vm1799, %v1766, %v1832
        %v1865 = vsel %vm1800, %v1767, %v1833
        %v1866 = vsel %vm1801, %v1768, %v1834
        %v1867 = vsel %vm1802, %v1769, %v1835
        %v1868 = vsel %vm1803, %v1770, %v1836
        %v1869 = vsel %vm1804, %v1771, %v1837
        %v1870 = vsel %vm1805, %v1772, %v1838
        %v1871 = vsel %vm1806, %v1773, %v1839
        %v1872 = vsel %vm1807, %v1774, %v1840
        %v1873 = vsel %vm1808, %v1775, %v1841
        %v1874 = vsel %vm1809, %v1776, %v1842
        %v1875 = vsel %vm1810, %v1777, %v1843
        %v1876 = vsel %vm1811, %v1778, %v1844
        %v1877 = vsel %vm1812, %v1779, %v1845
        %v1878 = vsel %vm1813, %v1780, %v1846
        %v1879 = vsel %vm1814, %v1781, %v1847
        %v1880 = vsel %vm1815, %v1782, %v1848
        %v1881 = vsel %vm1816, %v1783, %v1849
        %v1882 = vsel %vm1817, %v1784, %v1850
        %v1883 = vsel %vm1818, %v1785, %v1851
        %v1884 = vsel %vm1819, %v1786, %v1852
        %v1885 = vsel %vm1820, %v1787, %v1853
        %v1886 = vsel %vm1821, %v1788, %v1854
        %v1887 = vsel %vm1822, %v1789, %v1855
        %v1888 = vsel %vm1823, %v1790, %v1856
        %v1889 = vsel %vm1824, %v1791, %v1857
        %v1890 = vsel %vm1825, %v1792, %v1858
        %v1891 = vsel %vm1826, %v1793, %v1859
        %v1892 = vsel %vm1827, %v1794, %v1860
        %v1893 = vsel %vm1828, %v1795, %v1861
        %v1894 = vsel %vm1829, %v1796, %v1862
        %v1895 = vld [vmem:[#allocation6] sm:$0xff]
        %v1896 = vld [vmem:[#allocation6 + $0x8] sm:$0xff]
        %v1897 = vld [vmem:[#allocation6 + $0x10] sm:$0xff]
        %v1898 = vld [vmem:[#allocation6 + $0x18] sm:$0xff]
        %v1900 = vsel %vm534, %v1863, 0
        %v1903 = vsel %vm534, %v1864, 0
        %v1906 = vsel %vm534, %v1865, 0
        %v1909 = vsel %vm534, %v1866, 0
        %v1912 = vsel %vm534, %v1867, 0
        %v1915 = vsel %vm534, %v1868, 0
        %v1918 = vsel %vm534, %v1869, 0
        %v1921 = vsel %vm534, %v1870, 0
        %v1924 = vsel %vm534, %v1871, 0
        %v1927 = vsel %vm534, %v1872, 0
        %v1930 = vsel %vm534, %v1873, 0
        %v1933 = vsel %vm534, %v1874, 0
        %v1936 = vsel %vm534, %v1875, 0
        %v1939 = vsel %vm534, %v1876, 0
        %v1942 = vsel %vm534, %v1877, 0
        %v1945 = vsel %vm534, %v1878, 0
        %v1948 = vsel %vm534, %v1879, 0
        %v1951 = vsel %vm534, %v1880, 0
        %v1954 = vsel %vm534, %v1881, 0
        %v1957 = vsel %vm534, %v1882, 0
        %v1960 = vsel %vm534, %v1883, 0
        %v1963 = vsel %vm534, %v1884, 0
        %v1966 = vsel %vm534, %v1885, 0
        %v1969 = vsel %vm534, %v1886, 0
        %v1972 = vsel %vm534, %v1887, 0
        %v1975 = vsel %vm534, %v1888, 0
        %v1978 = vsel %vm534, %v1889, 0
        %v1981 = vsel %vm534, %v1890, 0
        %v1984 = vsel %vm534, %v1891, 0
        %v1987 = vsel %vm534, %v1892, 0
        %v1990 = vsel %vm534, %v1893, 0
        %v1993 = vsel %vm534, %v1894, 0
        %1995 = vmatpush.msra.mxu0 0.0
        %1996 = vmatpush.msra.mxu0 0.0
        %1997 = vmatpush.msra.mxu0 0.0
        %1998 = vmatpush.msra.mxu0 0.0
        %1999 = vmatpush.msra.mxu0 0.0
        %2000 = vmatpush.msra.mxu0 0.0
        %2001 = vmatpush.msra.mxu0 0.0
        %2002 = vmatpush.msra.mxu0 0.0
        %2003 = vmatpush.msra.mxu0 0.0
        %2004 = vmatpush.msra.mxu0 0.0
        %2005 = vmatpush.msra.mxu0 0.0
        %2006 = vmatpush.msra.mxu0 0.0
        %2007 = vmatpush.msra.mxu0 %v1898
        %2008 = vmatpush.msra.mxu0 %v1897
        %2009 = vmatpush.msra.mxu0 %v1896
        %2010 = vmatpush.msra.mxu0 %v1895
        %2011 = vmatmul.f32.gmra.mxu0 %v1900
        %v2012 = vpop.f32.mrf.mxu0
        %v2013 = vadd.f32 0.0, %v2012
        %2014 = vmatmul.f32.gmra.mxu0 %v1903
        %v2015 = vpop.f32.mrf.mxu0
        %v2016 = vadd.f32 0.0, %v2015
        %2017 = vmatmul.f32.gmra.mxu0 %v1906
        %v2018 = vpop.f32.mrf.mxu0
        %v2019 = vadd.f32 0.0, %v2018
        %2020 = vmatmul.f32.gmra.mxu0 %v1909
        %v2021 = vpop.f32.mrf.mxu0
        %v2022 = vadd.f32 0.0, %v2021
        %2023 = vmatmul.f32.gmra.mxu0 %v1912
        %v2024 = vpop.f32.mrf.mxu0
        %v2025 = vadd.f32 0.0, %v2024
        %2026 = vmatmul.f32.gmra.mxu0 %v1915
        %v2027 = vpop.f32.mrf.mxu0
        %v2028 = vadd.f32 0.0, %v2027
        %2029 = vmatmul.f32.gmra.mxu0 %v1918
        %v2030 = vpop.f32.mrf.mxu0
        %v2031 = vadd.f32 0.0, %v2030
        %2032 = vmatmul.f32.gmra.mxu0 %v1921
        %v2033 = vpop.f32.mrf.mxu0
        %v2034 = vadd.f32 0.0, %v2033
        %2035 = vmatmul.f32.gmra.mxu0 %v1924
        %v2036 = vpop.f32.mrf.mxu0
        %v2037 = vadd.f32 0.0, %v2036
        %2038 = vmatmul.f32.gmra.mxu0 %v1927
        %v2039 = vpop.f32.mrf.mxu0
        %v2040 = vadd.f32 0.0, %v2039
        %2041 = vmatmul.f32.gmra.mxu0 %v1930
        %v2042 = vpop.f32.mrf.mxu0
        %v2043 = vadd.f32 0.0, %v2042
        %2044 = vmatmul.f32.gmra.mxu0 %v1933
        %v2045 = vpop.f32.mrf.mxu0
        %v2046 = vadd.f32 0.0, %v2045
        %2047 = vmatmul.f32.gmra.mxu0 %v1936
        %v2048 = vpop.f32.mrf.mxu0
        %v2049 = vadd.f32 0.0, %v2048
        %2050 = vmatmul.f32.gmra.mxu0 %v1939
        %v2051 = vpop.f32.mrf.mxu0
        %v2052 = vadd.f32 0.0, %v2051
        %2053 = vmatmul.f32.gmra.mxu0 %v1942
        %v2054 = vpop.f32.mrf.mxu0
        %v2055 = vadd.f32 0.0, %v2054
        %2056 = vmatmul.f32.gmra.mxu0 %v1945
        %v2057 = vpop.f32.mrf.mxu0
        %v2058 = vadd.f32 0.0, %v2057
        %2059 = vmatmul.f32.gmra.mxu0 %v1948
        %v2060 = vpop.f32.mrf.mxu0
        %v2061 = vadd.f32 0.0, %v2060
        %2062 = vmatmul.f32.gmra.mxu0 %v1951
        %v2063 = vpop.f32.mrf.mxu0
        %v2064 = vadd.f32 0.0, %v2063
        %2065 = vmatmul.f32.gmra.mxu0 %v1954
        %v2066 = vpop.f32.mrf.mxu0
        %v2067 = vadd.f32 0.0, %v2066
        %2068 = vmatmul.f32.gmra.mxu0 %v1957
        %v2069 = vpop.f32.mrf.mxu0
        %v2070 = vadd.f32 0.0, %v2069
        %2071 = vmatmul.f32.gmra.mxu0 %v1960
        %v2072 = vpop.f32.mrf.mxu0
        %v2073 = vadd.f32 0.0, %v2072
        %2074 = vmatmul.f32.gmra.mxu0 %v1963
        %v2075 = vpop.f32.mrf.mxu0
        %v2076 = vadd.f32 0.0, %v2075
        %2077 = vmatmul.f32.gmra.mxu0 %v1966
        %v2078 = vpop.f32.mrf.mxu0
        %v2079 = vadd.f32 0.0, %v2078
        %2080 = vmatmul.f32.gmra.mxu0 %v1969
        %v2081 = vpop.f32.mrf.mxu0
        %v2082 = vadd.f32 0.0, %v2081
        %2083 = vmatmul.f32.gmra.mxu0 %v1972
        %v2084 = vpop.f32.mrf.mxu0
        %v2085 = vadd.f32 0.0, %v2084
        %2086 = vmatmul.f32.gmra.mxu0 %v1975
        %v2087 = vpop.f32.mrf.mxu0
        %v2088 = vadd.f32 0.0, %v2087
        %2089 = vmatmul.f32.gmra.mxu0 %v1978
        %v2090 = vpop.f32.mrf.mxu0
        %v2091 = vadd.f32 0.0, %v2090
        %2092 = vmatmul.f32.gmra.mxu0 %v1981
        %v2093 = vpop.f32.mrf.mxu0
        %v2094 = vadd.f32 0.0, %v2093
        %2095 = vmatmul.f32.gmra.mxu0 %v1984
        %v2096 = vpop.f32.mrf.mxu0
        %v2097 = vadd.f32 0.0, %v2096
        %2098 = vmatmul.f32.gmra.mxu0 %v1987
        %v2099 = vpop.f32.mrf.mxu0
        %v2100 = vadd.f32 0.0, %v2099
        %2101 = vmatmul.f32.gmra.mxu0 %v1990
        %v2102 = vpop.f32.mrf.mxu0
        %v2103 = vadd.f32 0.0, %v2102
        %2104 = vmatmul.f32.gmra.mxu0 %v1993
        %v2105 = vpop.f32.mrf.mxu0
        %v2106 = vadd.f32 0.0, %v2105
        %2107 = vdwg.mxu0
        %v2108 = vadd.f32 %v498, %v2013
        %v2109 = vadd.f32 %v499, %v2016
        %v2110 = vadd.f32 %v500, %v2019
        %v2111 = vadd.f32 %v501, %v2022
        %v2112 = vadd.f32 %v502, %v2025
        %v2113 = vadd.f32 %v503, %v2028
        %v2114 = vadd.f32 %v504, %v2031
        %v2115 = vadd.f32 %v505, %v2034
        %v2116 = vadd.f32 %v506, %v2037
        %v2117 = vadd.f32 %v507, %v2040
        %v2118 = vadd.f32 %v508, %v2043
        %v2119 = vadd.f32 %v509, %v2046
        %v2120 = vadd.f32 %v510, %v2049
        %v2121 = vadd.f32 %v511, %v2052
        %v2122 = vadd.f32 %v512, %v2055
        %v2123 = vadd.f32 %v513, %v2058
        %v2124 = vadd.f32 %v514, %v2061
        %v2125 = vadd.f32 %v515, %v2064
        %v2126 = vadd.f32 %v516, %v2067
        %v2127 = vadd.f32 %v517, %v2070
        %v2128 = vadd.f32 %v518, %v2073
        %v2129 = vadd.f32 %v519, %v2076
        %v2130 = vadd.f32 %v520, %v2079
        %v2131 = vadd.f32 %v521, %v2082
        %v2132 = vadd.f32 %v522, %v2085
        %v2133 = vadd.f32 %v523, %v2088
        %v2134 = vadd.f32 %v524, %v2091
        %v2135 = vadd.f32 %v525, %v2094
        %v2136 = vadd.f32 %v526, %v2097
        %v2137 = vadd.f32 %v527, %v2100
        %v2138 = vadd.f32 %v528, %v2103
        %v2139 = vadd.f32 %v529, %v2106
        %s2140 = scalar_lea.vmem [#allocation2], 32
        %v2141 = vld [vmem:[%s2140] sm:$0xff]
        %v2142 = vld [vmem:[%s2140 + $0x8] sm:$0xff]
        %v2143 = vld [vmem:[%s2140 + $0x10] sm:$0xff]
        %v2144 = vld [vmem:[%s2140 + $0x18] sm:$0xff]
        %v2146 = vsel %vm534, %v2108, 0
        %v2149 = vsel %vm534, %v2109, 0
        %v2152 = vsel %vm534, %v2110, 0
        %v2155 = vsel %vm534, %v2111, 0
        %v2158 = vsel %vm534, %v2112, 0
        %v2161 = vsel %vm534, %v2113, 0
        %v2164 = vsel %vm534, %v2114, 0
        %v2167 = vsel %vm534, %v2115, 0
        %v2170 = vsel %vm534, %v2116, 0
        %v2173 = vsel %vm534, %v2117, 0
        %v2176 = vsel %vm534, %v2118, 0
        %v2179 = vsel %vm534, %v2119, 0
        %v2182 = vsel %vm534, %v2120, 0
        %v2185 = vsel %vm534, %v2121, 0
        %v2188 = vsel %vm534, %v2122, 0
        %v2191 = vsel %vm534, %v2123, 0
        %v2194 = vsel %vm534, %v2124, 0
        %v2197 = vsel %vm534, %v2125, 0
        %v2200 = vsel %vm534, %v2126, 0
        %v2203 = vsel %vm534, %v2127, 0
        %v2206 = vsel %vm534, %v2128, 0
        %v2209 = vsel %vm534, %v2129, 0
        %v2212 = vsel %vm534, %v2130, 0
        %v2215 = vsel %vm534, %v2131, 0
        %v2218 = vsel %vm534, %v2132, 0
        %v2221 = vsel %vm534, %v2133, 0
        %v2224 = vsel %vm534, %v2134, 0
        %v2227 = vsel %vm534, %v2135, 0
        %v2230 = vsel %vm534, %v2136, 0
        %v2233 = vsel %vm534, %v2137, 0
        %v2236 = vsel %vm534, %v2138, 0
        %v2239 = vsel %vm534, %v2139, 0
        %2241 = vmatpush.msra.mxu0 0.0
        %2242 = vmatpush.msra.mxu0 0.0
        %2243 = vmatpush.msra.mxu0 0.0
        %2244 = vmatpush.msra.mxu0 0.0
        %2245 = vmatpush.msra.mxu0 0.0
        %2246 = vmatpush.msra.mxu0 0.0
        %2247 = vmatpush.msra.mxu0 0.0
        %2248 = vmatpush.msra.mxu0 0.0
        %2249 = vmatpush.msra.mxu0 0.0
        %2250 = vmatpush.msra.mxu0 0.0
        %2251 = vmatpush.msra.mxu0 0.0
        %2252 = vmatpush.msra.mxu0 0.0
        %2253 = vmatpush.msra.mxu0 %v2144
        %2254 = vmatpush.msra.mxu0 %v2143
        %2255 = vmatpush.msra.mxu0 %v2142
        %2256 = vmatpush.msra.mxu0 %v2141
        %2257 = vmatmul.f32.gmra.mxu0 %v2146
        %v2258 = vpop.f32.mrf.mxu0
        %v2259 = vadd.f32 0.0, %v2258
        %2260 = vmatmul.f32.gmra.mxu0 %v2149
        %v2261 = vpop.f32.mrf.mxu0
        %v2262 = vadd.f32 0.0, %v2261
        %2263 = vmatmul.f32.gmra.mxu0 %v2152
        %v2264 = vpop.f32.mrf.mxu0
        %v2265 = vadd.f32 0.0, %v2264
        %2266 = vmatmul.f32.gmra.mxu0 %v2155
        %v2267 = vpop.f32.mrf.mxu0
        %v2268 = vadd.f32 0.0, %v2267
        %2269 = vmatmul.f32.gmra.mxu0 %v2158
        %v2270 = vpop.f32.mrf.mxu0
        %v2271 = vadd.f32 0.0, %v2270
        %2272 = vmatmul.f32.gmra.mxu0 %v2161
        %v2273 = vpop.f32.mrf.mxu0
        %v2274 = vadd.f32 0.0, %v2273
        %2275 = vmatmul.f32.gmra.mxu0 %v2164
        %v2276 = vpop.f32.mrf.mxu0
        %v2277 = vadd.f32 0.0, %v2276
        %2278 = vmatmul.f32.gmra.mxu0 %v2167
        %v2279 = vpop.f32.mrf.mxu0
        %v2280 = vadd.f32 0.0, %v2279
        %2281 = vmatmul.f32.gmra.mxu0 %v2170
        %v2282 = vpop.f32.mrf.mxu0
        %v2283 = vadd.f32 0.0, %v2282
        %2284 = vmatmul.f32.gmra.mxu0 %v2173
        %v2285 = vpop.f32.mrf.mxu0
        %v2286 = vadd.f32 0.0, %v2285
        %2287 = vmatmul.f32.gmra.mxu0 %v2176
        %v2288 = vpop.f32.mrf.mxu0
        %v2289 = vadd.f32 0.0, %v2288
        %2290 = vmatmul.f32.gmra.mxu0 %v2179
        %v2291 = vpop.f32.mrf.mxu0
        %v2292 = vadd.f32 0.0, %v2291
        %2293 = vmatmul.f32.gmra.mxu0 %v2182
        %v2294 = vpop.f32.mrf.mxu0
        %v2295 = vadd.f32 0.0, %v2294
        %2296 = vmatmul.f32.gmra.mxu0 %v2185
        %v2297 = vpop.f32.mrf.mxu0
        %v2298 = vadd.f32 0.0, %v2297
        %2299 = vmatmul.f32.gmra.mxu0 %v2188
        %v2300 = vpop.f32.mrf.mxu0
        %v2301 = vadd.f32 0.0, %v2300
        %2302 = vmatmul.f32.gmra.mxu0 %v2191
        %v2303 = vpop.f32.mrf.mxu0
        %v2304 = vadd.f32 0.0, %v2303
        %2305 = vmatmul.f32.gmra.mxu0 %v2194
        %v2306 = vpop.f32.mrf.mxu0
        %v2307 = vadd.f32 0.0, %v2306
        %2308 = vmatmul.f32.gmra.mxu0 %v2197
        %v2309 = vpop.f32.mrf.mxu0
        %v2310 = vadd.f32 0.0, %v2309
        %2311 = vmatmul.f32.gmra.mxu0 %v2200
        %v2312 = vpop.f32.mrf.mxu0
        %v2313 = vadd.f32 0.0, %v2312
        %2314 = vmatmul.f32.gmra.mxu0 %v2203
        %v2315 = vpop.f32.mrf.mxu0
        %v2316 = vadd.f32 0.0, %v2315
        %2317 = vmatmul.f32.gmra.mxu0 %v2206
        %v2318 = vpop.f32.mrf.mxu0
        %v2319 = vadd.f32 0.0, %v2318
        %2320 = vmatmul.f32.gmra.mxu0 %v2209
        %v2321 = vpop.f32.mrf.mxu0
        %v2322 = vadd.f32 0.0, %v2321
        %2323 = vmatmul.f32.gmra.mxu0 %v2212
        %v2324 = vpop.f32.mrf.mxu0
        %v2325 = vadd.f32 0.0, %v2324
        %2326 = vmatmul.f32.gmra.mxu0 %v2215
        %v2327 = vpop.f32.mrf.mxu0
        %v2328 = vadd.f32 0.0, %v2327
        %2329 = vmatmul.f32.gmra.mxu0 %v2218
        %v2330 = vpop.f32.mrf.mxu0
        %v2331 = vadd.f32 0.0, %v2330
        %2332 = vmatmul.f32.gmra.mxu0 %v2221
        %v2333 = vpop.f32.mrf.mxu0
        %v2334 = vadd.f32 0.0, %v2333
        %2335 = vmatmul.f32.gmra.mxu0 %v2224
        %v2336 = vpop.f32.mrf.mxu0
        %v2337 = vadd.f32 0.0, %v2336
        %2338 = vmatmul.f32.gmra.mxu0 %v2227
        %v2339 = vpop.f32.mrf.mxu0
        %v2340 = vadd.f32 0.0, %v2339
        %2341 = vmatmul.f32.gmra.mxu0 %v2230
        %v2342 = vpop.f32.mrf.mxu0
        %v2343 = vadd.f32 0.0, %v2342
        %2344 = vmatmul.f32.gmra.mxu0 %v2233
        %v2345 = vpop.f32.mrf.mxu0
        %v2346 = vadd.f32 0.0, %v2345
        %2347 = vmatmul.f32.gmra.mxu0 %v2236
        %v2348 = vpop.f32.mrf.mxu0
        %v2349 = vadd.f32 0.0, %v2348
        %2350 = vmatmul.f32.gmra.mxu0 %v2239
        %v2351 = vpop.f32.mrf.mxu0
        %v2352 = vadd.f32 0.0, %v2351
        %2353 = vdwg.mxu0
        %v2354 = vld [vmem:[#allocation9 + $0x1] sm:$0x1]
        %v2355 = vperm.slane %v2354, 0
        %v2356 = vmul.f32 %v2259, %v2355
        %v2357 = vmul.f32 %v2262, %v2355
        %v2358 = vmul.f32 %v2265, %v2355
        %v2359 = vmul.f32 %v2268, %v2355
        %v2360 = vmul.f32 %v2271, %v2355
        %v2361 = vmul.f32 %v2274, %v2355
        %v2362 = vmul.f32 %v2277, %v2355
        %v2363 = vmul.f32 %v2280, %v2355
        %v2364 = vmul.f32 %v2283, %v2355
        %v2365 = vmul.f32 %v2286, %v2355
        %v2366 = vmul.f32 %v2289, %v2355
        %v2367 = vmul.f32 %v2292, %v2355
        %v2368 = vmul.f32 %v2295, %v2355
        %v2369 = vmul.f32 %v2298, %v2355
        %v2370 = vmul.f32 %v2301, %v2355
        %v2371 = vmul.f32 %v2304, %v2355
        %v2372 = vmul.f32 %v2307, %v2355
        %v2373 = vmul.f32 %v2310, %v2355
        %v2374 = vmul.f32 %v2313, %v2355
        %v2375 = vmul.f32 %v2316, %v2355
        %v2376 = vmul.f32 %v2319, %v2355
        %v2377 = vmul.f32 %v2322, %v2355
        %v2378 = vmul.f32 %v2325, %v2355
        %v2379 = vmul.f32 %v2328, %v2355
        %v2380 = vmul.f32 %v2331, %v2355
        %v2381 = vmul.f32 %v2334, %v2355
        %v2382 = vmul.f32 %v2337, %v2355
        %v2383 = vmul.f32 %v2340, %v2355
        %v2384 = vmul.f32 %v2343, %v2355
        %v2385 = vmul.f32 %v2346, %v2355
        %v2386 = vmul.f32 %v2349, %v2355
        %v2387 = vmul.f32 %v2352, %v2355
        %v2388 = vld [vmem:[#allocation11 + $0x1] sm:$0x1]
        %v2389 = vperm.slane %v2388, 0
        %v2390 = vadd.f32 %v2356, %v2389
        %v2391 = vadd.f32 %v2357, %v2389
        %v2392 = vadd.f32 %v2358, %v2389
        %v2393 = vadd.f32 %v2359, %v2389
        %v2394 = vadd.f32 %v2360, %v2389
        %v2395 = vadd.f32 %v2361, %v2389
        %v2396 = vadd.f32 %v2362, %v2389
        %v2397 = vadd.f32 %v2363, %v2389
        %v2398 = vadd.f32 %v2364, %v2389
        %v2399 = vadd.f32 %v2365, %v2389
        %v2400 = vadd.f32 %v2366, %v2389
        %v2401 = vadd.f32 %v2367, %v2389
        %v2402 = vadd.f32 %v2368, %v2389
        %v2403 = vadd.f32 %v2369, %v2389
        %v2404 = vadd.f32 %v2370, %v2389
        %v2405 = vadd.f32 %v2371, %v2389
        %v2406 = vadd.f32 %v2372, %v2389
        %v2407 = vadd.f32 %v2373, %v2389
        %v2408 = vadd.f32 %v2374, %v2389
        %v2409 = vadd.f32 %v2375, %v2389
        %v2410 = vadd.f32 %v2376, %v2389
        %v2411 = vadd.f32 %v2377, %v2389
        %v2412 = vadd.f32 %v2378, %v2389
        %v2413 = vadd.f32 %v2379, %v2389
        %v2414 = vadd.f32 %v2380, %v2389
        %v2415 = vadd.f32 %v2381, %v2389
        %v2416 = vadd.f32 %v2382, %v2389
        %v2417 = vadd.f32 %v2383, %v2389
        %v2418 = vadd.f32 %v2384, %v2389
        %v2419 = vadd.f32 %v2385, %v2389
        %v2420 = vadd.f32 %v2386, %v2389
        %v2421 = vadd.f32 %v2387, %v2389
        %s2422 = sld [smem:[#allocation14 + $0x1]]
        %vm2423 = vcmp.ge.f32.partialorder %v2390, 0.0
        %vm2424 = vcmp.ge.f32.partialorder %v2391, 0.0
        %vm2425 = vcmp.ge.f32.partialorder %v2392, 0.0
        %vm2426 = vcmp.ge.f32.partialorder %v2393, 0.0
        %vm2427 = vcmp.ge.f32.partialorder %v2394, 0.0
        %vm2428 = vcmp.ge.f32.partialorder %v2395, 0.0
        %vm2429 = vcmp.ge.f32.partialorder %v2396, 0.0
        %vm2430 = vcmp.ge.f32.partialorder %v2397, 0.0
        %vm2431 = vcmp.ge.f32.partialorder %v2398, 0.0
        %vm2432 = vcmp.ge.f32.partialorder %v2399, 0.0
        %vm2433 = vcmp.ge.f32.partialorder %v2400, 0.0
        %vm2434 = vcmp.ge.f32.partialorder %v2401, 0.0
        %vm2435 = vcmp.ge.f32.partialorder %v2402, 0.0
        %vm2436 = vcmp.ge.f32.partialorder %v2403, 0.0
        %vm2437 = vcmp.ge.f32.partialorder %v2404, 0.0
        %vm2438 = vcmp.ge.f32.partialorder %v2405, 0.0
        %vm2439 = vcmp.ge.f32.partialorder %v2406, 0.0
        %vm2440 = vcmp.ge.f32.partialorder %v2407, 0.0
        %vm2441 = vcmp.ge.f32.partialorder %v2408, 0.0
        %vm2442 = vcmp.ge.f32.partialorder %v2409, 0.0
        %vm2443 = vcmp.ge.f32.partialorder %v2410, 0.0
        %vm2444 = vcmp.ge.f32.partialorder %v2411, 0.0
        %vm2445 = vcmp.ge.f32.partialorder %v2412, 0.0
        %vm2446 = vcmp.ge.f32.partialorder %v2413, 0.0
        %vm2447 = vcmp.ge.f32.partialorder %v2414, 0.0
        %vm2448 = vcmp.ge.f32.partialorder %v2415, 0.0
        %vm2449 = vcmp.ge.f32.partialorder %v2416, 0.0
        %vm2450 = vcmp.ge.f32.partialorder %v2417, 0.0
        %vm2451 = vcmp.ge.f32.partialorder %v2418, 0.0
        %vm2452 = vcmp.ge.f32.partialorder %v2419, 0.0
        %vm2453 = vcmp.ge.f32.partialorder %v2420, 0.0
        %vm2454 = vcmp.ge.f32.partialorder %v2421, 0.0
        %v2455 = vstv %s2422
        %v2456 = vmul.f32 %v2455, %v2390
        %v2457 = vmul.f32 %v2455, %v2391
        %v2458 = vmul.f32 %v2455, %v2392
        %v2459 = vmul.f32 %v2455, %v2393
        %v2460 = vmul.f32 %v2455, %v2394
        %v2461 = vmul.f32 %v2455, %v2395
        %v2462 = vmul.f32 %v2455, %v2396
        %v2463 = vmul.f32 %v2455, %v2397
        %v2464 = vmul.f32 %v2455, %v2398
        %v2465 = vmul.f32 %v2455, %v2399
        %v2466 = vmul.f32 %v2455, %v2400
        %v2467 = vmul.f32 %v2455, %v2401
        %v2468 = vmul.f32 %v2455, %v2402
        %v2469 = vmul.f32 %v2455, %v2403
        %v2470 = vmul.f32 %v2455, %v2404
        %v2471 = vmul.f32 %v2455, %v2405
        %v2472 = vmul.f32 %v2455, %v2406
        %v2473 = vmul.f32 %v2455, %v2407
        %v2474 = vmul.f32 %v2455, %v2408
        %v2475 = vmul.f32 %v2455, %v2409
        %v2476 = vmul.f32 %v2455, %v2410
        %v2477 = vmul.f32 %v2455, %v2411
        %v2478 = vmul.f32 %v2455, %v2412
        %v2479 = vmul.f32 %v2455, %v2413
        %v2480 = vmul.f32 %v2455, %v2414
        %v2481 = vmul.f32 %v2455, %v2415
        %v2482 = vmul.f32 %v2455, %v2416
        %v2483 = vmul.f32 %v2455, %v2417
        %v2484 = vmul.f32 %v2455, %v2418
        %v2485 = vmul.f32 %v2455, %v2419
        %v2486 = vmul.f32 %v2455, %v2420
        %v2487 = vmul.f32 %v2455, %v2421
        %v2488 = vsel %vm2423, %v2390, %v2456
        %v2489 = vsel %vm2424, %v2391, %v2457
        %v2490 = vsel %vm2425, %v2392, %v2458
        %v2491 = vsel %vm2426, %v2393, %v2459
        %v2492 = vsel %vm2427, %v2394, %v2460
        %v2493 = vsel %vm2428, %v2395, %v2461
        %v2494 = vsel %vm2429, %v2396, %v2462
        %v2495 = vsel %vm2430, %v2397, %v2463
        %v2496 = vsel %vm2431, %v2398, %v2464
        %v2497 = vsel %vm2432, %v2399, %v2465
        %v2498 = vsel %vm2433, %v2400, %v2466
        %v2499 = vsel %vm2434, %v2401, %v2467
        %v2500 = vsel %vm2435, %v2402, %v2468
        %v2501 = vsel %vm2436, %v2403, %v2469
        %v2502 = vsel %vm2437, %v2404, %v2470
        %v2503 = vsel %vm2438, %v2405, %v2471
        %v2504 = vsel %vm2439, %v2406, %v2472
        %v2505 = vsel %vm2440, %v2407, %v2473
        %v2506 = vsel %vm2441, %v2408, %v2474
        %v2507 = vsel %vm2442, %v2409, %v2475
        %v2508 = vsel %vm2443, %v2410, %v2476
        %v2509 = vsel %vm2444, %v2411, %v2477
        %v2510 = vsel %vm2445, %v2412, %v2478
        %v2511 = vsel %vm2446, %v2413, %v2479
        %v2512 = vsel %vm2447, %v2414, %v2480
        %v2513 = vsel %vm2448, %v2415, %v2481
        %v2514 = vsel %vm2449, %v2416, %v2482
        %v2515 = vsel %vm2450, %v2417, %v2483
        %v2516 = vsel %vm2451, %v2418, %v2484
        %v2517 = vsel %vm2452, %v2419, %v2485
        %v2518 = vsel %vm2453, %v2420, %v2486
        %v2519 = vsel %vm2454, %v2421, %v2487
        %s2520 = scalar_lea.vmem [#allocation8], 12
        %v2521 = vld [vmem:[%s2520] sm:$0x1]
        %v2546 = vrot.slane %v2488, 7
        %v2547 = vrot.slane %v2489, 7
        %v2548 = vsel %vm940, %v2546, %v2547
        %v2549 = vrot.slane %v2490, 7
        %v2550 = vrot.slane %v2491, 7
        %v2551 = vsel %vm940, %v2549, %v2550
        %v2552 = vrot.slane %v2492, 7
        %v2553 = vrot.slane %v2493, 7
        %v2554 = vsel %vm940, %v2552, %v2553
        %v2555 = vrot.slane %v2494, 7
        %v2556 = vrot.slane %v2495, 7
        %v2557 = vsel %vm940, %v2555, %v2556
        %v2558 = vrot.slane %v2496, 7
        %v2559 = vrot.slane %v2497, 7
        %v2560 = vsel %vm940, %v2558, %v2559
        %v2561 = vrot.slane %v2498, 7
        %v2562 = vrot.slane %v2499, 7
        %v2563 = vsel %vm940, %v2561, %v2562
        %v2564 = vrot.slane %v2500, 7
        %v2565 = vrot.slane %v2501, 7
        %v2566 = vsel %vm940, %v2564, %v2565
        %v2567 = vrot.slane %v2502, 7
        %v2568 = vrot.slane %v2503, 7
        %v2569 = vsel %vm940, %v2567, %v2568
        %v2570 = vrot.slane %v2504, 7
        %v2571 = vrot.slane %v2505, 7
        %v2572 = vsel %vm940, %v2570, %v2571
        %v2573 = vrot.slane %v2506, 7
        %v2574 = vrot.slane %v2507, 7
        %v2575 = vsel %vm940, %v2573, %v2574
        %v2576 = vrot.slane %v2508, 7
        %v2577 = vrot.slane %v2509, 7
        %v2578 = vsel %vm940, %v2576, %v2577
        %v2579 = vrot.slane %v2510, 7
        %v2580 = vrot.slane %v2511, 7
        %v2581 = vsel %vm940, %v2579, %v2580
        %v2606 = vsel %vm940, 0.0, %v2546
        %v2607 = vsel %vm940, 0.0, %v2549
        %v2608 = vsel %vm940, 0.0, %v2552
        %v2609 = vsel %vm940, 0.0, %v2555
        %v2610 = vsel %vm940, 0.0, %v2558
        %v2611 = vsel %vm940, 0.0, %v2561
        %v2612 = vsel %vm940, 0.0, %v2564
        %v2613 = vsel %vm940, 0.0, %v2567
        %v2614 = vsel %vm940, 0.0, %v2570
        %v2615 = vsel %vm940, 0.0, %v2573
        %v2616 = vsel %vm940, 0.0, %v2576
        %v2617 = vsel %vm940, 0.0, %v2579
        %v2618 = vperm.slane %v2521, 0
        %v2619 = vmul.f32 %v2618, %v1015
        %v2620 = vmul.f32 %v2618, %v942
        %v2621 = vmul.f32 %v2618, %v2606
        %v2622 = vmul.f32 %v2618, %v2548
        %v2623 = vmul.f32 %v2618, %v2607
        %v2624 = vmul.f32 %v2618, %v2551
        %v2625 = vmul.f32 %v2618, %v2608
        %v2626 = vmul.f32 %v2618, %v2554
        %v2627 = vmul.f32 %v2618, %v2609
        %v2628 = vmul.f32 %v2618, %v2557
        %v2629 = vmul.f32 %v2618, %v2610
        %v2630 = vmul.f32 %v2618, %v2560
        %v2631 = vmul.f32 %v2618, %v2611
        %v2632 = vmul.f32 %v2618, %v2563
        %v2633 = vmul.f32 %v2618, %v2612
        %v2634 = vmul.f32 %v2618, %v2566
        %v2635 = vmul.f32 %v2618, %v2613
        %v2636 = vmul.f32 %v2618, %v2569
        %v2637 = vmul.f32 %v2618, %v2614
        %v2638 = vmul.f32 %v2618, %v2572
        %v2639 = vmul.f32 %v2618, %v2615
        %v2640 = vmul.f32 %v2618, %v2575
        %v2641 = vmul.f32 %v2618, %v2616
        %v2642 = vmul.f32 %v2618, %v2578
        %v2643 = vmul.f32 %v2618, %v2617
        %v2644 = vmul.f32 %v2618, %v2581
        %v2645 = vadd.f32 %v2619, 0.0
        %v2646 = vadd.f32 %v2620, 0.0
        %v2647 = vadd.f32 %v2621, 0.0
        %v2648 = vadd.f32 %v2622, 0.0
        %v2649 = vadd.f32 %v2623, 0.0
        %v2650 = vadd.f32 %v2624, 0.0
        %v2651 = vadd.f32 %v2625, 0.0
        %v2652 = vadd.f32 %v2626, 0.0
        %v2653 = vadd.f32 %v2627, 0.0
        %v2654 = vadd.f32 %v2628, 0.0
        %v2655 = vadd.f32 %v2629, 0.0
        %v2656 = vadd.f32 %v2630, 0.0
        %v2657 = vadd.f32 %v2631, 0.0
        %v2658 = vadd.f32 %v2632, 0.0
        %v2659 = vadd.f32 %v2633, 0.0
        %v2660 = vadd.f32 %v2634, 0.0
        %v2661 = vadd.f32 %v2635, 0.0
        %v2662 = vadd.f32 %v2636, 0.0
        %v2663 = vadd.f32 %v2637, 0.0
        %v2664 = vadd.f32 %v2638, 0.0
        %v2665 = vadd.f32 %v2639, 0.0
        %v2666 = vadd.f32 %v2640, 0.0
        %v2667 = vadd.f32 %v2641, 0.0
        %v2668 = vadd.f32 %v2642, 0.0
        %v2669 = vadd.f32 %v2643, 0.0
        %v2670 = vadd.f32 %v2644, 0.0
        %v2671 = vld [vmem:[%s2520 + $0x1] sm:$0x1]
        %v2672 = vperm.slane %v2671, 0
        %v2673 = vmul.f32 %v2672, 0.0
        %v2674 = vmul.f32 %v2672, %v2488
        %v2675 = vmul.f32 %v2672, %v2489
        %v2676 = vmul.f32 %v2672, %v2490
        %v2677 = vmul.f32 %v2672, %v2491
        %v2678 = vmul.f32 %v2672, %v2492
        %v2679 = vmul.f32 %v2672, %v2493
        %v2680 = vmul.f32 %v2672, %v2494
        %v2681 = vmul.f32 %v2672, %v2495
        %v2682 = vmul.f32 %v2672, %v2496
        %v2683 = vmul.f32 %v2672, %v2497
        %v2684 = vmul.f32 %v2672, %v2498
        %v2685 = vmul.f32 %v2672, %v2499
        %v2686 = vmul.f32 %v2672, %v2500
        %v2687 = vmul.f32 %v2672, %v2501
        %v2688 = vmul.f32 %v2672, %v2502
        %v2689 = vmul.f32 %v2672, %v2503
        %v2690 = vmul.f32 %v2672, %v2504
        %v2691 = vmul.f32 %v2672, %v2505
        %v2692 = vmul.f32 %v2672, %v2506
        %v2693 = vmul.f32 %v2672, %v2507
        %v2694 = vmul.f32 %v2672, %v2508
        %v2695 = vmul.f32 %v2672, %v2509
        %v2696 = vmul.f32 %v2672, %v2510
        %v2697 = vmul.f32 %v2672, %v2511
        %v2698 = vadd.f32 %v2645, %v2673
        %v2699 = vadd.f32 %v2646, %v2673
        %v2700 = vadd.f32 %v2647, %v2674
        %v2701 = vadd.f32 %v2648, %v2675
        %v2702 = vadd.f32 %v2649, %v2676
        %v2703 = vadd.f32 %v2650, %v2677
        %v2704 = vadd.f32 %v2651, %v2678
        %v2705 = vadd.f32 %v2652, %v2679
        %v2706 = vadd.f32 %v2653, %v2680
        %v2707 = vadd.f32 %v2654, %v2681
        %v2708 = vadd.f32 %v2655, %v2682
        %v2709 = vadd.f32 %v2656, %v2683
        %v2710 = vadd.f32 %v2657, %v2684
        %v2711 = vadd.f32 %v2658, %v2685
        %v2712 = vadd.f32 %v2659, %v2686
        %v2713 = vadd.f32 %v2660, %v2687
        %v2714 = vadd.f32 %v2661, %v2688
        %v2715 = vadd.f32 %v2662, %v2689
        %v2716 = vadd.f32 %v2663, %v2690
        %v2717 = vadd.f32 %v2664, %v2691
        %v2718 = vadd.f32 %v2665, %v2692
        %v2719 = vadd.f32 %v2666, %v2693
        %v2720 = vadd.f32 %v2667, %v2694
        %v2721 = vadd.f32 %v2668, %v2695
        %v2722 = vadd.f32 %v2669, %v2696
        %v2723 = vadd.f32 %v2670, %v2697
        %v2724 = vld [vmem:[%s2520 + $0x2] sm:$0x1]
        %v2725 = vrot.slane %v2488, 1
        %v2726 = vrot.slane %v2489, 1
        %v2727 = vsel %vm1153, %v2725, %v2726
        %v2728 = vrot.slane %v2490, 1
        %v2729 = vrot.slane %v2491, 1
        %v2730 = vsel %vm1153, %v2728, %v2729
        %v2731 = vrot.slane %v2492, 1
        %v2732 = vrot.slane %v2493, 1
        %v2733 = vsel %vm1153, %v2731, %v2732
        %v2734 = vrot.slane %v2494, 1
        %v2735 = vrot.slane %v2495, 1
        %v2736 = vsel %vm1153, %v2734, %v2735
        %v2737 = vrot.slane %v2496, 1
        %v2738 = vrot.slane %v2497, 1
        %v2739 = vsel %vm1153, %v2737, %v2738
        %v2740 = vrot.slane %v2498, 1
        %v2741 = vrot.slane %v2499, 1
        %v2742 = vsel %vm1153, %v2740, %v2741
        %v2743 = vrot.slane %v2500, 1
        %v2744 = vrot.slane %v2501, 1
        %v2745 = vsel %vm1153, %v2743, %v2744
        %v2746 = vrot.slane %v2502, 1
        %v2747 = vrot.slane %v2503, 1
        %v2748 = vsel %vm1153, %v2746, %v2747
        %v2749 = vrot.slane %v2504, 1
        %v2750 = vrot.slane %v2505, 1
        %v2751 = vsel %vm1153, %v2749, %v2750
        %v2752 = vrot.slane %v2506, 1
        %v2753 = vrot.slane %v2507, 1
        %v2754 = vsel %vm1153, %v2752, %v2753
        %v2755 = vrot.slane %v2508, 1
        %v2756 = vrot.slane %v2509, 1
        %v2757 = vsel %vm1153, %v2755, %v2756
        %v2758 = vrot.slane %v2510, 1
        %v2759 = vrot.slane %v2511, 1
        %v2760 = vsel %vm1153, %v2758, %v2759
        %v2785 = vsel %vm1153, %v2726, 0.0
        %v2786 = vsel %vm1153, %v2729, 0.0
        %v2787 = vsel %vm1153, %v2732, 0.0
        %v2788 = vsel %vm1153, %v2735, 0.0
        %v2789 = vsel %vm1153, %v2738, 0.0
        %v2790 = vsel %vm1153, %v2741, 0.0
        %v2791 = vsel %vm1153, %v2744, 0.0
        %v2792 = vsel %vm1153, %v2747, 0.0
        %v2793 = vsel %vm1153, %v2750, 0.0
        %v2794 = vsel %vm1153, %v2753, 0.0
        %v2795 = vsel %vm1153, %v2756, 0.0
        %v2796 = vsel %vm1153, %v2759, 0.0
        %v2797 = vperm.slane %v2724, 0
        %v2798 = vmul.f32 %v2797, %v1155
        %v2799 = vmul.f32 %v2797, %v1228
        %v2800 = vmul.f32 %v2797, %v2727
        %v2801 = vmul.f32 %v2797, %v2785
        %v2802 = vmul.f32 %v2797, %v2730
        %v2803 = vmul.f32 %v2797, %v2786
        %v2804 = vmul.f32 %v2797, %v2733
        %v2805 = vmul.f32 %v2797, %v2787
        %v2806 = vmul.f32 %v2797, %v2736
        %v2807 = vmul.f32 %v2797, %v2788
        %v2808 = vmul.f32 %v2797, %v2739
        %v2809 = vmul.f32 %v2797, %v2789
        %v2810 = vmul.f32 %v2797, %v2742
        %v2811 = vmul.f32 %v2797, %v2790
        %v2812 = vmul.f32 %v2797, %v2745
        %v2813 = vmul.f32 %v2797, %v2791
        %v2814 = vmul.f32 %v2797, %v2748
        %v2815 = vmul.f32 %v2797, %v2792
        %v2816 = vmul.f32 %v2797, %v2751
        %v2817 = vmul.f32 %v2797, %v2793
        %v2818 = vmul.f32 %v2797, %v2754
        %v2819 = vmul.f32 %v2797, %v2794
        %v2820 = vmul.f32 %v2797, %v2757
        %v2821 = vmul.f32 %v2797, %v2795
        %v2822 = vmul.f32 %v2797, %v2760
        %v2823 = vmul.f32 %v2797, %v2796
        %v2824 = vadd.f32 %v2698, %v2798
        %v2825 = vadd.f32 %v2699, %v2799
        %v2826 = vadd.f32 %v2700, %v2800
        %v2827 = vadd.f32 %v2701, %v2801
        %v2828 = vadd.f32 %v2702, %v2802
        %v2829 = vadd.f32 %v2703, %v2803
        %v2830 = vadd.f32 %v2704, %v2804
        %v2831 = vadd.f32 %v2705, %v2805
        %v2832 = vadd.f32 %v2706, %v2806
        %v2833 = vadd.f32 %v2707, %v2807
        %v2834 = vadd.f32 %v2708, %v2808
        %v2835 = vadd.f32 %v2709, %v2809
        %v2836 = vadd.f32 %v2710, %v2810
        %v2837 = vadd.f32 %v2711, %v2811
        %v2838 = vadd.f32 %v2712, %v2812
        %v2839 = vadd.f32 %v2713, %v2813
        %v2840 = vadd.f32 %v2714, %v2814
        %v2841 = vadd.f32 %v2715, %v2815
        %v2842 = vadd.f32 %v2716, %v2816
        %v2843 = vadd.f32 %v2717, %v2817
        %v2844 = vadd.f32 %v2718, %v2818
        %v2845 = vadd.f32 %v2719, %v2819
        %v2846 = vadd.f32 %v2720, %v2820
        %v2847 = vadd.f32 %v2721, %v2821
        %v2848 = vadd.f32 %v2722, %v2822
        %v2849 = vadd.f32 %v2723, %v2823
        %s2850 = scalar_lea.vmem [#allocation8], 16
        %v2851 = vld [vmem:[%s2850] sm:$0x1]
        %v2856 = vrot.slane %v2512, 7
        %v2857 = vrot.slane %v2513, 7
        %v2858 = vsel %vm940, %v2856, %v2857
        %v2859 = vrot.slane %v2514, 7
        %v2860 = vrot.slane %v2515, 7
        %v2861 = vsel %vm940, %v2859, %v2860
        %v2866 = vsel %vm940, 0.0, %v2856
        %v2867 = vsel %vm940, 0.0, %v2859
        %v2868 = vperm.slane %v2851, 0
        %v2869 = vmul.f32 %v2868, %v1015
        %v2870 = vmul.f32 %v2868, %v942
        %v2871 = vmul.f32 %v2868, %v2606
        %v2872 = vmul.f32 %v2868, %v2548
        %v2873 = vmul.f32 %v2868, %v2607
        %v2874 = vmul.f32 %v2868, %v2551
        %v2875 = vmul.f32 %v2868, %v2608
        %v2876 = vmul.f32 %v2868, %v2554
        %v2877 = vmul.f32 %v2868, %v2609
        %v2878 = vmul.f32 %v2868, %v2557
        %v2879 = vmul.f32 %v2868, %v2610
        %v2880 = vmul.f32 %v2868, %v2560
        %v2881 = vmul.f32 %v2868, %v2611
        %v2882 = vmul.f32 %v2868, %v2563
        %v2883 = vmul.f32 %v2868, %v2612
        %v2884 = vmul.f32 %v2868, %v2566
        %v2885 = vmul.f32 %v2868, %v2613
        %v2886 = vmul.f32 %v2868, %v2569
        %v2887 = vmul.f32 %v2868, %v2614
        %v2888 = vmul.f32 %v2868, %v2572
        %v2889 = vmul.f32 %v2868, %v2615
        %v2890 = vmul.f32 %v2868, %v2575
        %v2891 = vmul.f32 %v2868, %v2616
        %v2892 = vmul.f32 %v2868, %v2578
        %v2893 = vmul.f32 %v2868, %v2617
        %v2894 = vmul.f32 %v2868, %v2581
        %v2895 = vmul.f32 %v2868, %v2866
        %v2896 = vmul.f32 %v2868, %v2858
        %v2897 = vmul.f32 %v2868, %v2867
        %v2898 = vmul.f32 %v2868, %v2861
        %v2899 = vadd.f32 %v2824, %v2869
        %v2900 = vadd.f32 %v2825, %v2870
        %v2901 = vadd.f32 %v2824, %v2871
        %v2902 = vadd.f32 %v2825, %v2872
        %v2903 = vadd.f32 %v2824, %v2873
        %v2904 = vadd.f32 %v2825, %v2874
        %v2905 = vadd.f32 %v2826, %v2875
        %v2906 = vadd.f32 %v2827, %v2876
        %v2907 = vadd.f32 %v2828, %v2877
        %v2908 = vadd.f32 %v2829, %v2878
        %v2909 = vadd.f32 %v2830, %v2879
        %v2910 = vadd.f32 %v2831, %v2880
        %v2911 = vadd.f32 %v2832, %v2881
        %v2912 = vadd.f32 %v2833, %v2882
        %v2913 = vadd.f32 %v2834, %v2883
        %v2914 = vadd.f32 %v2835, %v2884
        %v2915 = vadd.f32 %v2836, %v2885
        %v2916 = vadd.f32 %v2837, %v2886
        %v2917 = vadd.f32 %v2838, %v2887
        %v2918 = vadd.f32 %v2839, %v2888
        %v2919 = vadd.f32 %v2840, %v2889
        %v2920 = vadd.f32 %v2841, %v2890
        %v2921 = vadd.f32 %v2842, %v2891
        %v2922 = vadd.f32 %v2843, %v2892
        %v2923 = vadd.f32 %v2844, %v2893
        %v2924 = vadd.f32 %v2845, %v2894
        %v2925 = vadd.f32 %v2846, %v2895
        %v2926 = vadd.f32 %v2847, %v2896
        %v2927 = vadd.f32 %v2848, %v2897
        %v2928 = vadd.f32 %v2849, %v2898
        %v2929 = vld [vmem:[%s2850 + $0x1] sm:$0x1]
        %v2930 = vperm.slane %v2929, 0
        %v2931 = vmul.f32 %v2930, 0.0
        %v2932 = vmul.f32 %v2930, %v2488
        %v2933 = vmul.f32 %v2930, %v2489
        %v2934 = vmul.f32 %v2930, %v2490
        %v2935 = vmul.f32 %v2930, %v2491
        %v2936 = vmul.f32 %v2930, %v2492
        %v2937 = vmul.f32 %v2930, %v2493
        %v2938 = vmul.f32 %v2930, %v2494
        %v2939 = vmul.f32 %v2930, %v2495
        %v2940 = vmul.f32 %v2930, %v2496
        %v2941 = vmul.f32 %v2930, %v2497
        %v2942 = vmul.f32 %v2930, %v2498
        %v2943 = vmul.f32 %v2930, %v2499
        %v2944 = vmul.f32 %v2930, %v2500
        %v2945 = vmul.f32 %v2930, %v2501
        %v2946 = vmul.f32 %v2930, %v2502
        %v2947 = vmul.f32 %v2930, %v2503
        %v2948 = vmul.f32 %v2930, %v2504
        %v2949 = vmul.f32 %v2930, %v2505
        %v2950 = vmul.f32 %v2930, %v2506
        %v2951 = vmul.f32 %v2930, %v2507
        %v2952 = vmul.f32 %v2930, %v2508
        %v2953 = vmul.f32 %v2930, %v2509
        %v2954 = vmul.f32 %v2930, %v2510
        %v2955 = vmul.f32 %v2930, %v2511
        %v2956 = vmul.f32 %v2930, %v2512
        %v2957 = vmul.f32 %v2930, %v2513
        %v2958 = vmul.f32 %v2930, %v2514
        %v2959 = vmul.f32 %v2930, %v2515
        %v2960 = vadd.f32 %v2899, %v2931
        %v2961 = vadd.f32 %v2900, %v2931
        %v2962 = vadd.f32 %v2901, %v2932
        %v2963 = vadd.f32 %v2902, %v2933
        %v2964 = vadd.f32 %v2903, %v2934
        %v2965 = vadd.f32 %v2904, %v2935
        %v2966 = vadd.f32 %v2905, %v2936
        %v2967 = vadd.f32 %v2906, %v2937
        %v2968 = vadd.f32 %v2907, %v2938
        %v2969 = vadd.f32 %v2908, %v2939
        %v2970 = vadd.f32 %v2909, %v2940
        %v2971 = vadd.f32 %v2910, %v2941
        %v2972 = vadd.f32 %v2911, %v2942
        %v2973 = vadd.f32 %v2912, %v2943
        %v2974 = vadd.f32 %v2913, %v2944
        %v2975 = vadd.f32 %v2914, %v2945
        %v2976 = vadd.f32 %v2915, %v2946
        %v2977 = vadd.f32 %v2916, %v2947
        %v2978 = vadd.f32 %v2917, %v2948
        %v2979 = vadd.f32 %v2918, %v2949
        %v2980 = vadd.f32 %v2919, %v2950
        %v2981 = vadd.f32 %v2920, %v2951
        %v2982 = vadd.f32 %v2921, %v2952
        %v2983 = vadd.f32 %v2922, %v2953
        %v2984 = vadd.f32 %v2923, %v2954
        %v2985 = vadd.f32 %v2924, %v2955
        %v2986 = vadd.f32 %v2925, %v2956
        %v2987 = vadd.f32 %v2926, %v2957
        %v2988 = vadd.f32 %v2927, %v2958
        %v2989 = vadd.f32 %v2928, %v2959
        %v2990 = vld [vmem:[%s2850 + $0x2] sm:$0x1]
        %v2991 = vrot.slane %v2512, 1
        %v2992 = vrot.slane %v2513, 1
        %v2993 = vsel %vm1153, %v2991, %v2992
        %v2994 = vrot.slane %v2514, 1
        %v2995 = vrot.slane %v2515, 1
        %v2996 = vsel %vm1153, %v2994, %v2995
        %v3001 = vsel %vm1153, %v2992, 0.0
        %v3002 = vsel %vm1153, %v2995, 0.0
        %v3003 = vperm.slane %v2990, 0
        %v3004 = vmul.f32 %v3003, %v1155
        %v3005 = vmul.f32 %v3003, %v1228
        %v3006 = vmul.f32 %v3003, %v2727
        %v3007 = vmul.f32 %v3003, %v2785
        %v3008 = vmul.f32 %v3003, %v2730
        %v3009 = vmul.f32 %v3003, %v2786
        %v3010 = vmul.f32 %v3003, %v2733
        %v3011 = vmul.f32 %v3003, %v2787
        %v3012 = vmul.f32 %v3003, %v2736
        %v3013 = vmul.f32 %v3003, %v2788
        %v3014 = vmul.f32 %v3003, %v2739
        %v3015 = vmul.f32 %v3003, %v2789
        %v3016 = vmul.f32 %v3003, %v2742
        %v3017 = vmul.f32 %v3003, %v2790
        %v3018 = vmul.f32 %v3003, %v2745
        %v3019 = vmul.f32 %v3003, %v2791
        %v3020 = vmul.f32 %v3003, %v2748
        %v3021 = vmul.f32 %v3003, %v2792
        %v3022 = vmul.f32 %v3003, %v2751
        %v3023 = vmul.f32 %v3003, %v2793
        %v3024 = vmul.f32 %v3003, %v2754
        %v3025 = vmul.f32 %v3003, %v2794
        %v3026 = vmul.f32 %v3003, %v2757
        %v3027 = vmul.f32 %v3003, %v2795
        %v3028 = vmul.f32 %v3003, %v2760
        %v3029 = vmul.f32 %v3003, %v2796
        %v3030 = vmul.f32 %v3003, %v2993
        %v3031 = vmul.f32 %v3003, %v3001
        %v3032 = vmul.f32 %v3003, %v2996
        %v3033 = vmul.f32 %v3003, %v3002
        %v3034 = vadd.f32 %v2960, %v3004
        %v3035 = vadd.f32 %v2961, %v3005
        %v3036 = vadd.f32 %v2962, %v3006
        %v3037 = vadd.f32 %v2963, %v3007
        %v3038 = vadd.f32 %v2964, %v3008
        %v3039 = vadd.f32 %v2965, %v3009
        %v3040 = vadd.f32 %v2966, %v3010
        %v3041 = vadd.f32 %v2967, %v3011
        %v3042 = vadd.f32 %v2968, %v3012
        %v3043 = vadd.f32 %v2969, %v3013
        %v3044 = vadd.f32 %v2970, %v3014
        %v3045 = vadd.f32 %v2971, %v3015
        %v3046 = vadd.f32 %v2972, %v3016
        %v3047 = vadd.f32 %v2973, %v3017
        %v3048 = vadd.f32 %v2974, %v3018
        %v3049 = vadd.f32 %v2975, %v3019
        %v3050 = vadd.f32 %v2976, %v3020
        %v3051 = vadd.f32 %v2977, %v3021
        %v3052 = vadd.f32 %v2978, %v3022
        %v3053 = vadd.f32 %v2979, %v3023
        %v3054 = vadd.f32 %v2980, %v3024
        %v3055 = vadd.f32 %v2981, %v3025
        %v3056 = vadd.f32 %v2982, %v3026
        %v3057 = vadd.f32 %v2983, %v3027
        %v3058 = vadd.f32 %v2984, %v3028
        %v3059 = vadd.f32 %v2985, %v3029
        %v3060 = vadd.f32 %v2986, %v3030
        %v3061 = vadd.f32 %v2987, %v3031
        %v3062 = vadd.f32 %v2988, %v3032
        %v3063 = vadd.f32 %v2989, %v3033
        %s3064 = scalar_lea.vmem [#allocation8], 20
        %v3065 = vld [vmem:[%s3064] sm:$0x1]
        %v3070 = vrot.slane %v2516, 7
        %v3071 = vrot.slane %v2517, 7
        %v3072 = vsel %vm940, %v3070, %v3071
        %v3073 = vrot.slane %v2518, 7
        %v3074 = vrot.slane %v2519, 7
        %v3075 = vsel %vm940, %v3073, %v3074
        %v3080 = vsel %vm940, 0.0, %v3070
        %v3081 = vsel %vm940, 0.0, %v3073
        %v3082 = vperm.slane %v3065, 0
        %v3083 = vmul.f32 %v3082, %v2606
        %v3084 = vmul.f32 %v3082, %v2548
        %v3085 = vmul.f32 %v3082, %v2607
        %v3086 = vmul.f32 %v3082, %v2551
        %v3087 = vmul.f32 %v3082, %v2608
        %v3088 = vmul.f32 %v3082, %v2554
        %v3089 = vmul.f32 %v3082, %v2609
        %v3090 = vmul.f32 %v3082, %v2557
        %v3091 = vmul.f32 %v3082, %v2610
        %v3092 = vmul.f32 %v3082, %v2560
        %v3093 = vmul.f32 %v3082, %v2611
        %v3094 = vmul.f32 %v3082, %v2563
        %v3095 = vmul.f32 %v3082, %v2612
        %v3096 = vmul.f32 %v3082, %v2566
        %v3097 = vmul.f32 %v3082, %v2613
        %v3098 = vmul.f32 %v3082, %v2569
        %v3099 = vmul.f32 %v3082, %v2614
        %v3100 = vmul.f32 %v3082, %v2572
        %v3101 = vmul.f32 %v3082, %v2615
        %v3102 = vmul.f32 %v3082, %v2575
        %v3103 = vmul.f32 %v3082, %v2616
        %v3104 = vmul.f32 %v3082, %v2578
        %v3105 = vmul.f32 %v3082, %v2617
        %v3106 = vmul.f32 %v3082, %v2581
        %v3107 = vmul.f32 %v3082, %v2866
        %v3108 = vmul.f32 %v3082, %v2858
        %v3109 = vmul.f32 %v3082, %v2867
        %v3110 = vmul.f32 %v3082, %v2861
        %v3111 = vmul.f32 %v3082, %v3080
        %v3112 = vmul.f32 %v3082, %v3072
        %v3113 = vmul.f32 %v3082, %v3081
        %v3114 = vmul.f32 %v3082, %v3075
        %v3115 = vadd.f32 %v3034, %v3083
        %v3116 = vadd.f32 %v3035, %v3084
        %v3117 = vadd.f32 %v3034, %v3085
        %v3118 = vadd.f32 %v3035, %v3086
        %v3119 = vadd.f32 %v3036, %v3087
        %v3120 = vadd.f32 %v3037, %v3088
        %v3121 = vadd.f32 %v3038, %v3089
        %v3122 = vadd.f32 %v3039, %v3090
        %v3123 = vadd.f32 %v3040, %v3091
        %v3124 = vadd.f32 %v3041, %v3092
        %v3125 = vadd.f32 %v3042, %v3093
        %v3126 = vadd.f32 %v3043, %v3094
        %v3127 = vadd.f32 %v3044, %v3095
        %v3128 = vadd.f32 %v3045, %v3096
        %v3129 = vadd.f32 %v3046, %v3097
        %v3130 = vadd.f32 %v3047, %v3098
        %v3131 = vadd.f32 %v3048, %v3099
        %v3132 = vadd.f32 %v3049, %v3100
        %v3133 = vadd.f32 %v3050, %v3101
        %v3134 = vadd.f32 %v3051, %v3102
        %v3135 = vadd.f32 %v3052, %v3103
        %v3136 = vadd.f32 %v3053, %v3104
        %v3137 = vadd.f32 %v3054, %v3105
        %v3138 = vadd.f32 %v3055, %v3106
        %v3139 = vadd.f32 %v3056, %v3107
        %v3140 = vadd.f32 %v3057, %v3108
        %v3141 = vadd.f32 %v3058, %v3109
        %v3142 = vadd.f32 %v3059, %v3110
        %v3143 = vadd.f32 %v3060, %v3111
        %v3144 = vadd.f32 %v3061, %v3112
        %v3145 = vadd.f32 %v3062, %v3113
        %v3146 = vadd.f32 %v3063, %v3114
        %v3147 = vld [vmem:[%s3064 + $0x1] sm:$0x1]
        %v3148 = vperm.slane %v3147, 0
        %v3149 = vmul.f32 %v3148, %v2488
        %v3150 = vmul.f32 %v3148, %v2489
        %v3151 = vmul.f32 %v3148, %v2490
        %v3152 = vmul.f32 %v3148, %v2491
        %v3153 = vmul.f32 %v3148, %v2492
        %v3154 = vmul.f32 %v3148, %v2493
        %v3155 = vmul.f32 %v3148, %v2494
        %v3156 = vmul.f32 %v3148, %v2495
        %v3157 = vmul.f32 %v3148, %v2496
        %v3158 = vmul.f32 %v3148, %v2497
        %v3159 = vmul.f32 %v3148, %v2498
        %v3160 = vmul.f32 %v3148, %v2499
        %v3161 = vmul.f32 %v3148, %v2500
        %v3162 = vmul.f32 %v3148, %v2501
        %v3163 = vmul.f32 %v3148, %v2502
        %v3164 = vmul.f32 %v3148, %v2503
        %v3165 = vmul.f32 %v3148, %v2504
        %v3166 = vmul.f32 %v3148, %v2505
        %v3167 = vmul.f32 %v3148, %v2506
        %v3168 = vmul.f32 %v3148, %v2507
        %v3169 = vmul.f32 %v3148, %v2508
        %v3170 = vmul.f32 %v3148, %v2509
        %v3171 = vmul.f32 %v3148, %v2510
        %v3172 = vmul.f32 %v3148, %v2511
        %v3173 = vmul.f32 %v3148, %v2512
        %v3174 = vmul.f32 %v3148, %v2513
        %v3175 = vmul.f32 %v3148, %v2514
        %v3176 = vmul.f32 %v3148, %v2515
        %v3177 = vmul.f32 %v3148, %v2516
        %v3178 = vmul.f32 %v3148, %v2517
        %v3179 = vmul.f32 %v3148, %v2518
        %v3180 = vmul.f32 %v3148, %v2519
        %v3181 = vadd.f32 %v3115, %v3149
        %v3182 = vadd.f32 %v3116, %v3150
        %v3183 = vadd.f32 %v3117, %v3151
        %v3184 = vadd.f32 %v3118, %v3152
        %v3185 = vadd.f32 %v3119, %v3153
        %v3186 = vadd.f32 %v3120, %v3154
        %v3187 = vadd.f32 %v3121, %v3155
        %v3188 = vadd.f32 %v3122, %v3156
        %v3189 = vadd.f32 %v3123, %v3157
        %v3190 = vadd.f32 %v3124, %v3158
        %v3191 = vadd.f32 %v3125, %v3159
        %v3192 = vadd.f32 %v3126, %v3160
        %v3193 = vadd.f32 %v3127, %v3161
        %v3194 = vadd.f32 %v3128, %v3162
        %v3195 = vadd.f32 %v3129, %v3163
        %v3196 = vadd.f32 %v3130, %v3164
        %v3197 = vadd.f32 %v3131, %v3165
        %v3198 = vadd.f32 %v3132, %v3166
        %v3199 = vadd.f32 %v3133, %v3167
        %v3200 = vadd.f32 %v3134, %v3168
        %v3201 = vadd.f32 %v3135, %v3169
        %v3202 = vadd.f32 %v3136, %v3170
        %v3203 = vadd.f32 %v3137, %v3171
        %v3204 = vadd.f32 %v3138, %v3172
        %v3205 = vadd.f32 %v3139, %v3173
        %v3206 = vadd.f32 %v3140, %v3174
        %v3207 = vadd.f32 %v3141, %v3175
        %v3208 = vadd.f32 %v3142, %v3176
        %v3209 = vadd.f32 %v3143, %v3177
        %v3210 = vadd.f32 %v3144, %v3178
        %v3211 = vadd.f32 %v3145, %v3179
        %v3212 = vadd.f32 %v3146, %v3180
        %v3213 = vld [vmem:[%s3064 + $0x2] sm:$0x1]
        %v3214 = vrot.slane %v2516, 1
        %v3215 = vrot.slane %v2517, 1
        %v3216 = vsel %vm1153, %v3214, %v3215
        %v3217 = vrot.slane %v2518, 1
        %v3218 = vrot.slane %v2519, 1
        %v3219 = vsel %vm1153, %v3217, %v3218
        %v3224 = vsel %vm1153, %v3215, 0.0
        %v3225 = vsel %vm1153, %v3218, 0.0
        %v3226 = vperm.slane %v3213, 0
        %v3227 = vmul.f32 %v3226, %v2727
        %v3228 = vmul.f32 %v3226, %v2785
        %v3229 = vmul.f32 %v3226, %v2730
        %v3230 = vmul.f32 %v3226, %v2786
        %v3231 = vmul.f32 %v3226, %v2733
        %v3232 = vmul.f32 %v3226, %v2787
        %v3233 = vmul.f32 %v3226, %v2736
        %v3234 = vmul.f32 %v3226, %v2788
        %v3235 = vmul.f32 %v3226, %v2739
        %v3236 = vmul.f32 %v3226, %v2789
        %v3237 = vmul.f32 %v3226, %v2742
        %v3238 = vmul.f32 %v3226, %v2790
        %v3239 = vmul.f32 %v3226, %v2745
        %v3240 = vmul.f32 %v3226, %v2791
        %v3241 = vmul.f32 %v3226, %v2748
        %v3242 = vmul.f32 %v3226, %v2792
        %v3243 = vmul.f32 %v3226, %v2751
        %v3244 = vmul.f32 %v3226, %v2793
        %v3245 = vmul.f32 %v3226, %v2754
        %v3246 = vmul.f32 %v3226, %v2794
        %v3247 = vmul.f32 %v3226, %v2757
        %v3248 = vmul.f32 %v3226, %v2795
        %v3249 = vmul.f32 %v3226, %v2760
        %v3250 = vmul.f32 %v3226, %v2796
        %v3251 = vmul.f32 %v3226, %v2993
        %v3252 = vmul.f32 %v3226, %v3001
        %v3253 = vmul.f32 %v3226, %v2996
        %v3254 = vmul.f32 %v3226, %v3002
        %v3255 = vmul.f32 %v3226, %v3216
        %v3256 = vmul.f32 %v3226, %v3224
        %v3257 = vmul.f32 %v3226, %v3219
        %v3258 = vmul.f32 %v3226, %v3225
        %v3259 = vadd.f32 %v3181, %v3227
        %v3260 = vadd.f32 %v3182, %v3228
        %v3261 = vadd.f32 %v3183, %v3229
        %v3262 = vadd.f32 %v3184, %v3230
        %v3263 = vadd.f32 %v3185, %v3231
        %v3264 = vadd.f32 %v3186, %v3232
        %v3265 = vadd.f32 %v3187, %v3233
        %v3266 = vadd.f32 %v3188, %v3234
        %v3267 = vadd.f32 %v3189, %v3235
        %v3268 = vadd.f32 %v3190, %v3236
        %v3269 = vadd.f32 %v3191, %v3237
        %v3270 = vadd.f32 %v3192, %v3238
        %v3271 = vadd.f32 %v3193, %v3239
        %v3272 = vadd.f32 %v3194, %v3240
        %v3273 = vadd.f32 %v3195, %v3241
        %v3274 = vadd.f32 %v3196, %v3242
        %v3275 = vadd.f32 %v3197, %v3243
        %v3276 = vadd.f32 %v3198, %v3244
        %v3277 = vadd.f32 %v3199, %v3245
        %v3278 = vadd.f32 %v3200, %v3246
        %v3279 = vadd.f32 %v3201, %v3247
        %v3280 = vadd.f32 %v3202, %v3248
        %v3281 = vadd.f32 %v3203, %v3249
        %v3282 = vadd.f32 %v3204, %v3250
        %v3283 = vadd.f32 %v3205, %v3251
        %v3284 = vadd.f32 %v3206, %v3252
        %v3285 = vadd.f32 %v3207, %v3253
        %v3286 = vadd.f32 %v3208, %v3254
        %v3287 = vadd.f32 %v3209, %v3255
        %v3288 = vadd.f32 %v3210, %v3256
        %v3289 = vadd.f32 %v3211, %v3257
        %v3290 = vadd.f32 %v3212, %v3258
        %v3291 = vld [vmem:[%s5 + $0x1] sm:$0x1]
        %v3292 = vperm.slane %v3291, 0
        %v3293 = vmul.f32 %v3259, %v3292
        %v3294 = vmul.f32 %v3260, %v3292
        %v3295 = vmul.f32 %v3261, %v3292
        %v3296 = vmul.f32 %v3262, %v3292
        %v3297 = vmul.f32 %v3263, %v3292
        %v3298 = vmul.f32 %v3264, %v3292
        %v3299 = vmul.f32 %v3265, %v3292
        %v3300 = vmul.f32 %v3266, %v3292
        %v3301 = vmul.f32 %v3267, %v3292
        %v3302 = vmul.f32 %v3268, %v3292
        %v3303 = vmul.f32 %v3269, %v3292
        %v3304 = vmul.f32 %v3270, %v3292
        %v3305 = vmul.f32 %v3271, %v3292
        %v3306 = vmul.f32 %v3272, %v3292
        %v3307 = vmul.f32 %v3273, %v3292
        %v3308 = vmul.f32 %v3274, %v3292
        %v3309 = vmul.f32 %v3275, %v3292
        %v3310 = vmul.f32 %v3276, %v3292
        %v3311 = vmul.f32 %v3277, %v3292
        %v3312 = vmul.f32 %v3278, %v3292
        %v3313 = vmul.f32 %v3279, %v3292
        %v3314 = vmul.f32 %v3280, %v3292
        %v3315 = vmul.f32 %v3281, %v3292
        %v3316 = vmul.f32 %v3282, %v3292
        %v3317 = vmul.f32 %v3283, %v3292
        %v3318 = vmul.f32 %v3284, %v3292
        %v3319 = vmul.f32 %v3285, %v3292
        %v3320 = vmul.f32 %v3286, %v3292
        %v3321 = vmul.f32 %v3287, %v3292
        %v3322 = vmul.f32 %v3288, %v3292
        %v3323 = vmul.f32 %v3289, %v3292
        %v3324 = vmul.f32 %v3290, %v3292
        %v3325 = vld [vmem:[#allocation12 + $0x1] sm:$0x1]
        %v3326 = vperm.slane %v3325, 0
        %v3327 = vadd.f32 %v3293, %v3326
        %v3328 = vadd.f32 %v3294, %v3326
        %v3329 = vadd.f32 %v3295, %v3326
        %v3330 = vadd.f32 %v3296, %v3326
        %v3331 = vadd.f32 %v3297, %v3326
        %v3332 = vadd.f32 %v3298, %v3326
        %v3333 = vadd.f32 %v3299, %v3326
        %v3334 = vadd.f32 %v3300, %v3326
        %v3335 = vadd.f32 %v3301, %v3326
        %v3336 = vadd.f32 %v3302, %v3326
        %v3337 = vadd.f32 %v3303, %v3326
        %v3338 = vadd.f32 %v3304, %v3326
        %v3339 = vadd.f32 %v3305, %v3326
        %v3340 = vadd.f32 %v3306, %v3326
        %v3341 = vadd.f32 %v3307, %v3326
        %v3342 = vadd.f32 %v3308, %v3326
        %v3343 = vadd.f32 %v3309, %v3326
        %v3344 = vadd.f32 %v3310, %v3326
        %v3345 = vadd.f32 %v3311, %v3326
        %v3346 = vadd.f32 %v3312, %v3326
        %v3347 = vadd.f32 %v3313, %v3326
        %v3348 = vadd.f32 %v3314, %v3326
        %v3349 = vadd.f32 %v3315, %v3326
        %v3350 = vadd.f32 %v3316, %v3326
        %v3351 = vadd.f32 %v3317, %v3326
        %v3352 = vadd.f32 %v3318, %v3326
        %v3353 = vadd.f32 %v3319, %v3326
        %v3354 = vadd.f32 %v3320, %v3326
        %v3355 = vadd.f32 %v3321, %v3326
        %v3356 = vadd.f32 %v3322, %v3326
        %v3357 = vadd.f32 %v3323, %v3326
        %v3358 = vadd.f32 %v3324, %v3326
        %s3359 = sld [smem:[#allocation15 + $0x1]]
        %vm3360 = vcmp.ge.f32.partialorder %v3327, 0.0
        %vm3361 = vcmp.ge.f32.partialorder %v3328, 0.0
        %vm3362 = vcmp.ge.f32.partialorder %v3329, 0.0
        %vm3363 = vcmp.ge.f32.partialorder %v3330, 0.0
        %vm3364 = vcmp.ge.f32.partialorder %v3331, 0.0
        %vm3365 = vcmp.ge.f32.partialorder %v3332, 0.0
        %vm3366 = vcmp.ge.f32.partialorder %v3333, 0.0
        %vm3367 = vcmp.ge.f32.partialorder %v3334, 0.0
        %vm3368 = vcmp.ge.f32.partialorder %v3335, 0.0
        %vm3369 = vcmp.ge.f32.partialorder %v3336, 0.0
        %vm3370 = vcmp.ge.f32.partialorder %v3337, 0.0
        %vm3371 = vcmp.ge.f32.partialorder %v3338, 0.0
        %vm3372 = vcmp.ge.f32.partialorder %v3339, 0.0
        %vm3373 = vcmp.ge.f32.partialorder %v3340, 0.0
        %vm3374 = vcmp.ge.f32.partialorder %v3341, 0.0
        %vm3375 = vcmp.ge.f32.partialorder %v3342, 0.0
        %vm3376 = vcmp.ge.f32.partialorder %v3343, 0.0
        %vm3377 = vcmp.ge.f32.partialorder %v3344, 0.0
        %vm3378 = vcmp.ge.f32.partialorder %v3345, 0.0
        %vm3379 = vcmp.ge.f32.partialorder %v3346, 0.0
        %vm3380 = vcmp.ge.f32.partialorder %v3347, 0.0
        %vm3381 = vcmp.ge.f32.partialorder %v3348, 0.0
        %vm3382 = vcmp.ge.f32.partialorder %v3349, 0.0
        %vm3383 = vcmp.ge.f32.partialorder %v3350, 0.0
        %vm3384 = vcmp.ge.f32.partialorder %v3351, 0.0
        %vm3385 = vcmp.ge.f32.partialorder %v3352, 0.0
        %vm3386 = vcmp.ge.f32.partialorder %v3353, 0.0
        %vm3387 = vcmp.ge.f32.partialorder %v3354, 0.0
        %vm3388 = vcmp.ge.f32.partialorder %v3355, 0.0
        %vm3389 = vcmp.ge.f32.partialorder %v3356, 0.0
        %vm3390 = vcmp.ge.f32.partialorder %v3357, 0.0
        %vm3391 = vcmp.ge.f32.partialorder %v3358, 0.0
        %v3392 = vstv %s3359
        %v3393 = vmul.f32 %v3392, %v3327
        %v3394 = vmul.f32 %v3392, %v3328
        %v3395 = vmul.f32 %v3392, %v3329
        %v3396 = vmul.f32 %v3392, %v3330
        %v3397 = vmul.f32 %v3392, %v3331
        %v3398 = vmul.f32 %v3392, %v3332
        %v3399 = vmul.f32 %v3392, %v3333
        %v3400 = vmul.f32 %v3392, %v3334
        %v3401 = vmul.f32 %v3392, %v3335
        %v3402 = vmul.f32 %v3392, %v3336
        %v3403 = vmul.f32 %v3392, %v3337
        %v3404 = vmul.f32 %v3392, %v3338
        %v3405 = vmul.f32 %v3392, %v3339
        %v3406 = vmul.f32 %v3392, %v3340
        %v3407 = vmul.f32 %v3392, %v3341
        %v3408 = vmul.f32 %v3392, %v3342
        %v3409 = vmul.f32 %v3392, %v3343
        %v3410 = vmul.f32 %v3392, %v3344
        %v3411 = vmul.f32 %v3392, %v3345
        %v3412 = vmul.f32 %v3392, %v3346
        %v3413 = vmul.f32 %v3392, %v3347
        %v3414 = vmul.f32 %v3392, %v3348
        %v3415 = vmul.f32 %v3392, %v3349
        %v3416 = vmul.f32 %v3392, %v3350
        %v3417 = vmul.f32 %v3392, %v3351
        %v3418 = vmul.f32 %v3392, %v3352
        %v3419 = vmul.f32 %v3392, %v3353
        %v3420 = vmul.f32 %v3392, %v3354
        %v3421 = vmul.f32 %v3392, %v3355
        %v3422 = vmul.f32 %v3392, %v3356
        %v3423 = vmul.f32 %v3392, %v3357
        %v3424 = vmul.f32 %v3392, %v3358
        %v3425 = vsel %vm3360, %v3327, %v3393
        %v3426 = vsel %vm3361, %v3328, %v3394
        %v3427 = vsel %vm3362, %v3329, %v3395
        %v3428 = vsel %vm3363, %v3330, %v3396
        %v3429 = vsel %vm3364, %v3331, %v3397
        %v3430 = vsel %vm3365, %v3332, %v3398
        %v3431 = vsel %vm3366, %v3333, %v3399
        %v3432 = vsel %vm3367, %v3334, %v3400
        %v3433 = vsel %vm3368, %v3335, %v3401
        %v3434 = vsel %vm3369, %v3336, %v3402
        %v3435 = vsel %vm3370, %v3337, %v3403
        %v3436 = vsel %vm3371, %v3338, %v3404
        %v3437 = vsel %vm3372, %v3339, %v3405
        %v3438 = vsel %vm3373, %v3340, %v3406
        %v3439 = vsel %vm3374, %v3341, %v3407
        %v3440 = vsel %vm3375, %v3342, %v3408
        %v3441 = vsel %vm3376, %v3343, %v3409
        %v3442 = vsel %vm3377, %v3344, %v3410
        %v3443 = vsel %vm3378, %v3345, %v3411
        %v3444 = vsel %vm3379, %v3346, %v3412
        %v3445 = vsel %vm3380, %v3347, %v3413
        %v3446 = vsel %vm3381, %v3348, %v3414
        %v3447 = vsel %vm3382, %v3349, %v3415
        %v3448 = vsel %vm3383, %v3350, %v3416
        %v3449 = vsel %vm3384, %v3351, %v3417
        %v3450 = vsel %vm3385, %v3352, %v3418
        %v3451 = vsel %vm3386, %v3353, %v3419
        %v3452 = vsel %vm3387, %v3354, %v3420
        %v3453 = vsel %vm3388, %v3355, %v3421
        %v3454 = vsel %vm3389, %v3356, %v3422
        %v3455 = vsel %vm3390, %v3357, %v3423
        %v3456 = vsel %vm3391, %v3358, %v3424
        %s3457 = scalar_lea.vmem [#allocation6], 32
        %v3458 = vld [vmem:[%s3457] sm:$0xff]
        %v3459 = vld [vmem:[%s3457 + $0x8] sm:$0xff]
        %v3460 = vld [vmem:[%s3457 + $0x10] sm:$0xff]
        %v3461 = vld [vmem:[%s3457 + $0x18] sm:$0xff]
        %v3463 = vsel %vm534, %v3425, 0
        %v3466 = vsel %vm534, %v3426, 0
        %v3469 = vsel %vm534, %v3427, 0
        %v3472 = vsel %vm534, %v3428, 0
        %v3475 = vsel %vm534, %v3429, 0
        %v3478 = vsel %vm534, %v3430, 0
        %v3481 = vsel %vm534, %v3431, 0
        %v3484 = vsel %vm534, %v3432, 0
        %v3487 = vsel %vm534, %v3433, 0
        %v3490 = vsel %vm534, %v3434, 0
        %v3493 = vsel %vm534, %v3435, 0
        %v3496 = vsel %vm534, %v3436, 0
        %v3499 = vsel %vm534, %v3437, 0
        %v3502 = vsel %vm534, %v3438, 0
        %v3505 = vsel %vm534, %v3439, 0
        %v3508 = vsel %vm534, %v3440, 0
        %v3511 = vsel %vm534, %v3441, 0
        %v3514 = vsel %vm534, %v3442, 0
        %v3517 = vsel %vm534, %v3443, 0
        %v3520 = vsel %vm534, %v3444, 0
        %v3523 = vsel %vm534, %v3445, 0
        %v3526 = vsel %vm534, %v3446, 0
        %v3529 = vsel %vm534, %v3447, 0
        %v3532 = vsel %vm534, %v3448, 0
        %v3535 = vsel %vm534, %v3449, 0
        %v3538 = vsel %vm534, %v3450, 0
        %v3541 = vsel %vm534, %v3451, 0
        %v3544 = vsel %vm534, %v3452, 0
        %v3547 = vsel %vm534, %v3453, 0
        %v3550 = vsel %vm534, %v3454, 0
        %v3553 = vsel %vm534, %v3455, 0
        %v3556 = vsel %vm534, %v3456, 0
        %3558 = vmatpush.msra.mxu0 0.0
        %3559 = vmatpush.msra.mxu0 0.0
        %3560 = vmatpush.msra.mxu0 0.0
        %3561 = vmatpush.msra.mxu0 0.0
        %3562 = vmatpush.msra.mxu0 0.0
        %3563 = vmatpush.msra.mxu0 0.0
        %3564 = vmatpush.msra.mxu0 0.0
        %3565 = vmatpush.msra.mxu0 0.0
        %3566 = vmatpush.msra.mxu0 0.0
        %3567 = vmatpush.msra.mxu0 0.0
        %3568 = vmatpush.msra.mxu0 0.0
        %3569 = vmatpush.msra.mxu0 0.0
        %3570 = vmatpush.msra.mxu0 %v3461
        %3571 = vmatpush.msra.mxu0 %v3460
        %3572 = vmatpush.msra.mxu0 %v3459
        %3573 = vmatpush.msra.mxu0 %v3458
        %3574 = vmatmul.f32.gmra.mxu0 %v3463
        %v3575 = vpop.f32.mrf.mxu0
        %v3576 = vadd.f32 0.0, %v3575
        %3577 = vmatmul.f32.gmra.mxu0 %v3466
        %v3578 = vpop.f32.mrf.mxu0
        %v3579 = vadd.f32 0.0, %v3578
        %3580 = vmatmul.f32.gmra.mxu0 %v3469
        %v3581 = vpop.f32.mrf.mxu0
        %v3582 = vadd.f32 0.0, %v3581
        %3583 = vmatmul.f32.gmra.mxu0 %v3472
        %v3584 = vpop.f32.mrf.mxu0
        %v3585 = vadd.f32 0.0, %v3584
        %3586 = vmatmul.f32.gmra.mxu0 %v3475
        %v3587 = vpop.f32.mrf.mxu0
        %v3588 = vadd.f32 0.0, %v3587
        %3589 = vmatmul.f32.gmra.mxu0 %v3478
        %v3590 = vpop.f32.mrf.mxu0
        %v3591 = vadd.f32 0.0, %v3590
        %3592 = vmatmul.f32.gmra.mxu0 %v3481
        %v3593 = vpop.f32.mrf.mxu0
        %v3594 = vadd.f32 0.0, %v3593
        %3595 = vmatmul.f32.gmra.mxu0 %v3484
        %v3596 = vpop.f32.mrf.mxu0
        %v3597 = vadd.f32 0.0, %v3596
        %3598 = vmatmul.f32.gmra.mxu0 %v3487
        %v3599 = vpop.f32.mrf.mxu0
        %v3600 = vadd.f32 0.0, %v3599
        %3601 = vmatmul.f32.gmra.mxu0 %v3490
        %v3602 = vpop.f32.mrf.mxu0
        %v3603 = vadd.f32 0.0, %v3602
        %3604 = vmatmul.f32.gmra.mxu0 %v3493
        %v3605 = vpop.f32.mrf.mxu0
        %v3606 = vadd.f32 0.0, %v3605
        %3607 = vmatmul.f32.gmra.mxu0 %v3496
        %v3608 = vpop.f32.mrf.mxu0
        %v3609 = vadd.f32 0.0, %v3608
        %3610 = vmatmul.f32.gmra.mxu0 %v3499
        %v3611 = vpop.f32.mrf.mxu0
        %v3612 = vadd.f32 0.0, %v3611
        %3613 = vmatmul.f32.gmra.mxu0 %v3502
        %v3614 = vpop.f32.mrf.mxu0
        %v3615 = vadd.f32 0.0, %v3614
        %3616 = vmatmul.f32.gmra.mxu0 %v3505
        %v3617 = vpop.f32.mrf.mxu0
        %v3618 = vadd.f32 0.0, %v3617
        %3619 = vmatmul.f32.gmra.mxu0 %v3508
        %v3620 = vpop.f32.mrf.mxu0
        %v3621 = vadd.f32 0.0, %v3620
        %3622 = vmatmul.f32.gmra.mxu0 %v3511
        %v3623 = vpop.f32.mrf.mxu0
        %v3624 = vadd.f32 0.0, %v3623
        %3625 = vmatmul.f32.gmra.mxu0 %v3514
        %v3626 = vpop.f32.mrf.mxu0
        %v3627 = vadd.f32 0.0, %v3626
        %3628 = vmatmul.f32.gmra.mxu0 %v3517
        %v3629 = vpop.f32.mrf.mxu0
        %v3630 = vadd.f32 0.0, %v3629
        %3631 = vmatmul.f32.gmra.mxu0 %v3520
        %v3632 = vpop.f32.mrf.mxu0
        %v3633 = vadd.f32 0.0, %v3632
        %3634 = vmatmul.f32.gmra.mxu0 %v3523
        %v3635 = vpop.f32.mrf.mxu0
        %v3636 = vadd.f32 0.0, %v3635
        %3637 = vmatmul.f32.gmra.mxu0 %v3526
        %v3638 = vpop.f32.mrf.mxu0
        %v3639 = vadd.f32 0.0, %v3638
        %3640 = vmatmul.f32.gmra.mxu0 %v3529
        %v3641 = vpop.f32.mrf.mxu0
        %v3642 = vadd.f32 0.0, %v3641
        %3643 = vmatmul.f32.gmra.mxu0 %v3532
        %v3644 = vpop.f32.mrf.mxu0
        %v3645 = vadd.f32 0.0, %v3644
        %3646 = vmatmul.f32.gmra.mxu0 %v3535
        %v3647 = vpop.f32.mrf.mxu0
        %v3648 = vadd.f32 0.0, %v3647
        %3649 = vmatmul.f32.gmra.mxu0 %v3538
        %v3650 = vpop.f32.mrf.mxu0
        %v3651 = vadd.f32 0.0, %v3650
        %3652 = vmatmul.f32.gmra.mxu0 %v3541
        %v3653 = vpop.f32.mrf.mxu0
        %v3654 = vadd.f32 0.0, %v3653
        %3655 = vmatmul.f32.gmra.mxu0 %v3544
        %v3656 = vpop.f32.mrf.mxu0
        %v3657 = vadd.f32 0.0, %v3656
        %3658 = vmatmul.f32.gmra.mxu0 %v3547
        %v3659 = vpop.f32.mrf.mxu0
        %v3660 = vadd.f32 0.0, %v3659
        %3661 = vmatmul.f32.gmra.mxu0 %v3550
        %v3662 = vpop.f32.mrf.mxu0
        %v3663 = vadd.f32 0.0, %v3662
        %3664 = vmatmul.f32.gmra.mxu0 %v3553
        %v3665 = vpop.f32.mrf.mxu0
        %v3666 = vadd.f32 0.0, %v3665
        %3667 = vmatmul.f32.gmra.mxu0 %v3556
        %v3668 = vpop.f32.mrf.mxu0
        %v3669 = vadd.f32 0.0, %v3668
        %3670 = vdwg.mxu0
        %v3671 = vadd.f32 %v2108, %v3576
        %v3672 = vadd.f32 %v2109, %v3579
        %v3673 = vadd.f32 %v2110, %v3582
        %v3674 = vadd.f32 %v2111, %v3585
        %v3675 = vadd.f32 %v2112, %v3588
        %v3676 = vadd.f32 %v2113, %v3591
        %v3677 = vadd.f32 %v2114, %v3594
        %v3678 = vadd.f32 %v2115, %v3597
        %v3679 = vadd.f32 %v2116, %v3600
        %v3680 = vadd.f32 %v2117, %v3603
        %v3681 = vadd.f32 %v2118, %v3606
        %v3682 = vadd.f32 %v2119, %v3609
        %v3683 = vadd.f32 %v2120, %v3612
        %v3684 = vadd.f32 %v2121, %v3615
        %v3685 = vadd.f32 %v2122, %v3618
        %v3686 = vadd.f32 %v2123, %v3621
        %v3687 = vadd.f32 %v2124, %v3624
        %v3688 = vadd.f32 %v2125, %v3627
        %v3689 = vadd.f32 %v2126, %v3630
        %v3690 = vadd.f32 %v2127, %v3633
        %v3691 = vadd.f32 %v2128, %v3636
        %v3692 = vadd.f32 %v2129, %v3639
        %v3693 = vadd.f32 %v2130, %v3642
        %v3694 = vadd.f32 %v2131, %v3645
        %v3695 = vadd.f32 %v2132, %v3648
        %v3696 = vadd.f32 %v2133, %v3651
        %v3697 = vadd.f32 %v2134, %v3654
        %v3698 = vadd.f32 %v2135, %v3657
        %v3699 = vadd.f32 %v2136, %v3660
        %v3700 = vadd.f32 %v2137, %v3663
        %v3701 = vadd.f32 %v2138, %v3666
        %v3702 = vadd.f32 %v2139, %v3669
        %s3703 = scalar_lea.vmem [#allocation2], 64
        %v3704 = vld [vmem:[%s3703] sm:$0xff]
        %v3705 = vld [vmem:[%s3703 + $0x8] sm:$0xff]
        %v3706 = vld [vmem:[%s3703 + $0x10] sm:$0xff]
        %v3707 = vld [vmem:[%s3703 + $0x18] sm:$0xff]
        %v3709 = vsel %vm534, %v3671, 0
        %v3712 = vsel %vm534, %v3672, 0
        %v3715 = vsel %vm534, %v3673, 0
        %v3718 = vsel %vm534, %v3674, 0
        %v3721 = vsel %vm534, %v3675, 0
        %v3724 = vsel %vm534, %v3676, 0
        %v3727 = vsel %vm534, %v3677, 0
        %v3730 = vsel %vm534, %v3678, 0
        %v3733 = vsel %vm534, %v3679, 0
        %v3736 = vsel %vm534, %v3680, 0
        %v3739 = vsel %vm534, %v3681, 0
        %v3742 = vsel %vm534, %v3682, 0
        %v3745 = vsel %vm534, %v3683, 0
        %v3748 = vsel %vm534, %v3684, 0
        %v3751 = vsel %vm534, %v3685, 0
        %v3754 = vsel %vm534, %v3686, 0
        %v3757 = vsel %vm534, %v3687, 0
        %v3760 = vsel %vm534, %v3688, 0
        %v3763 = vsel %vm534, %v3689, 0
        %v3766 = vsel %vm534, %v3690, 0
        %v3769 = vsel %vm534, %v3691, 0
        %v3772 = vsel %vm534, %v3692, 0
        %v3775 = vsel %vm534, %v3693, 0
        %v3778 = vsel %vm534, %v3694, 0
        %v3781 = vsel %vm534, %v3695, 0
        %v3784 = vsel %vm534, %v3696, 0
        %v3787 = vsel %vm534, %v3697, 0
        %v3790 = vsel %vm534, %v3698, 0
        %v3793 = vsel %vm534, %v3699, 0
        %v3796 = vsel %vm534, %v3700, 0
        %v3799 = vsel %vm534, %v3701, 0
        %v3802 = vsel %vm534, %v3702, 0
        %3804 = vmatpush.msra.mxu0 0.0
        %3805 = vmatpush.msra.mxu0 0.0
        %3806 = vmatpush.msra.mxu0 0.0
        %3807 = vmatpush.msra.mxu0 0.0
        %3808 = vmatpush.msra.mxu0 0.0
        %3809 = vmatpush.msra.mxu0 0.0
        %3810 = vmatpush.msra.mxu0 0.0
        %3811 = vmatpush.msra.mxu0 0.0
        %3812 = vmatpush.msra.mxu0 0.0
        %3813 = vmatpush.msra.mxu0 0.0
        %3814 = vmatpush.msra.mxu0 0.0
        %3815 = vmatpush.msra.mxu0 0.0
        %3816 = vmatpush.msra.mxu0 %v3707
        %3817 = vmatpush.msra.mxu0 %v3706
        %3818 = vmatpush.msra.mxu0 %v3705
        %3819 = vmatpush.msra.mxu0 %v3704
        %3820 = vmatmul.f32.gmra.mxu0 %v3709
        %v3821 = vpop.f32.mrf.mxu0
        %v3822 = vadd.f32 0.0, %v3821
        %3823 = vmatmul.f32.gmra.mxu0 %v3712
        %v3824 = vpop.f32.mrf.mxu0
        %v3825 = vadd.f32 0.0, %v3824
        %3826 = vmatmul.f32.gmra.mxu0 %v3715
        %v3827 = vpop.f32.mrf.mxu0
        %v3828 = vadd.f32 0.0, %v3827
        %3829 = vmatmul.f32.gmra.mxu0 %v3718
        %v3830 = vpop.f32.mrf.mxu0
        %v3831 = vadd.f32 0.0, %v3830
        %3832 = vmatmul.f32.gmra.mxu0 %v3721
        %v3833 = vpop.f32.mrf.mxu0
        %v3834 = vadd.f32 0.0, %v3833
        %3835 = vmatmul.f32.gmra.mxu0 %v3724
        %v3836 = vpop.f32.mrf.mxu0
        %v3837 = vadd.f32 0.0, %v3836
        %3838 = vmatmul.f32.gmra.mxu0 %v3727
        %v3839 = vpop.f32.mrf.mxu0
        %v3840 = vadd.f32 0.0, %v3839
        %3841 = vmatmul.f32.gmra.mxu0 %v3730
        %v3842 = vpop.f32.mrf.mxu0
        %v3843 = vadd.f32 0.0, %v3842
        %3844 = vmatmul.f32.gmra.mxu0 %v3733
        %v3845 = vpop.f32.mrf.mxu0
        %v3846 = vadd.f32 0.0, %v3845
        %3847 = vmatmul.f32.gmra.mxu0 %v3736
        %v3848 = vpop.f32.mrf.mxu0
        %v3849 = vadd.f32 0.0, %v3848
        %3850 = vmatmul.f32.gmra.mxu0 %v3739
        %v3851 = vpop.f32.mrf.mxu0
        %v3852 = vadd.f32 0.0, %v3851
        %3853 = vmatmul.f32.gmra.mxu0 %v3742
        %v3854 = vpop.f32.mrf.mxu0
        %v3855 = vadd.f32 0.0, %v3854
        %3856 = vmatmul.f32.gmra.mxu0 %v3745
        %v3857 = vpop.f32.mrf.mxu0
        %v3858 = vadd.f32 0.0, %v3857
        %3859 = vmatmul.f32.gmra.mxu0 %v3748
        %v3860 = vpop.f32.mrf.mxu0
        %v3861 = vadd.f32 0.0, %v3860
        %3862 = vmatmul.f32.gmra.mxu0 %v3751
        %v3863 = vpop.f32.mrf.mxu0
        %v3864 = vadd.f32 0.0, %v3863
        %3865 = vmatmul.f32.gmra.mxu0 %v3754
        %v3866 = vpop.f32.mrf.mxu0
        %v3867 = vadd.f32 0.0, %v3866
        %3868 = vmatmul.f32.gmra.mxu0 %v3757
        %v3869 = vpop.f32.mrf.mxu0
        %v3870 = vadd.f32 0.0, %v3869
        %3871 = vmatmul.f32.gmra.mxu0 %v3760
        %v3872 = vpop.f32.mrf.mxu0
        %v3873 = vadd.f32 0.0, %v3872
        %3874 = vmatmul.f32.gmra.mxu0 %v3763
        %v3875 = vpop.f32.mrf.mxu0
        %v3876 = vadd.f32 0.0, %v3875
        %3877 = vmatmul.f32.gmra.mxu0 %v3766
        %v3878 = vpop.f32.mrf.mxu0
        %v3879 = vadd.f32 0.0, %v3878
        %3880 = vmatmul.f32.gmra.mxu0 %v3769
        %v3881 = vpop.f32.mrf.mxu0
        %v3882 = vadd.f32 0.0, %v3881
        %3883 = vmatmul.f32.gmra.mxu0 %v3772
        %v3884 = vpop.f32.mrf.mxu0
        %v3885 = vadd.f32 0.0, %v3884
        %3886 = vmatmul.f32.gmra.mxu0 %v3775
        %v3887 = vpop.f32.mrf.mxu0
        %v3888 = vadd.f32 0.0, %v3887
        %3889 = vmatmul.f32.gmra.mxu0 %v3778
        %v3890 = vpop.f32.mrf.mxu0
        %v3891 = vadd.f32 0.0, %v3890
        %3892 = vmatmul.f32.gmra.mxu0 %v3781
        %v3893 = vpop.f32.mrf.mxu0
        %v3894 = vadd.f32 0.0, %v3893
        %3895 = vmatmul.f32.gmra.mxu0 %v3784
        %v3896 = vpop.f32.mrf.mxu0
        %v3897 = vadd.f32 0.0, %v3896
        %3898 = vmatmul.f32.gmra.mxu0 %v3787
        %v3899 = vpop.f32.mrf.mxu0
        %v3900 = vadd.f32 0.0, %v3899
        %3901 = vmatmul.f32.gmra.mxu0 %v3790
        %v3902 = vpop.f32.mrf.mxu0
        %v3903 = vadd.f32 0.0, %v3902
        %3904 = vmatmul.f32.gmra.mxu0 %v3793
        %v3905 = vpop.f32.mrf.mxu0
        %v3906 = vadd.f32 0.0, %v3905
        %3907 = vmatmul.f32.gmra.mxu0 %v3796
        %v3908 = vpop.f32.mrf.mxu0
        %v3909 = vadd.f32 0.0, %v3908
        %3910 = vmatmul.f32.gmra.mxu0 %v3799
        %v3911 = vpop.f32.mrf.mxu0
        %v3912 = vadd.f32 0.0, %v3911
        %3913 = vmatmul.f32.gmra.mxu0 %v3802
        %v3914 = vpop.f32.mrf.mxu0
        %v3915 = vadd.f32 0.0, %v3914
        %3916 = vdwg.mxu0
        %v3917 = vld [vmem:[#allocation9 + $0x2] sm:$0x1]
        %v3918 = vperm.slane %v3917, 0
        %v3919 = vmul.f32 %v3822, %v3918
        %v3920 = vmul.f32 %v3825, %v3918
        %v3921 = vmul.f32 %v3828, %v3918
        %v3922 = vmul.f32 %v3831, %v3918
        %v3923 = vmul.f32 %v3834, %v3918
        %v3924 = vmul.f32 %v3837, %v3918
        %v3925 = vmul.f32 %v3840, %v3918
        %v3926 = vmul.f32 %v3843, %v3918
        %v3927 = vmul.f32 %v3846, %v3918
        %v3928 = vmul.f32 %v3849, %v3918
        %v3929 = vmul.f32 %v3852, %v3918
        %v3930 = vmul.f32 %v3855, %v3918
        %v3931 = vmul.f32 %v3858, %v3918
        %v3932 = vmul.f32 %v3861, %v3918
        %v3933 = vmul.f32 %v3864, %v3918
        %v3934 = vmul.f32 %v3867, %v3918
        %v3935 = vmul.f32 %v3870, %v3918
        %v3936 = vmul.f32 %v3873, %v3918
        %v3937 = vmul.f32 %v3876, %v3918
        %v3938 = vmul.f32 %v3879, %v3918
        %v3939 = vmul.f32 %v3882, %v3918
        %v3940 = vmul.f32 %v3885, %v3918
        %v3941 = vmul.f32 %v3888, %v3918
        %v3942 = vmul.f32 %v3891, %v3918
        %v3943 = vmul.f32 %v3894, %v3918
        %v3944 = vmul.f32 %v3897, %v3918
        %v3945 = vmul.f32 %v3900, %v3918
        %v3946 = vmul.f32 %v3903, %v3918
        %v3947 = vmul.f32 %v3906, %v3918
        %v3948 = vmul.f32 %v3909, %v3918
        %v3949 = vmul.f32 %v3912, %v3918
        %v3950 = vmul.f32 %v3915, %v3918
        %v3951 = vld [vmem:[#allocation11 + $0x2] sm:$0x1]
        %v3952 = vperm.slane %v3951, 0
        %v3953 = vadd.f32 %v3919, %v3952
        %v3954 = vadd.f32 %v3920, %v3952
        %v3955 = vadd.f32 %v3921, %v3952
        %v3956 = vadd.f32 %v3922, %v3952
        %v3957 = vadd.f32 %v3923, %v3952
        %v3958 = vadd.f32 %v3924, %v3952
        %v3959 = vadd.f32 %v3925, %v3952
        %v3960 = vadd.f32 %v3926, %v3952
        %v3961 = vadd.f32 %v3927, %v3952
        %v3962 = vadd.f32 %v3928, %v3952
        %v3963 = vadd.f32 %v3929, %v3952
        %v3964 = vadd.f32 %v3930, %v3952
        %v3965 = vadd.f32 %v3931, %v3952
        %v3966 = vadd.f32 %v3932, %v3952
        %v3967 = vadd.f32 %v3933, %v3952
        %v3968 = vadd.f32 %v3934, %v3952
        %v3969 = vadd.f32 %v3935, %v3952
        %v3970 = vadd.f32 %v3936, %v3952
        %v3971 = vadd.f32 %v3937, %v3952
        %v3972 = vadd.f32 %v3938, %v3952
        %v3973 = vadd.f32 %v3939, %v3952
        %v3974 = vadd.f32 %v3940, %v3952
        %v3975 = vadd.f32 %v3941, %v3952
        %v3976 = vadd.f32 %v3942, %v3952
        %v3977 = vadd.f32 %v3943, %v3952
        %v3978 = vadd.f32 %v3944, %v3952
        %v3979 = vadd.f32 %v3945, %v3952
        %v3980 = vadd.f32 %v3946, %v3952
        %v3981 = vadd.f32 %v3947, %v3952
        %v3982 = vadd.f32 %v3948, %v3952
        %v3983 = vadd.f32 %v3949, %v3952
        %v3984 = vadd.f32 %v3950, %v3952
        %s3985 = sld [smem:[#allocation14 + $0x2]]
        %vm3986 = vcmp.ge.f32.partialorder %v3953, 0.0
        %vm3987 = vcmp.ge.f32.partialorder %v3954, 0.0
        %vm3988 = vcmp.ge.f32.partialorder %v3955, 0.0
        %vm3989 = vcmp.ge.f32.partialorder %v3956, 0.0
        %vm3990 = vcmp.ge.f32.partialorder %v3957, 0.0
        %vm3991 = vcmp.ge.f32.partialorder %v3958, 0.0
        %vm3992 = vcmp.ge.f32.partialorder %v3959, 0.0
        %vm3993 = vcmp.ge.f32.partialorder %v3960, 0.0
        %vm3994 = vcmp.ge.f32.partialorder %v3961, 0.0
        %vm3995 = vcmp.ge.f32.partialorder %v3962, 0.0
        %vm3996 = vcmp.ge.f32.partialorder %v3963, 0.0
        %vm3997 = vcmp.ge.f32.partialorder %v3964, 0.0
        %vm3998 = vcmp.ge.f32.partialorder %v3965, 0.0
        %vm3999 = vcmp.ge.f32.partialorder %v3966, 0.0
        %vm4000 = vcmp.ge.f32.partialorder %v3967, 0.0
        %vm4001 = vcmp.ge.f32.partialorder %v3968, 0.0
        %vm4002 = vcmp.ge.f32.partialorder %v3969, 0.0
        %vm4003 = vcmp.ge.f32.partialorder %v3970, 0.0
        %vm4004 = vcmp.ge.f32.partialorder %v3971, 0.0
        %vm4005 = vcmp.ge.f32.partialorder %v3972, 0.0
        %vm4006 = vcmp.ge.f32.partialorder %v3973, 0.0
        %vm4007 = vcmp.ge.f32.partialorder %v3974, 0.0
        %vm4008 = vcmp.ge.f32.partialorder %v3975, 0.0
        %vm4009 = vcmp.ge.f32.partialorder %v3976, 0.0
        %vm4010 = vcmp.ge.f32.partialorder %v3977, 0.0
        %vm4011 = vcmp.ge.f32.partialorder %v3978, 0.0
        %vm4012 = vcmp.ge.f32.partialorder %v3979, 0.0
        %vm4013 = vcmp.ge.f32.partialorder %v3980, 0.0
        %vm4014 = vcmp.ge.f32.partialorder %v3981, 0.0
        %vm4015 = vcmp.ge.f32.partialorder %v3982, 0.0
        %vm4016 = vcmp.ge.f32.partialorder %v3983, 0.0
        %vm4017 = vcmp.ge.f32.partialorder %v3984, 0.0
        %v4018 = vstv %s3985
        %v4019 = vmul.f32 %v4018, %v3953
        %v4020 = vmul.f32 %v4018, %v3954
        %v4021 = vmul.f32 %v4018, %v3955
        %v4022 = vmul.f32 %v4018, %v3956
        %v4023 = vmul.f32 %v4018, %v3957
        %v4024 = vmul.f32 %v4018, %v3958
        %v4025 = vmul.f32 %v4018, %v3959
        %v4026 = vmul.f32 %v4018, %v3960
        %v4027 = vmul.f32 %v4018, %v3961
        %v4028 = vmul.f32 %v4018, %v3962
        %v4029 = vmul.f32 %v4018, %v3963
        %v4030 = vmul.f32 %v4018, %v3964
        %v4031 = vmul.f32 %v4018, %v3965
        %v4032 = vmul.f32 %v4018, %v3966
        %v4033 = vmul.f32 %v4018, %v3967
        %v4034 = vmul.f32 %v4018, %v3968
        %v4035 = vmul.f32 %v4018, %v3969
        %v4036 = vmul.f32 %v4018, %v3970
        %v4037 = vmul.f32 %v4018, %v3971
        %v4038 = vmul.f32 %v4018, %v3972
        %v4039 = vmul.f32 %v4018, %v3973
        %v4040 = vmul.f32 %v4018, %v3974
        %v4041 = vmul.f32 %v4018, %v3975
        %v4042 = vmul.f32 %v4018, %v3976
        %v4043 = vmul.f32 %v4018, %v3977
        %v4044 = vmul.f32 %v4018, %v3978
        %v4045 = vmul.f32 %v4018, %v3979
        %v4046 = vmul.f32 %v4018, %v3980
        %v4047 = vmul.f32 %v4018, %v3981
        %v4048 = vmul.f32 %v4018, %v3982
        %v4049 = vmul.f32 %v4018, %v3983
        %v4050 = vmul.f32 %v4018, %v3984
        %v4051 = vsel %vm3986, %v3953, %v4019
        %v4052 = vsel %vm3987, %v3954, %v4020
        %v4053 = vsel %vm3988, %v3955, %v4021
        %v4054 = vsel %vm3989, %v3956, %v4022
        %v4055 = vsel %vm3990, %v3957, %v4023
        %v4056 = vsel %vm3991, %v3958, %v4024
        %v4057 = vsel %vm3992, %v3959, %v4025
        %v4058 = vsel %vm3993, %v3960, %v4026
        %v4059 = vsel %vm3994, %v3961, %v4027
        %v4060 = vsel %vm3995, %v3962, %v4028
        %v4061 = vsel %vm3996, %v3963, %v4029
        %v4062 = vsel %vm3997, %v3964, %v4030
        %v4063 = vsel %vm3998, %v3965, %v4031
        %v4064 = vsel %vm3999, %v3966, %v4032
        %v4065 = vsel %vm4000, %v3967, %v4033
        %v4066 = vsel %vm4001, %v3968, %v4034
        %v4067 = vsel %vm4002, %v3969, %v4035
        %v4068 = vsel %vm4003, %v3970, %v4036
        %v4069 = vsel %vm4004, %v3971, %v4037
        %v4070 = vsel %vm4005, %v3972, %v4038
        %v4071 = vsel %vm4006, %v3973, %v4039
        %v4072 = vsel %vm4007, %v3974, %v4040
        %v4073 = vsel %vm4008, %v3975, %v4041
        %v4074 = vsel %vm4009, %v3976, %v4042
        %v4075 = vsel %vm4010, %v3977, %v4043
        %v4076 = vsel %vm4011, %v3978, %v4044
        %v4077 = vsel %vm4012, %v3979, %v4045
        %v4078 = vsel %vm4013, %v3980, %v4046
        %v4079 = vsel %vm4014, %v3981, %v4047
        %v4080 = vsel %vm4015, %v3982, %v4048
        %v4081 = vsel %vm4016, %v3983, %v4049
        %v4082 = vsel %vm4017, %v3984, %v4050
        %s4083 = scalar_lea.vmem [#allocation8], 24
        %v4084 = vld [vmem:[%s4083] sm:$0x1]
        %v4101 = vrot.slane %v4051, 7
        %v4102 = vrot.slane %v4052, 7
        %v4103 = vsel %vm940, %v4101, %v4102
        %v4104 = vrot.slane %v4053, 7
        %v4105 = vrot.slane %v4054, 7
        %v4106 = vsel %vm940, %v4104, %v4105
        %v4107 = vrot.slane %v4055, 7
        %v4108 = vrot.slane %v4056, 7
        %v4109 = vsel %vm940, %v4107, %v4108
        %v4110 = vrot.slane %v4057, 7
        %v4111 = vrot.slane %v4058, 7
        %v4112 = vsel %vm940, %v4110, %v4111
        %v4113 = vrot.slane %v4059, 7
        %v4114 = vrot.slane %v4060, 7
        %v4115 = vsel %vm940, %v4113, %v4114
        %v4116 = vrot.slane %v4061, 7
        %v4117 = vrot.slane %v4062, 7
        %v4118 = vsel %vm940, %v4116, %v4117
        %v4119 = vrot.slane %v4063, 7
        %v4120 = vrot.slane %v4064, 7
        %v4121 = vsel %vm940, %v4119, %v4120
        %v4122 = vrot.slane %v4065, 7
        %v4123 = vrot.slane %v4066, 7
        %v4124 = vsel %vm940, %v4122, %v4123
        %v4141 = vsel %vm940, 0.0, %v4101
        %v4142 = vsel %vm940, 0.0, %v4104
        %v4143 = vsel %vm940, 0.0, %v4107
        %v4144 = vsel %vm940, 0.0, %v4110
        %v4145 = vsel %vm940, 0.0, %v4113
        %v4146 = vsel %vm940, 0.0, %v4116
        %v4147 = vsel %vm940, 0.0, %v4119
        %v4148 = vsel %vm940, 0.0, %v4122
        %v4149 = vperm.slane %v4084, 0
        %v4150 = vmul.f32 %v4149, %v1015
        %v4151 = vmul.f32 %v4149, %v942
        %v4152 = vmul.f32 %v4149, %v4141
        %v4153 = vmul.f32 %v4149, %v4103
        %v4154 = vmul.f32 %v4149, %v4142
        %v4155 = vmul.f32 %v4149, %v4106
        %v4156 = vmul.f32 %v4149, %v4143
        %v4157 = vmul.f32 %v4149, %v4109
        %v4158 = vmul.f32 %v4149, %v4144
        %v4159 = vmul.f32 %v4149, %v4112
        %v4160 = vmul.f32 %v4149, %v4145
        %v4161 = vmul.f32 %v4149, %v4115
        %v4162 = vmul.f32 %v4149, %v4146
        %v4163 = vmul.f32 %v4149, %v4118
        %v4164 = vmul.f32 %v4149, %v4147
        %v4165 = vmul.f32 %v4149, %v4121
        %v4166 = vmul.f32 %v4149, %v4148
        %v4167 = vmul.f32 %v4149, %v4124
        %v4168 = vadd.f32 %v4150, 0.0
        %v4169 = vadd.f32 %v4151, 0.0
        %v4170 = vadd.f32 %v4152, 0.0
        %v4171 = vadd.f32 %v4153, 0.0
        %v4172 = vadd.f32 %v4154, 0.0
        %v4173 = vadd.f32 %v4155, 0.0
        %v4174 = vadd.f32 %v4156, 0.0
        %v4175 = vadd.f32 %v4157, 0.0
        %v4176 = vadd.f32 %v4158, 0.0
        %v4177 = vadd.f32 %v4159, 0.0
        %v4178 = vadd.f32 %v4160, 0.0
        %v4179 = vadd.f32 %v4161, 0.0
        %v4180 = vadd.f32 %v4162, 0.0
        %v4181 = vadd.f32 %v4163, 0.0
        %v4182 = vadd.f32 %v4164, 0.0
        %v4183 = vadd.f32 %v4165, 0.0
        %v4184 = vadd.f32 %v4166, 0.0
        %v4185 = vadd.f32 %v4167, 0.0
        %v4186 = vld [vmem:[%s4083 + $0x1] sm:$0x1]
        %v4187 = vperm.slane %v4186, 0
        %v4188 = vmul.f32 %v4187, 0.0
        %v4189 = vmul.f32 %v4187, %v4051
        %v4190 = vmul.f32 %v4187, %v4052
        %v4191 = vmul.f32 %v4187, %v4053
        %v4192 = vmul.f32 %v4187, %v4054
        %v4193 = vmul.f32 %v4187, %v4055
        %v4194 = vmul.f32 %v4187, %v4056
        %v4195 = vmul.f32 %v4187, %v4057
        %v4196 = vmul.f32 %v4187, %v4058
        %v4197 = vmul.f32 %v4187, %v4059
        %v4198 = vmul.f32 %v4187, %v4060
        %v4199 = vmul.f32 %v4187, %v4061
        %v4200 = vmul.f32 %v4187, %v4062
        %v4201 = vmul.f32 %v4187, %v4063
        %v4202 = vmul.f32 %v4187, %v4064
        %v4203 = vmul.f32 %v4187, %v4065
        %v4204 = vmul.f32 %v4187, %v4066
        %v4205 = vadd.f32 %v4168, %v4188
        %v4206 = vadd.f32 %v4169, %v4188
        %v4207 = vadd.f32 %v4170, %v4189
        %v4208 = vadd.f32 %v4171, %v4190
        %v4209 = vadd.f32 %v4172, %v4191
        %v4210 = vadd.f32 %v4173, %v4192
        %v4211 = vadd.f32 %v4174, %v4193
        %v4212 = vadd.f32 %v4175, %v4194
        %v4213 = vadd.f32 %v4176, %v4195
        %v4214 = vadd.f32 %v4177, %v4196
        %v4215 = vadd.f32 %v4178, %v4197
        %v4216 = vadd.f32 %v4179, %v4198
        %v4217 = vadd.f32 %v4180, %v4199
        %v4218 = vadd.f32 %v4181, %v4200
        %v4219 = vadd.f32 %v4182, %v4201
        %v4220 = vadd.f32 %v4183, %v4202
        %v4221 = vadd.f32 %v4184, %v4203
        %v4222 = vadd.f32 %v4185, %v4204
        %v4223 = vld [vmem:[%s4083 + $0x2] sm:$0x1]
        %v4224 = vrot.slane %v4051, 1
        %v4225 = vrot.slane %v4052, 1
        %v4226 = vsel %vm1153, %v4224, %v4225
        %v4227 = vrot.slane %v4053, 1
        %v4228 = vrot.slane %v4054, 1
        %v4229 = vsel %vm1153, %v4227, %v4228
        %v4230 = vrot.slane %v4055, 1
        %v4231 = vrot.slane %v4056, 1
        %v4232 = vsel %vm1153, %v4230, %v4231
        %v4233 = vrot.slane %v4057, 1
        %v4234 = vrot.slane %v4058, 1
        %v4235 = vsel %vm1153, %v4233, %v4234
        %v4236 = vrot.slane %v4059, 1
        %v4237 = vrot.slane %v4060, 1
        %v4238 = vsel %vm1153, %v4236, %v4237
        %v4239 = vrot.slane %v4061, 1
        %v4240 = vrot.slane %v4062, 1
        %v4241 = vsel %vm1153, %v4239, %v4240
        %v4242 = vrot.slane %v4063, 1
        %v4243 = vrot.slane %v4064, 1
        %v4244 = vsel %vm1153, %v4242, %v4243
        %v4245 = vrot.slane %v4065, 1
        %v4246 = vrot.slane %v4066, 1
        %v4247 = vsel %vm1153, %v4245, %v4246
        %v4264 = vsel %vm1153, %v4225, 0.0
        %v4265 = vsel %vm1153, %v4228, 0.0
        %v4266 = vsel %vm1153, %v4231, 0.0
        %v4267 = vsel %vm1153, %v4234, 0.0
        %v4268 = vsel %vm1153, %v4237, 0.0
        %v4269 = vsel %vm1153, %v4240, 0.0
        %v4270 = vsel %vm1153, %v4243, 0.0
        %v4271 = vsel %vm1153, %v4246, 0.0
        %v4272 = vperm.slane %v4223, 0
        %v4273 = vmul.f32 %v4272, %v1155
        %v4274 = vmul.f32 %v4272, %v1228
        %v4275 = vmul.f32 %v4272, %v4226
        %v4276 = vmul.f32 %v4272, %v4264
        %v4277 = vmul.f32 %v4272, %v4229
        %v4278 = vmul.f32 %v4272, %v4265
        %v4279 = vmul.f32 %v4272, %v4232
        %v4280 = vmul.f32 %v4272, %v4266
        %v4281 = vmul.f32 %v4272, %v4235
        %v4282 = vmul.f32 %v4272, %v4267
        %v4283 = vmul.f32 %v4272, %v4238
        %v4284 = vmul.f32 %v4272, %v4268
        %v4285 = vmul.f32 %v4272, %v4241
        %v4286 = vmul.f32 %v4272, %v4269
        %v4287 = vmul.f32 %v4272, %v4244
        %v4288 = vmul.f32 %v4272, %v4270
        %v4289 = vmul.f32 %v4272, %v4247
        %v4290 = vmul.f32 %v4272, %v4271
        %v4291 = vadd.f32 %v4205, %v4273
        %v4292 = vadd.f32 %v4206, %v4274
        %v4293 = vadd.f32 %v4207, %v4275
        %v4294 = vadd.f32 %v4208, %v4276
        %v4295 = vadd.f32 %v4209, %v4277
        %v4296 = vadd.f32 %v4210, %v4278
        %v4297 = vadd.f32 %v4211, %v4279
        %v4298 = vadd.f32 %v4212, %v4280
        %v4299 = vadd.f32 %v4213, %v4281
        %v4300 = vadd.f32 %v4214, %v4282
        %v4301 = vadd.f32 %v4215, %v4283
        %v4302 = vadd.f32 %v4216, %v4284
        %v4303 = vadd.f32 %v4217, %v4285
        %v4304 = vadd.f32 %v4218, %v4286
        %v4305 = vadd.f32 %v4219, %v4287
        %v4306 = vadd.f32 %v4220, %v4288
        %v4307 = vadd.f32 %v4221, %v4289
        %v4308 = vadd.f32 %v4222, %v4290
        %s4309 = scalar_lea.vmem [#allocation8], 28
        %v4310 = vld [vmem:[%s4309] sm:$0x1]
        %v4319 = vrot.slane %v4067, 7
        %v4320 = vrot.slane %v4068, 7
        %v4321 = vsel %vm940, %v4319, %v4320
        %v4322 = vrot.slane %v4069, 7
        %v4323 = vrot.slane %v4070, 7
        %v4324 = vsel %vm940, %v4322, %v4323
        %v4325 = vrot.slane %v4071, 7
        %v4326 = vrot.slane %v4072, 7
        %v4327 = vsel %vm940, %v4325, %v4326
        %v4328 = vrot.slane %v4073, 7
        %v4329 = vrot.slane %v4074, 7
        %v4330 = vsel %vm940, %v4328, %v4329
        %v4339 = vsel %vm940, 0.0, %v4319
        %v4340 = vsel %vm940, 0.0, %v4322
        %v4341 = vsel %vm940, 0.0, %v4325
        %v4342 = vsel %vm940, 0.0, %v4328
        %v4343 = vperm.slane %v4310, 0
        %v4344 = vmul.f32 %v4343, %v1015
        %v4345 = vmul.f32 %v4343, %v942
        %v4346 = vmul.f32 %v4343, %v4141
        %v4347 = vmul.f32 %v4343, %v4103
        %v4348 = vmul.f32 %v4343, %v4142
        %v4349 = vmul.f32 %v4343, %v4106
        %v4350 = vmul.f32 %v4343, %v4143
        %v4351 = vmul.f32 %v4343, %v4109
        %v4352 = vmul.f32 %v4343, %v4144
        %v4353 = vmul.f32 %v4343, %v4112
        %v4354 = vmul.f32 %v4343, %v4145
        %v4355 = vmul.f32 %v4343, %v4115
        %v4356 = vmul.f32 %v4343, %v4146
        %v4357 = vmul.f32 %v4343, %v4118
        %v4358 = vmul.f32 %v4343, %v4147
        %v4359 = vmul.f32 %v4343, %v4121
        %v4360 = vmul.f32 %v4343, %v4148
        %v4361 = vmul.f32 %v4343, %v4124
        %v4362 = vmul.f32 %v4343, %v4339
        %v4363 = vmul.f32 %v4343, %v4321
        %v4364 = vmul.f32 %v4343, %v4340
        %v4365 = vmul.f32 %v4343, %v4324
        %v4366 = vmul.f32 %v4343, %v4341
        %v4367 = vmul.f32 %v4343, %v4327
        %v4368 = vmul.f32 %v4343, %v4342
        %v4369 = vmul.f32 %v4343, %v4330
        %v4370 = vadd.f32 %v4291, %v4344
        %v4371 = vadd.f32 %v4292, %v4345
        %v4372 = vadd.f32 %v4291, %v4346
        %v4373 = vadd.f32 %v4292, %v4347
        %v4374 = vadd.f32 %v4291, %v4348
        %v4375 = vadd.f32 %v4292, %v4349
        %v4376 = vadd.f32 %v4291, %v4350
        %v4377 = vadd.f32 %v4292, %v4351
        %v4378 = vadd.f32 %v4291, %v4352
        %v4379 = vadd.f32 %v4292, %v4353
        %v4380 = vadd.f32 %v4293, %v4354
        %v4381 = vadd.f32 %v4294, %v4355
        %v4382 = vadd.f32 %v4295, %v4356
        %v4383 = vadd.f32 %v4296, %v4357
        %v4384 = vadd.f32 %v4297, %v4358
        %v4385 = vadd.f32 %v4298, %v4359
        %v4386 = vadd.f32 %v4299, %v4360
        %v4387 = vadd.f32 %v4300, %v4361
        %v4388 = vadd.f32 %v4301, %v4362
        %v4389 = vadd.f32 %v4302, %v4363
        %v4390 = vadd.f32 %v4303, %v4364
        %v4391 = vadd.f32 %v4304, %v4365
        %v4392 = vadd.f32 %v4305, %v4366
        %v4393 = vadd.f32 %v4306, %v4367
        %v4394 = vadd.f32 %v4307, %v4368
        %v4395 = vadd.f32 %v4308, %v4369
        %v4396 = vld [vmem:[%s4309 + $0x1] sm:$0x1]
        %v4397 = vperm.slane %v4396, 0
        %v4398 = vmul.f32 %v4397, 0.0
        %v4399 = vmul.f32 %v4397, %v4051
        %v4400 = vmul.f32 %v4397, %v4052
        %v4401 = vmul.f32 %v4397, %v4053
        %v4402 = vmul.f32 %v4397, %v4054
        %v4403 = vmul.f32 %v4397, %v4055
        %v4404 = vmul.f32 %v4397, %v4056
        %v4405 = vmul.f32 %v4397, %v4057
        %v4406 = vmul.f32 %v4397, %v4058
        %v4407 = vmul.f32 %v4397, %v4059
        %v4408 = vmul.f32 %v4397, %v4060
        %v4409 = vmul.f32 %v4397, %v4061
        %v4410 = vmul.f32 %v4397, %v4062
        %v4411 = vmul.f32 %v4397, %v4063
        %v4412 = vmul.f32 %v4397, %v4064
        %v4413 = vmul.f32 %v4397, %v4065
        %v4414 = vmul.f32 %v4397, %v4066
        %v4415 = vmul.f32 %v4397, %v4067
        %v4416 = vmul.f32 %v4397, %v4068
        %v4417 = vmul.f32 %v4397, %v4069
        %v4418 = vmul.f32 %v4397, %v4070
        %v4419 = vmul.f32 %v4397, %v4071
        %v4420 = vmul.f32 %v4397, %v4072
        %v4421 = vmul.f32 %v4397, %v4073
        %v4422 = vmul.f32 %v4397, %v4074
        %v4423 = vadd.f32 %v4370, %v4398
        %v4424 = vadd.f32 %v4371, %v4398
        %v4425 = vadd.f32 %v4372, %v4399
        %v4426 = vadd.f32 %v4373, %v4400
        %v4427 = vadd.f32 %v4374, %v4401
        %v4428 = vadd.f32 %v4375, %v4402
        %v4429 = vadd.f32 %v4376, %v4403
        %v4430 = vadd.f32 %v4377, %v4404
        %v4431 = vadd.f32 %v4378, %v4405
        %v4432 = vadd.f32 %v4379, %v4406
        %v4433 = vadd.f32 %v4380, %v4407
        %v4434 = vadd.f32 %v4381, %v4408
        %v4435 = vadd.f32 %v4382, %v4409
        %v4436 = vadd.f32 %v4383, %v4410
        %v4437 = vadd.f32 %v4384, %v4411
        %v4438 = vadd.f32 %v4385, %v4412
        %v4439 = vadd.f32 %v4386, %v4413
        %v4440 = vadd.f32 %v4387, %v4414
        %v4441 = vadd.f32 %v4388, %v4415
        %v4442 = vadd.f32 %v4389, %v4416
        %v4443 = vadd.f32 %v4390, %v4417
        %v4444 = vadd.f32 %v4391, %v4418
        %v4445 = vadd.f32 %v4392, %v4419
        %v4446 = vadd.f32 %v4393, %v4420
        %v4447 = vadd.f32 %v4394, %v4421
        %v4448 = vadd.f32 %v4395, %v4422
        %v4449 = vld [vmem:[%s4309 + $0x2] sm:$0x1]
        %v4450 = vrot.slane %v4067, 1
        %v4451 = vrot.slane %v4068, 1
        %v4452 = vsel %vm1153, %v4450, %v4451
        %v4453 = vrot.slane %v4069, 1
        %v4454 = vrot.slane %v4070, 1
        %v4455 = vsel %vm1153, %v4453, %v4454
        %v4456 = vrot.slane %v4071, 1
        %v4457 = vrot.slane %v4072, 1
        %v4458 = vsel %vm1153, %v4456, %v4457
        %v4459 = vrot.slane %v4073, 1
        %v4460 = vrot.slane %v4074, 1
        %v4461 = vsel %vm1153, %v4459, %v4460
        %v4470 = vsel %vm1153, %v4451, 0.0
        %v4471 = vsel %vm1153, %v4454, 0.0
        %v4472 = vsel %vm1153, %v4457, 0.0
        %v4473 = vsel %vm1153, %v4460, 0.0
        %v4474 = vperm.slane %v4449, 0
        %v4475 = vmul.f32 %v4474, %v1155
        %v4476 = vmul.f32 %v4474, %v1228
        %v4477 = vmul.f32 %v4474, %v4226
        %v4478 = vmul.f32 %v4474, %v4264
        %v4479 = vmul.f32 %v4474, %v4229
        %v4480 = vmul.f32 %v4474, %v4265
        %v4481 = vmul.f32 %v4474, %v4232
        %v4482 = vmul.f32 %v4474, %v4266
        %v4483 = vmul.f32 %v4474, %v4235
        %v4484 = vmul.f32 %v4474, %v4267
        %v4485 = vmul.f32 %v4474, %v4238
        %v4486 = vmul.f32 %v4474, %v4268
        %v4487 = vmul.f32 %v4474, %v4241
        %v4488 = vmul.f32 %v4474, %v4269
        %v4489 = vmul.f32 %v4474, %v4244
        %v4490 = vmul.f32 %v4474, %v4270
        %v4491 = vmul.f32 %v4474, %v4247
        %v4492 = vmul.f32 %v4474, %v4271
        %v4493 = vmul.f32 %v4474, %v4452
        %v4494 = vmul.f32 %v4474, %v4470
        %v4495 = vmul.f32 %v4474, %v4455
        %v4496 = vmul.f32 %v4474, %v4471
        %v4497 = vmul.f32 %v4474, %v4458
        %v4498 = vmul.f32 %v4474, %v4472
        %v4499 = vmul.f32 %v4474, %v4461
        %v4500 = vmul.f32 %v4474, %v4473
        %v4501 = vadd.f32 %v4423, %v4475
        %v4502 = vadd.f32 %v4424, %v4476
        %v4503 = vadd.f32 %v4425, %v4477
        %v4504 = vadd.f32 %v4426, %v4478
        %v4505 = vadd.f32 %v4427, %v4479
        %v4506 = vadd.f32 %v4428, %v4480
        %v4507 = vadd.f32 %v4429, %v4481
        %v4508 = vadd.f32 %v4430, %v4482
        %v4509 = vadd.f32 %v4431, %v4483
        %v4510 = vadd.f32 %v4432, %v4484
        %v4511 = vadd.f32 %v4433, %v4485
        %v4512 = vadd.f32 %v4434, %v4486
        %v4513 = vadd.f32 %v4435, %v4487
        %v4514 = vadd.f32 %v4436, %v4488
        %v4515 = vadd.f32 %v4437, %v4489
        %v4516 = vadd.f32 %v4438, %v4490
        %v4517 = vadd.f32 %v4439, %v4491
        %v4518 = vadd.f32 %v4440, %v4492
        %v4519 = vadd.f32 %v4441, %v4493
        %v4520 = vadd.f32 %v4442, %v4494
        %v4521 = vadd.f32 %v4443, %v4495
        %v4522 = vadd.f32 %v4444, %v4496
        %v4523 = vadd.f32 %v4445, %v4497
        %v4524 = vadd.f32 %v4446, %v4498
        %v4525 = vadd.f32 %v4447, %v4499
        %v4526 = vadd.f32 %v4448, %v4500
        %s4527 = scalar_lea.vmem [#allocation8], 32
        %v4528 = vld [vmem:[%s4527] sm:$0x1]
        %v4537 = vrot.slane %v4075, 7
        %v4538 = vrot.slane %v4076, 7
        %v4539 = vsel %vm940, %v4537, %v4538
        %v4540 = vrot.slane %v4077, 7
        %v4541 = vrot.slane %v4078, 7
        %v4542 = vsel %vm940, %v4540, %v4541
        %v4543 = vrot.slane %v4079, 7
        %v4544 = vrot.slane %v4080, 7
        %v4545 = vsel %vm940, %v4543, %v4544
        %v4546 = vrot.slane %v4081, 7
        %v4547 = vrot.slane %v4082, 7
        %v4548 = vsel %vm940, %v4546, %v4547
        %v4557 = vsel %vm940, 0.0, %v4537
        %v4558 = vsel %vm940, 0.0, %v4540
        %v4559 = vsel %vm940, 0.0, %v4543
        %v4560 = vsel %vm940, 0.0, %v4546
        %v4561 = vperm.slane %v4528, 0
        %v4562 = vmul.f32 %v4561, %v4141
        %v4563 = vmul.f32 %v4561, %v4103
        %v4564 = vmul.f32 %v4561, %v4142
        %v4565 = vmul.f32 %v4561, %v4106
        %v4566 = vmul.f32 %v4561, %v4143
        %v4567 = vmul.f32 %v4561, %v4109
        %v4568 = vmul.f32 %v4561, %v4144
        %v4569 = vmul.f32 %v4561, %v4112
        %v4570 = vmul.f32 %v4561, %v4145
        %v4571 = vmul.f32 %v4561, %v4115
        %v4572 = vmul.f32 %v4561, %v4146
        %v4573 = vmul.f32 %v4561, %v4118
        %v4574 = vmul.f32 %v4561, %v4147
        %v4575 = vmul.f32 %v4561, %v4121
        %v4576 = vmul.f32 %v4561, %v4148
        %v4577 = vmul.f32 %v4561, %v4124
        %v4578 = vmul.f32 %v4561, %v4339
        %v4579 = vmul.f32 %v4561, %v4321
        %v4580 = vmul.f32 %v4561, %v4340
        %v4581 = vmul.f32 %v4561, %v4324
        %v4582 = vmul.f32 %v4561, %v4341
        %v4583 = vmul.f32 %v4561, %v4327
        %v4584 = vmul.f32 %v4561, %v4342
        %v4585 = vmul.f32 %v4561, %v4330
        %v4586 = vmul.f32 %v4561, %v4557
        %v4587 = vmul.f32 %v4561, %v4539
        %v4588 = vmul.f32 %v4561, %v4558
        %v4589 = vmul.f32 %v4561, %v4542
        %v4590 = vmul.f32 %v4561, %v4559
        %v4591 = vmul.f32 %v4561, %v4545
        %v4592 = vmul.f32 %v4561, %v4560
        %v4593 = vmul.f32 %v4561, %v4548
        %v4594 = vadd.f32 %v4501, %v4562
        %v4595 = vadd.f32 %v4502, %v4563
        %v4596 = vadd.f32 %v4501, %v4564
        %v4597 = vadd.f32 %v4502, %v4565
        %v4598 = vadd.f32 %v4501, %v4566
        %v4599 = vadd.f32 %v4502, %v4567
        %v4600 = vadd.f32 %v4501, %v4568
        %v4601 = vadd.f32 %v4502, %v4569
        %v4602 = vadd.f32 %v4503, %v4570
        %v4603 = vadd.f32 %v4504, %v4571
        %v4604 = vadd.f32 %v4505, %v4572
        %v4605 = vadd.f32 %v4506, %v4573
        %v4606 = vadd.f32 %v4507, %v4574
        %v4607 = vadd.f32 %v4508, %v4575
        %v4608 = vadd.f32 %v4509, %v4576
        %v4609 = vadd.f32 %v4510, %v4577
        %v4610 = vadd.f32 %v4511, %v4578
        %v4611 = vadd.f32 %v4512, %v4579
        %v4612 = vadd.f32 %v4513, %v4580
        %v4613 = vadd.f32 %v4514, %v4581
        %v4614 = vadd.f32 %v4515, %v4582
        %v4615 = vadd.f32 %v4516, %v4583
        %v4616 = vadd.f32 %v4517, %v4584
        %v4617 = vadd.f32 %v4518, %v4585
        %v4618 = vadd.f32 %v4519, %v4586
        %v4619 = vadd.f32 %v4520, %v4587
        %v4620 = vadd.f32 %v4521, %v4588
        %v4621 = vadd.f32 %v4522, %v4589
        %v4622 = vadd.f32 %v4523, %v4590
        %v4623 = vadd.f32 %v4524, %v4591
        %v4624 = vadd.f32 %v4525, %v4592
        %v4625 = vadd.f32 %v4526, %v4593
        %v4626 = vld [vmem:[%s4527 + $0x1] sm:$0x1]
        %v4627 = vperm.slane %v4626, 0
        %v4628 = vmul.f32 %v4627, %v4051
        %v4629 = vmul.f32 %v4627, %v4052
        %v4630 = vmul.f32 %v4627, %v4053
        %v4631 = vmul.f32 %v4627, %v4054
        %v4632 = vmul.f32 %v4627, %v4055
        %v4633 = vmul.f32 %v4627, %v4056
        %v4634 = vmul.f32 %v4627, %v4057
        %v4635 = vmul.f32 %v4627, %v4058
        %v4636 = vmul.f32 %v4627, %v4059
        %v4637 = vmul.f32 %v4627, %v4060
        %v4638 = vmul.f32 %v4627, %v4061
        %v4639 = vmul.f32 %v4627, %v4062
        %v4640 = vmul.f32 %v4627, %v4063
        %v4641 = vmul.f32 %v4627, %v4064
        %v4642 = vmul.f32 %v4627, %v4065
        %v4643 = vmul.f32 %v4627, %v4066
        %v4644 = vmul.f32 %v4627, %v4067
        %v4645 = vmul.f32 %v4627, %v4068
        %v4646 = vmul.f32 %v4627, %v4069
        %v4647 = vmul.f32 %v4627, %v4070
        %v4648 = vmul.f32 %v4627, %v4071
        %v4649 = vmul.f32 %v4627, %v4072
        %v4650 = vmul.f32 %v4627, %v4073
        %v4651 = vmul.f32 %v4627, %v4074
        %v4652 = vmul.f32 %v4627, %v4075
        %v4653 = vmul.f32 %v4627, %v4076
        %v4654 = vmul.f32 %v4627, %v4077
        %v4655 = vmul.f32 %v4627, %v4078
        %v4656 = vmul.f32 %v4627, %v4079
        %v4657 = vmul.f32 %v4627, %v4080
        %v4658 = vmul.f32 %v4627, %v4081
        %v4659 = vmul.f32 %v4627, %v4082
        %v4660 = vadd.f32 %v4594, %v4628
        %v4661 = vadd.f32 %v4595, %v4629
        %v4662 = vadd.f32 %v4596, %v4630
        %v4663 = vadd.f32 %v4597, %v4631
        %v4664 = vadd.f32 %v4598, %v4632
        %v4665 = vadd.f32 %v4599, %v4633
        %v4666 = vadd.f32 %v4600, %v4634
        %v4667 = vadd.f32 %v4601, %v4635
        %v4668 = vadd.f32 %v4602, %v4636
        %v4669 = vadd.f32 %v4603, %v4637
        %v4670 = vadd.f32 %v4604, %v4638
        %v4671 = vadd.f32 %v4605, %v4639
        %v4672 = vadd.f32 %v4606, %v4640
        %v4673 = vadd.f32 %v4607, %v4641
        %v4674 = vadd.f32 %v4608, %v4642
        %v4675 = vadd.f32 %v4609, %v4643
        %v4676 = vadd.f32 %v4610, %v4644
        %v4677 = vadd.f32 %v4611, %v4645
        %v4678 = vadd.f32 %v4612, %v4646
        %v4679 = vadd.f32 %v4613, %v4647
        %v4680 = vadd.f32 %v4614, %v4648
        %v4681 = vadd.f32 %v4615, %v4649
        %v4682 = vadd.f32 %v4616, %v4650
        %v4683 = vadd.f32 %v4617, %v4651
        %v4684 = vadd.f32 %v4618, %v4652
        %v4685 = vadd.f32 %v4619, %v4653
        %v4686 = vadd.f32 %v4620, %v4654
        %v4687 = vadd.f32 %v4621, %v4655
        %v4688 = vadd.f32 %v4622, %v4656
        %v4689 = vadd.f32 %v4623, %v4657
        %v4690 = vadd.f32 %v4624, %v4658
        %v4691 = vadd.f32 %v4625, %v4659
        %v4692 = vld [vmem:[%s4527 + $0x2] sm:$0x1]
        %v4693 = vrot.slane %v4075, 1
        %v4694 = vrot.slane %v4076, 1
        %v4695 = vsel %vm1153, %v4693, %v4694
        %v4696 = vrot.slane %v4077, 1
        %v4697 = vrot.slane %v4078, 1
        %v4698 = vsel %vm1153, %v4696, %v4697
        %v4699 = vrot.slane %v4079, 1
        %v4700 = vrot.slane %v4080, 1
        %v4701 = vsel %vm1153, %v4699, %v4700
        %v4702 = vrot.slane %v4081, 1
        %v4703 = vrot.slane %v4082, 1
        %v4704 = vsel %vm1153, %v4702, %v4703
        %v4713 = vsel %vm1153, %v4694, 0.0
        %v4714 = vsel %vm1153, %v4697, 0.0
        %v4715 = vsel %vm1153, %v4700, 0.0
        %v4716 = vsel %vm1153, %v4703, 0.0
        %v4717 = vperm.slane %v4692, 0
        %v4718 = vmul.f32 %v4717, %v4226
        %v4719 = vmul.f32 %v4717, %v4264
        %v4720 = vmul.f32 %v4717, %v4229
        %v4721 = vmul.f32 %v4717, %v4265
        %v4722 = vmul.f32 %v4717, %v4232
        %v4723 = vmul.f32 %v4717, %v4266
        %v4724 = vmul.f32 %v4717, %v4235
        %v4725 = vmul.f32 %v4717, %v4267
        %v4726 = vmul.f32 %v4717, %v4238
        %v4727 = vmul.f32 %v4717, %v4268
        %v4728 = vmul.f32 %v4717, %v4241
        %v4729 = vmul.f32 %v4717, %v4269
        %v4730 = vmul.f32 %v4717, %v4244
        %v4731 = vmul.f32 %v4717, %v4270
        %v4732 = vmul.f32 %v4717, %v4247
        %v4733 = vmul.f32 %v4717, %v4271
        %v4734 = vmul.f32 %v4717, %v4452
        %v4735 = vmul.f32 %v4717, %v4470
        %v4736 = vmul.f32 %v4717, %v4455
        %v4737 = vmul.f32 %v4717, %v4471
        %v4738 = vmul.f32 %v4717, %v4458
        %v4739 = vmul.f32 %v4717, %v4472
        %v4740 = vmul.f32 %v4717, %v4461
        %v4741 = vmul.f32 %v4717, %v4473
        %v4742 = vmul.f32 %v4717, %v4695
        %v4743 = vmul.f32 %v4717, %v4713
        %v4744 = vmul.f32 %v4717, %v4698
        %v4745 = vmul.f32 %v4717, %v4714
        %v4746 = vmul.f32 %v4717, %v4701
        %v4747 = vmul.f32 %v4717, %v4715
        %v4748 = vmul.f32 %v4717, %v4704
        %v4749 = vmul.f32 %v4717, %v4716
        %v4750 = vadd.f32 %v4660, %v4718
        %v4751 = vadd.f32 %v4661, %v4719
        %v4752 = vadd.f32 %v4662, %v4720
        %v4753 = vadd.f32 %v4663, %v4721
        %v4754 = vadd.f32 %v4664, %v4722
        %v4755 = vadd.f32 %v4665, %v4723
        %v4756 = vadd.f32 %v4666, %v4724
        %v4757 = vadd.f32 %v4667, %v4725
        %v4758 = vadd.f32 %v4668, %v4726
        %v4759 = vadd.f32 %v4669, %v4727
        %v4760 = vadd.f32 %v4670, %v4728
        %v4761 = vadd.f32 %v4671, %v4729
        %v4762 = vadd.f32 %v4672, %v4730
        %v4763 = vadd.f32 %v4673, %v4731
        %v4764 = vadd.f32 %v4674, %v4732
        %v4765 = vadd.f32 %v4675, %v4733
        %v4766 = vadd.f32 %v4676, %v4734
        %v4767 = vadd.f32 %v4677, %v4735
        %v4768 = vadd.f32 %v4678, %v4736
        %v4769 = vadd.f32 %v4679, %v4737
        %v4770 = vadd.f32 %v4680, %v4738
        %v4771 = vadd.f32 %v4681, %v4739
        %v4772 = vadd.f32 %v4682, %v4740
        %v4773 = vadd.f32 %v4683, %v4741
        %v4774 = vadd.f32 %v4684, %v4742
        %v4775 = vadd.f32 %v4685, %v4743
        %v4776 = vadd.f32 %v4686, %v4744
        %v4777 = vadd.f32 %v4687, %v4745
        %v4778 = vadd.f32 %v4688, %v4746
        %v4779 = vadd.f32 %v4689, %v4747
        %v4780 = vadd.f32 %v4690, %v4748
        %v4781 = vadd.f32 %v4691, %v4749
        %v4782 = vld [vmem:[%s5 + $0x2] sm:$0x1]
        %v4783 = vperm.slane %v4782, 0
        %v4784 = vmul.f32 %v4750, %v4783
        %v4785 = vmul.f32 %v4751, %v4783
        %v4786 = vmul.f32 %v4752, %v4783
        %v4787 = vmul.f32 %v4753, %v4783
        %v4788 = vmul.f32 %v4754, %v4783
        %v4789 = vmul.f32 %v4755, %v4783
        %v4790 = vmul.f32 %v4756, %v4783
        %v4791 = vmul.f32 %v4757, %v4783
        %v4792 = vmul.f32 %v4758, %v4783
        %v4793 = vmul.f32 %v4759, %v4783
        %v4794 = vmul.f32 %v4760, %v4783
        %v4795 = vmul.f32 %v4761, %v4783
        %v4796 = vmul.f32 %v4762, %v4783
        %v4797 = vmul.f32 %v4763, %v4783
        %v4798 = vmul.f32 %v4764, %v4783
        %v4799 = vmul.f32 %v4765, %v4783
        %v4800 = vmul.f32 %v4766, %v4783
        %v4801 = vmul.f32 %v4767, %v4783
        %v4802 = vmul.f32 %v4768, %v4783
        %v4803 = vmul.f32 %v4769, %v4783
        %v4804 = vmul.f32 %v4770, %v4783
        %v4805 = vmul.f32 %v4771, %v4783
        %v4806 = vmul.f32 %v4772, %v4783
        %v4807 = vmul.f32 %v4773, %v4783
        %v4808 = vmul.f32 %v4774, %v4783
        %v4809 = vmul.f32 %v4775, %v4783
        %v4810 = vmul.f32 %v4776, %v4783
        %v4811 = vmul.f32 %v4777, %v4783
        %v4812 = vmul.f32 %v4778, %v4783
        %v4813 = vmul.f32 %v4779, %v4783
        %v4814 = vmul.f32 %v4780, %v4783
        %v4815 = vmul.f32 %v4781, %v4783
        %v4816 = vld [vmem:[#allocation12 + $0x2] sm:$0x1]
        %v4817 = vperm.slane %v4816, 0
        %v4818 = vadd.f32 %v4784, %v4817
        %v4819 = vadd.f32 %v4785, %v4817
        %v4820 = vadd.f32 %v4786, %v4817
        %v4821 = vadd.f32 %v4787, %v4817
        %v4822 = vadd.f32 %v4788, %v4817
        %v4823 = vadd.f32 %v4789, %v4817
        %v4824 = vadd.f32 %v4790, %v4817
        %v4825 = vadd.f32 %v4791, %v4817
        %v4826 = vadd.f32 %v4792, %v4817
        %v4827 = vadd.f32 %v4793, %v4817
        %v4828 = vadd.f32 %v4794, %v4817
        %v4829 = vadd.f32 %v4795, %v4817
        %v4830 = vadd.f32 %v4796, %v4817
        %v4831 = vadd.f32 %v4797, %v4817
        %v4832 = vadd.f32 %v4798, %v4817
        %v4833 = vadd.f32 %v4799, %v4817
        %v4834 = vadd.f32 %v4800, %v4817
        %v4835 = vadd.f32 %v4801, %v4817
        %v4836 = vadd.f32 %v4802, %v4817
        %v4837 = vadd.f32 %v4803, %v4817
        %v4838 = vadd.f32 %v4804, %v4817
        %v4839 = vadd.f32 %v4805, %v4817
        %v4840 = vadd.f32 %v4806, %v4817
        %v4841 = vadd.f32 %v4807, %v4817
        %v4842 = vadd.f32 %v4808, %v4817
        %v4843 = vadd.f32 %v4809, %v4817
        %v4844 = vadd.f32 %v4810, %v4817
        %v4845 = vadd.f32 %v4811, %v4817
        %v4846 = vadd.f32 %v4812, %v4817
        %v4847 = vadd.f32 %v4813, %v4817
        %v4848 = vadd.f32 %v4814, %v4817
        %v4849 = vadd.f32 %v4815, %v4817
        %s4850 = sld [smem:[#allocation15 + $0x2]]
        %vm4851 = vcmp.ge.f32.partialorder %v4818, 0.0
        %vm4852 = vcmp.ge.f32.partialorder %v4819, 0.0
        %vm4853 = vcmp.ge.f32.partialorder %v4820, 0.0
        %vm4854 = vcmp.ge.f32.partialorder %v4821, 0.0
        %vm4855 = vcmp.ge.f32.partialorder %v4822, 0.0
        %vm4856 = vcmp.ge.f32.partialorder %v4823, 0.0
        %vm4857 = vcmp.ge.f32.partialorder %v4824, 0.0
        %vm4858 = vcmp.ge.f32.partialorder %v4825, 0.0
        %vm4859 = vcmp.ge.f32.partialorder %v4826, 0.0
        %vm4860 = vcmp.ge.f32.partialorder %v4827, 0.0
        %vm4861 = vcmp.ge.f32.partialorder %v4828, 0.0
        %vm4862 = vcmp.ge.f32.partialorder %v4829, 0.0
        %vm4863 = vcmp.ge.f32.partialorder %v4830, 0.0
        %vm4864 = vcmp.ge.f32.partialorder %v4831, 0.0
        %vm4865 = vcmp.ge.f32.partialorder %v4832, 0.0
        %vm4866 = vcmp.ge.f32.partialorder %v4833, 0.0
        %vm4867 = vcmp.ge.f32.partialorder %v4834, 0.0
        %vm4868 = vcmp.ge.f32.partialorder %v4835, 0.0
        %vm4869 = vcmp.ge.f32.partialorder %v4836, 0.0
        %vm4870 = vcmp.ge.f32.partialorder %v4837, 0.0
        %vm4871 = vcmp.ge.f32.partialorder %v4838, 0.0
        %vm4872 = vcmp.ge.f32.partialorder %v4839, 0.0
        %vm4873 = vcmp.ge.f32.partialorder %v4840, 0.0
        %vm4874 = vcmp.ge.f32.partialorder %v4841, 0.0
        %vm4875 = vcmp.ge.f32.partialorder %v4842, 0.0
        %vm4876 = vcmp.ge.f32.partialorder %v4843, 0.0
        %vm4877 = vcmp.ge.f32.partialorder %v4844, 0.0
        %vm4878 = vcmp.ge.f32.partialorder %v4845, 0.0
        %vm4879 = vcmp.ge.f32.partialorder %v4846, 0.0
        %vm4880 = vcmp.ge.f32.partialorder %v4847, 0.0
        %vm4881 = vcmp.ge.f32.partialorder %v4848, 0.0
        %vm4882 = vcmp.ge.f32.partialorder %v4849, 0.0
        %v4883 = vstv %s4850
        %v4884 = vmul.f32 %v4883, %v4818
        %v4885 = vmul.f32 %v4883, %v4819
        %v4886 = vmul.f32 %v4883, %v4820
        %v4887 = vmul.f32 %v4883, %v4821
        %v4888 = vmul.f32 %v4883, %v4822
        %v4889 = vmul.f32 %v4883, %v4823
        %v4890 = vmul.f32 %v4883, %v4824
        %v4891 = vmul.f32 %v4883, %v4825
        %v4892 = vmul.f32 %v4883, %v4826
        %v4893 = vmul.f32 %v4883, %v4827
        %v4894 = vmul.f32 %v4883, %v4828
        %v4895 = vmul.f32 %v4883, %v4829
        %v4896 = vmul.f32 %v4883, %v4830
        %v4897 = vmul.f32 %v4883, %v4831
        %v4898 = vmul.f32 %v4883, %v4832
        %v4899 = vmul.f32 %v4883, %v4833
        %v4900 = vmul.f32 %v4883, %v4834
        %v4901 = vmul.f32 %v4883, %v4835
        %v4902 = vmul.f32 %v4883, %v4836
        %v4903 = vmul.f32 %v4883, %v4837
        %v4904 = vmul.f32 %v4883, %v4838
        %v4905 = vmul.f32 %v4883, %v4839
        %v4906 = vmul.f32 %v4883, %v4840
        %v4907 = vmul.f32 %v4883, %v4841
        %v4908 = vmul.f32 %v4883, %v4842
        %v4909 = vmul.f32 %v4883, %v4843
        %v4910 = vmul.f32 %v4883, %v4844
        %v4911 = vmul.f32 %v4883, %v4845
        %v4912 = vmul.f32 %v4883, %v4846
        %v4913 = vmul.f32 %v4883, %v4847
        %v4914 = vmul.f32 %v4883, %v4848
        %v4915 = vmul.f32 %v4883, %v4849
        %v4916 = vsel %vm4851, %v4818, %v4884
        %v4917 = vsel %vm4852, %v4819, %v4885
        %v4918 = vsel %vm4853, %v4820, %v4886
        %v4919 = vsel %vm4854, %v4821, %v4887
        %v4920 = vsel %vm4855, %v4822, %v4888
        %v4921 = vsel %vm4856, %v4823, %v4889
        %v4922 = vsel %vm4857, %v4824, %v4890
        %v4923 = vsel %vm4858, %v4825, %v4891
        %v4924 = vsel %vm4859, %v4826, %v4892
        %v4925 = vsel %vm4860, %v4827, %v4893
        %v4926 = vsel %vm4861, %v4828, %v4894
        %v4927 = vsel %vm4862, %v4829, %v4895
        %v4928 = vsel %vm4863, %v4830, %v4896
        %v4929 = vsel %vm4864, %v4831, %v4897
        %v4930 = vsel %vm4865, %v4832, %v4898
        %v4931 = vsel %vm4866, %v4833, %v4899
        %v4932 = vsel %vm4867, %v4834, %v4900
        %v4933 = vsel %vm4868, %v4835, %v4901
        %v4934 = vsel %vm4869, %v4836, %v4902
        %v4935 = vsel %vm4870, %v4837, %v4903
        %v4936 = vsel %vm4871, %v4838, %v4904
        %v4937 = vsel %vm4872, %v4839, %v4905
        %v4938 = vsel %vm4873, %v4840, %v4906
        %v4939 = vsel %vm4874, %v4841, %v4907
        %v4940 = vsel %vm4875, %v4842, %v4908
        %v4941 = vsel %vm4876, %v4843, %v4909
        %v4942 = vsel %vm4877, %v4844, %v4910
        %v4943 = vsel %vm4878, %v4845, %v4911
        %v4944 = vsel %vm4879, %v4846, %v4912
        %v4945 = vsel %vm4880, %v4847, %v4913
        %v4946 = vsel %vm4881, %v4848, %v4914
        %v4947 = vsel %vm4882, %v4849, %v4915
        %s4948 = scalar_lea.vmem [#allocation6], 64
        %v4949 = vld [vmem:[%s4948] sm:$0xff]
        %v4950 = vld [vmem:[%s4948 + $0x8] sm:$0xff]
        %v4951 = vld [vmem:[%s4948 + $0x10] sm:$0xff]
        %v4952 = vld [vmem:[%s4948 + $0x18] sm:$0xff]
        %v4954 = vsel %vm534, %v4916, 0
        %v4957 = vsel %vm534, %v4917, 0
        %v4960 = vsel %vm534, %v4918, 0
        %v4963 = vsel %vm534, %v4919, 0
        %v4966 = vsel %vm534, %v4920, 0
        %v4969 = vsel %vm534, %v4921, 0
        %v4972 = vsel %vm534, %v4922, 0
        %v4975 = vsel %vm534, %v4923, 0
        %v4978 = vsel %vm534, %v4924, 0
        %v4981 = vsel %vm534, %v4925, 0
        %v4984 = vsel %vm534, %v4926, 0
        %v4987 = vsel %vm534, %v4927, 0
        %v4990 = vsel %vm534, %v4928, 0
        %v4993 = vsel %vm534, %v4929, 0
        %v4996 = vsel %vm534, %v4930, 0
        %v4999 = vsel %vm534, %v4931, 0
        %v5002 = vsel %vm534, %v4932, 0
        %v5005 = vsel %vm534, %v4933, 0
        %v5008 = vsel %vm534, %v4934, 0
        %v5011 = vsel %vm534, %v4935, 0
        %v5014 = vsel %vm534, %v4936, 0
        %v5017 = vsel %vm534, %v4937, 0
        %v5020 = vsel %vm534, %v4938, 0
        %v5023 = vsel %vm534, %v4939, 0
        %v5026 = vsel %vm534, %v4940, 0
        %v5029 = vsel %vm534, %v4941, 0
        %v5032 = vsel %vm534, %v4942, 0
        %v5035 = vsel %vm534, %v4943, 0
        %v5038 = vsel %vm534, %v4944, 0
        %v5041 = vsel %vm534, %v4945, 0
        %v5044 = vsel %vm534, %v4946, 0
        %v5047 = vsel %vm534, %v4947, 0
        %5049 = vmatpush.msra.mxu0 0.0
        %5050 = vmatpush.msra.mxu0 0.0
        %5051 = vmatpush.msra.mxu0 0.0
        %5052 = vmatpush.msra.mxu0 0.0
        %5053 = vmatpush.msra.mxu0 0.0
        %5054 = vmatpush.msra.mxu0 0.0
        %5055 = vmatpush.msra.mxu0 0.0
        %5056 = vmatpush.msra.mxu0 0.0
        %5057 = vmatpush.msra.mxu0 0.0
        %5058 = vmatpush.msra.mxu0 0.0
        %5059 = vmatpush.msra.mxu0 0.0
        %5060 = vmatpush.msra.mxu0 0.0
        %5061 = vmatpush.msra.mxu0 %v4952
        %5062 = vmatpush.msra.mxu0 %v4951
        %5063 = vmatpush.msra.mxu0 %v4950
        %5064 = vmatpush.msra.mxu0 %v4949
        %5065 = vmatmul.f32.gmra.mxu0 %v4954
        %v5066 = vpop.f32.mrf.mxu0
        %v5067 = vadd.f32 0.0, %v5066
        %5068 = vmatmul.f32.gmra.mxu0 %v4957
        %v5069 = vpop.f32.mrf.mxu0
        %v5070 = vadd.f32 0.0, %v5069
        %5071 = vmatmul.f32.gmra.mxu0 %v4960
        %v5072 = vpop.f32.mrf.mxu0
        %v5073 = vadd.f32 0.0, %v5072
        %5074 = vmatmul.f32.gmra.mxu0 %v4963
        %v5075 = vpop.f32.mrf.mxu0
        %v5076 = vadd.f32 0.0, %v5075
        %5077 = vmatmul.f32.gmra.mxu0 %v4966
        %v5078 = vpop.f32.mrf.mxu0
        %v5079 = vadd.f32 0.0, %v5078
        %5080 = vmatmul.f32.gmra.mxu0 %v4969
        %v5081 = vpop.f32.mrf.mxu0
        %v5082 = vadd.f32 0.0, %v5081
        %5083 = vmatmul.f32.gmra.mxu0 %v4972
        %v5084 = vpop.f32.mrf.mxu0
        %v5085 = vadd.f32 0.0, %v5084
        %5086 = vmatmul.f32.gmra.mxu0 %v4975
        %v5087 = vpop.f32.mrf.mxu0
        %v5088 = vadd.f32 0.0, %v5087
        %5089 = vmatmul.f32.gmra.mxu0 %v4978
        %v5090 = vpop.f32.mrf.mxu0
        %v5091 = vadd.f32 0.0, %v5090
        %5092 = vmatmul.f32.gmra.mxu0 %v4981
        %v5093 = vpop.f32.mrf.mxu0
        %v5094 = vadd.f32 0.0, %v5093
        %5095 = vmatmul.f32.gmra.mxu0 %v4984
        %v5096 = vpop.f32.mrf.mxu0
        %v5097 = vadd.f32 0.0, %v5096
        %5098 = vmatmul.f32.gmra.mxu0 %v4987
        %v5099 = vpop.f32.mrf.mxu0
        %v5100 = vadd.f32 0.0, %v5099
        %5101 = vmatmul.f32.gmra.mxu0 %v4990
        %v5102 = vpop.f32.mrf.mxu0
        %v5103 = vadd.f32 0.0, %v5102
        %5104 = vmatmul.f32.gmra.mxu0 %v4993
        %v5105 = vpop.f32.mrf.mxu0
        %v5106 = vadd.f32 0.0, %v5105
        %5107 = vmatmul.f32.gmra.mxu0 %v4996
        %v5108 = vpop.f32.mrf.mxu0
        %v5109 = vadd.f32 0.0, %v5108
        %5110 = vmatmul.f32.gmra.mxu0 %v4999
        %v5111 = vpop.f32.mrf.mxu0
        %v5112 = vadd.f32 0.0, %v5111
        %5113 = vmatmul.f32.gmra.mxu0 %v5002
        %v5114 = vpop.f32.mrf.mxu0
        %v5115 = vadd.f32 0.0, %v5114
        %5116 = vmatmul.f32.gmra.mxu0 %v5005
        %v5117 = vpop.f32.mrf.mxu0
        %v5118 = vadd.f32 0.0, %v5117
        %5119 = vmatmul.f32.gmra.mxu0 %v5008
        %v5120 = vpop.f32.mrf.mxu0
        %v5121 = vadd.f32 0.0, %v5120
        %5122 = vmatmul.f32.gmra.mxu0 %v5011
        %v5123 = vpop.f32.mrf.mxu0
        %v5124 = vadd.f32 0.0, %v5123
        %5125 = vmatmul.f32.gmra.mxu0 %v5014
        %v5126 = vpop.f32.mrf.mxu0
        %v5127 = vadd.f32 0.0, %v5126
        %5128 = vmatmul.f32.gmra.mxu0 %v5017
        %v5129 = vpop.f32.mrf.mxu0
        %v5130 = vadd.f32 0.0, %v5129
        %5131 = vmatmul.f32.gmra.mxu0 %v5020
        %v5132 = vpop.f32.mrf.mxu0
        %v5133 = vadd.f32 0.0, %v5132
        %5134 = vmatmul.f32.gmra.mxu0 %v5023
        %v5135 = vpop.f32.mrf.mxu0
        %v5136 = vadd.f32 0.0, %v5135
        %5137 = vmatmul.f32.gmra.mxu0 %v5026
        %v5138 = vpop.f32.mrf.mxu0
        %v5139 = vadd.f32 0.0, %v5138
        %5140 = vmatmul.f32.gmra.mxu0 %v5029
        %v5141 = vpop.f32.mrf.mxu0
        %v5142 = vadd.f32 0.0, %v5141
        %5143 = vmatmul.f32.gmra.mxu0 %v5032
        %v5144 = vpop.f32.mrf.mxu0
        %v5145 = vadd.f32 0.0, %v5144
        %5146 = vmatmul.f32.gmra.mxu0 %v5035
        %v5147 = vpop.f32.mrf.mxu0
        %v5148 = vadd.f32 0.0, %v5147
        %5149 = vmatmul.f32.gmra.mxu0 %v5038
        %v5150 = vpop.f32.mrf.mxu0
        %v5151 = vadd.f32 0.0, %v5150
        %5152 = vmatmul.f32.gmra.mxu0 %v5041
        %v5153 = vpop.f32.mrf.mxu0
        %v5154 = vadd.f32 0.0, %v5153
        %5155 = vmatmul.f32.gmra.mxu0 %v5044
        %v5156 = vpop.f32.mrf.mxu0
        %v5157 = vadd.f32 0.0, %v5156
        %5158 = vmatmul.f32.gmra.mxu0 %v5047
        %v5159 = vpop.f32.mrf.mxu0
        %v5160 = vadd.f32 0.0, %v5159
        %5161 = vdwg.mxu0
        %v5162 = vadd.f32 %v3671, %v5067
        %v5163 = vadd.f32 %v3672, %v5070
        %v5164 = vadd.f32 %v3673, %v5073
        %v5165 = vadd.f32 %v3674, %v5076
        %v5166 = vadd.f32 %v3675, %v5079
        %v5167 = vadd.f32 %v3676, %v5082
        %v5168 = vadd.f32 %v3677, %v5085
        %v5169 = vadd.f32 %v3678, %v5088
        %v5170 = vadd.f32 %v3679, %v5091
        %v5171 = vadd.f32 %v3680, %v5094
        %v5172 = vadd.f32 %v3681, %v5097
        %v5173 = vadd.f32 %v3682, %v5100
        %v5174 = vadd.f32 %v3683, %v5103
        %v5175 = vadd.f32 %v3684, %v5106
        %v5176 = vadd.f32 %v3685, %v5109
        %v5177 = vadd.f32 %v3686, %v5112
        %v5178 = vadd.f32 %v3687, %v5115
        %v5179 = vadd.f32 %v3688, %v5118
        %v5180 = vadd.f32 %v3689, %v5121
        %v5181 = vadd.f32 %v3690, %v5124
        %v5182 = vadd.f32 %v3691, %v5127
        %v5183 = vadd.f32 %v3692, %v5130
        %v5184 = vadd.f32 %v3693, %v5133
        %v5185 = vadd.f32 %v3694, %v5136
        %v5186 = vadd.f32 %v3695, %v5139
        %v5187 = vadd.f32 %v3696, %v5142
        %v5188 = vadd.f32 %v3697, %v5145
        %v5189 = vadd.f32 %v3698, %v5148
        %v5190 = vadd.f32 %v3699, %v5151
        %v5191 = vadd.f32 %v3700, %v5154
        %v5192 = vadd.f32 %v3701, %v5157
        %v5193 = vadd.f32 %v3702, %v5160
        %5194 = vst.msk [vmem:[%s497] sm:$0xff] %vm534, %v5162
        %5195 = vst.msk [vmem:[%s497 + $0x8] sm:$0xff] %vm534, %v5163
        %5196 = vst.msk [vmem:[%s497 + $0x10] sm:$0xff] %vm534, %v5164
        %5197 = vst.msk [vmem:[%s497 + $0x18] sm:$0xff] %vm534, %v5165
        %5198 = vst.msk [vmem:[%s497 + $0x20] sm:$0xff] %vm534, %v5166
        %5199 = vst.msk [vmem:[%s497 + $0x28] sm:$0xff] %vm534, %v5167
        %5200 = vst.msk [vmem:[%s497 + $0x30] sm:$0xff] %vm534, %v5168
        %5201 = vst.msk [vmem:[%s497 + $0x38] sm:$0xff] %vm534, %v5169
        %5202 = vst.msk [vmem:[%s497 + $0x40] sm:$0xff] %vm534, %v5170
        %5203 = vst.msk [vmem:[%s497 + $0x48] sm:$0xff] %vm534, %v5171
        %5204 = vst.msk [vmem:[%s497 + $0x50] sm:$0xff] %vm534, %v5172
        %5205 = vst.msk [vmem:[%s497 + $0x58] sm:$0xff] %vm534, %v5173
        %5206 = vst.msk [vmem:[%s497 + $0x60] sm:$0xff] %vm534, %v5174
        %5207 = vst.msk [vmem:[%s497 + $0x68] sm:$0xff] %vm534, %v5175
        %5208 = vst.msk [vmem:[%s497 + $0x70] sm:$0xff] %vm534, %v5176
        %5209 = vst.msk [vmem:[%s497 + $0x78] sm:$0xff] %vm534, %v5177
        %5210 = vst.msk [vmem:[%s497 + $0x80] sm:$0xff] %vm534, %v5178
        %5211 = vst.msk [vmem:[%s497 + $0x88] sm:$0xff] %vm534, %v5179
        %5212 = vst.msk [vmem:[%s497 + $0x90] sm:$0xff] %vm534, %v5180
        %5213 = vst.msk [vmem:[%s497 + $0x98] sm:$0xff] %vm534, %v5181
        %5214 = vst.msk [vmem:[%s497 + $0xa0] sm:$0xff] %vm534, %v5182
        %5215 = vst.msk [vmem:[%s497 + $0xa8] sm:$0xff] %vm534, %v5183
        %5216 = vst.msk [vmem:[%s497 + $0xb0] sm:$0xff] %vm534, %v5184
        %5217 = vst.msk [vmem:[%s497 + $0xb8] sm:$0xff] %vm534, %v5185
        %5218 = vst.msk [vmem:[%s497 + $0xc0] sm:$0xff] %vm534, %v5186
        %5219 = vst.msk [vmem:[%s497 + $0xc8] sm:$0xff] %vm534, %v5187
        %5220 = vst.msk [vmem:[%s497 + $0xd0] sm:$0xff] %vm534, %v5188
        %5221 = vst.msk [vmem:[%s497 + $0xd8] sm:$0xff] %vm534, %v5189
        %5222 = vst.msk [vmem:[%s497 + $0xe0] sm:$0xff] %vm534, %v5190
        %5223 = vst.msk [vmem:[%s497 + $0xe8] sm:$0xff] %vm534, %v5191
        %5224 = vst.msk [vmem:[%s497 + $0xf0] sm:$0xff] %vm534, %v5192
        %5225 = vst.msk [vmem:[%s497 + $0xf8] sm:$0xff] %vm534, %v5193
        %s5226 = sand.u32 %s253, 1
        %s5227 = scalar_lea.sflag [#allocation4], %s5226
        %s5228 = sand.u32 %s253, 1
        %s5229 = smul.addr %s5228, 256
        %s5230 = scalar_lea.vmem [#allocation18], %s5229
        // Predicated region
        $region97: #{tpu_custom_call.1} parent=59 // pred_check
          %p5231 = pneg %p263
        $region98: #{tpu_custom_call.1} parent=59 // pred_check_branch
          %5233 = sbr.rel (%p5231) target = $region100
        $region99: #{tpu_custom_call.1} parent=59 // pred_region
          %5235 = vsyncadd %s5227, 0
          %s5236 = smul.addr %s30, 32
          %s5237 = smul.addr %s5236, 8
          %s5238 = scalar_lea.hbm %s10, %s5237
          %s5239 = sshll.u32 %s5230, 4
          %s5240 = int_to_ptr.vmem [resolvable:$true] %s5239
          %s5241 = sshll.u32 %s5238, 4
          %s5242 = int_to_ptr.hbm [resolvable:$true] %s5241
          %5247 = dma.vmem_to_hbm [thread:$0]  %s5240, 4096, %s5242, %s5227, 128, 128, 8
        $region100: #{tpu_custom_call.1} parent=59 // pred_fallthru
          _
      $region60: #{tpu_custom_call.1} parent=5 // pred_fallthru
        _
      %p5248 = scmp.le.s32.totalorder 2, %s25
      // Predicated region
      $region101: #{tpu_custom_call.1} parent=5 // pred_check
        %p5249 = pneg %p5248
      $region102: #{tpu_custom_call.1} parent=5 // pred_check_branch
        %5251 = sbr.rel (%p5249) target = $region104
      $region103: #{tpu_custom_call.1} parent=5 // pred_region
        %s5252 = ssub.s32 %s25, 2
        // Predicated region
        $region105: #{tpu_custom_call.1} parent=103 // pred_check
          %p5253 = pneg %p269
        $region106: #{tpu_custom_call.1} parent=103 // pred_check_branch
          %5255 = sbr.rel (%p5253) target = $region108
        $region107: #{tpu_custom_call.1} parent=103 // pred_region
          %s5256 = sand.u32 %s254, 1
          %s5257 = scalar_lea.sflag [#allocation4], %s5256
          %s5258 = sand.u32 %s254, 1
          %s5259 = smul.addr %s5258, 256
          %s5260 = scalar_lea.vmem [#allocation18], %s5259
          %5262 = dma.done %s5257, 4096
        $region108: #{tpu_custom_call.1} parent=103 // pred_fallthru
          _
      $region104: #{tpu_custom_call.1} parent=5 // pred_fallthru
        _
    $region6: #{tpu_custom_call.1} parent=1 // loop_footer
      %s29 = sadd.s32 1, %s25
    $region7: #{tpu_custom_call.1} parent=1 // loop_footer_branch
      %24 = sbr.rel target = $region3
    $region8: #{tpu_custom_call.1} parent=1 // loop_exit
      _
    %5263 = vsyncpa [#allocation3], 1
    %s5264 = scalar_lea.sflag [#allocation3], 1
    %5265 = vsyncpa %s5264, 1
    %5266 = vsyncpa [#allocation7], 1
    %5267 = vsyncpa [#allocation10], 1
    %5268 = vsyncpa [#allocation13], 1
    %5269 = vsyncpa [#allocation4], 1
    %s5270 = scalar_lea.sflag [#allocation4], 1
    %5271 = vsyncpa %s5270, 1
    %5272 = vsyncpa [#allocation5], 1
    %s5273 = scalar_lea.sflag [#allocation5], 1
    %5274 = vsyncpa %s5273, 1
    %5275 = vsyncpa [#allocation16], 1

</llo_original>
